<compile_context>
chip_gen: v7x
topology: tpu7x:2x2x1
jax: 0.10.0
libtpu: 0.0.40
codegen_flags: <defaults>
</compile_context>

<pallas_src>
import math
import functools

import jax
import jax.numpy as jnp
from jax.experimental import pallas as pl
from jax.experimental.pallas import tpu as pltpu


def _round_up(x, m):
    return ((x + m - 1) // m) * m


def transformer_layer_kernel(
    x_ref, xpos_ref, mem_ref, mpos_ref,
    wq_ref, bq_ref, wk_ref, bk_ref, wv_ref, bv_ref,
    wo_ref, bo_ref, g1_ref, b1_ref,
    we_ref, be_ref, ws_ref, bs_ref, g2_ref, b2_ref,
    out_ref, attn_ref,
    kT_sc, v_sc, hid_sc,
    *, num_heads, c_true, m_true, eps=1e-5, compute_dtype=jnp.float32,
):
    f32 = jnp.float32
    cd = compute_dtype
    C = c_true                      # true (unpadded) model dim
    Dh = C // num_heads
    scale = 1.0 / math.sqrt(Dh)
    Mp = kT_sc.shape[1]             # padded memory length
    Cp = x_ref.shape[-1]            # padded channel dim

    # ---- per-batch hoist (tile axis is "arbitrary"): K / V projections --------
    # Done once per batch at t == 0; K stored pre-transposed so the per-tile
    # scores matmul is a plain NN dot (no per-tile transpose / re-projection).
    @pl.when(pl.program_id(1) == 0)
    def _():
        mem = mem_ref[0]                                               # (Mp, Cp) f32
        xk = (mem + mpos_ref[0]).astype(cd)                            # key gets memory_pos
        k = jnp.dot(xk, wk_ref[...].astype(cd),
                    preferred_element_type=f32) + bk_ref[...]          # (Mp, C) f32
        kT_sc[...] = jnp.transpose(k).astype(kT_sc.dtype)              # (C, Mp)
        v = jnp.dot(mem.astype(cd), wv_ref[...].astype(cd),
                    preferred_element_type=f32) + bv_ref[...]          # value: no pos
        v_sc[...] = v.astype(v_sc.dtype)                               # (Mp, C)

    # ---- query projection for this tile ---------------------------------------
    x = x_ref[0]                                                       # (Tn, Cp) f32
    xq = (x + xpos_ref[0]).astype(cd)                                  # query gets input_pos
    q = jnp.dot(xq, wq_ref[...].astype(cd),
                preferred_element_type=f32) + bq_ref[...]              # (Tn, C) f32
    q = q.astype(cd)                                                   # cast once, not per slice

    # additive key-padding mask (padded memory rows -> -inf scores -> weight 0)
    if m_true != Mp:
        key_bias = jnp.where(
            jax.lax.broadcasted_iota(jnp.int32, (1, Mp), 1) < m_true, 0.0, -1e30
        ).astype(f32)
    else:
        key_bias = None

    # ---- per-head attention (standard A@V into a hidden slab) ------------------
    # TODO(synk): for large head counts convert to lax.fori_loop(..., unroll=True)
    for h in range(num_heads):                     # small static head count -> unrolled
        sl = slice(h * Dh, (h + 1) * Dh)
        s = jnp.dot(q[:, sl], kT_sc[sl, :], preferred_element_type=f32) * scale
        if key_bias is not None:
            s = s + key_bias
        s = s - jnp.max(s, axis=-1, keepdims=True)
        p = jnp.exp(s)
        denom = jnp.sum(p, axis=-1, keepdims=True)
        r = pl.reciprocal(denom, approx=True)      # EUP slot
        r = r * (2.0 - denom * r)                  # one Newton step -> < 1e-7 rel error
        a = p * r                                  # softmax over keys (f32)
        attn_ref[0, h] = a.astype(attn_ref.dtype)
        hid_sc[:, sl] = jnp.dot(a.astype(cd), v_sc[:, sl],
                                preferred_element_type=f32)            # (Tn, Dh)

    # single (Tn, C) @ (C, Cp) output projection (one MXU pass, not H C-wide ones)
    hidden = jnp.dot(hid_sc[...].astype(cd), wo_ref[...].astype(cd),
                     preferred_element_type=f32) + bo_ref[...]         # (Tn, Cp)

    # ---- residual + LayerNorm with true-C statistics (padded channels are 0) ---
    if Cp != C:
        chan_valid = jax.lax.broadcasted_iota(jnp.int32, (1, Cp), 1) < C
    else:
        chan_valid = None
    inv_c = 1.0 / C

    def layer_norm(t, g, b):
        mu = jnp.sum(t, axis=-1, keepdims=True) * inv_c
        d = t - mu
        if chan_valid is not None:
            d = jnp.where(chan_valid, d, 0.0)
        var = jnp.sum(d * d, axis=-1, keepdims=True) * inv_c
        return d * jax.lax.rsqrt(var + eps) * g + b

    h1 = hidden + x
    h1n = layer_norm(h1, g1_ref[...], b1_ref[...])

    # ---- AttentionOutput: expand -> ReLU -> squeeze -> residual + LayerNorm ----
    e = jnp.dot(h1n.astype(cd), we_ref[...].astype(cd),
                preferred_element_type=f32) + be_ref[...]
    e = jnp.maximum(e, 0.0)
    sq = jnp.dot(e.astype(cd), ws_ref[...].astype(cd),
                 preferred_element_type=f32) + bs_ref[...]
    h2 = h1n + sq
    out_ref[0] = layer_norm(h2, g2_ref[...], b2_ref[...]).astype(out_ref.dtype)


def transformer_layer(input_states, memory_states, input_pos, memory_pos,
                      params, num_heads, *, tile_n=None,
                      compute_dtype=jnp.float32, attn_dtype=jnp.float32,
                      eps=1e-5):
    f32 = jnp.float32
    B, N, C = input_states.shape
    M = memory_states.shape[1]
    H = num_heads
    if C % H:
        raise ValueError(f"d_model ({C}) must be a multiple of num_heads ({H}).")
    E = params["we"].shape[1]

    # lane-dense padding of the channel / memory dims (multiples of 128)
    Cp = _round_up(C, 128)
    Mp = _round_up(M, 128)

    cd_bytes = jnp.dtype(compute_dtype).itemsize
    attn_bytes = jnp.dtype(attn_dtype).itemsize

    # --- VMEM-budgeted query tile -------------------------------------------------
    try:
        vmem_cap = pltpu.get_tpu_info().vmem_capacity_bytes
    except Exception:  # pragma: no cover - conservative fallback (v7x-sized)
        vmem_cap = 64 * 1024 * 1024

    fixed = 2 * 2 * Mp * Cp * 4                                   # mem + mpos blocks (dbl-buffered)
    fixed += (3 * Cp * C + C * Cp + Cp * E + E * Cp) * cd_bytes   # weight matrices
    fixed += (C * Mp + Mp * C) * cd_bytes                         # K^T / V scratch

    def tile_vmem(t):
        b = 2 * 2 * t * Cp * 4                 # x + xpos blocks (double-buffered)
        b += 2 * t * Cp * 4                    # out block
        b += 2 * H * t * Mp * attn_bytes       # attn block (dominant term)
        b += t * C * 4                         # hidden slab scratch
        b += t * (3 * Mp + 4 * Cp + E) * 4     # live intermediates (s/p/a, q/h1/h1n/e)
        return b

    if tile_n is None:
        tile_n = 512
        while tile_n > 64 and fixed + tile_vmem(tile_n) > 0.7 * vmem_cap:
            tile_n //= 2
    tile_n = max(8, _round_up(min(tile_n, _round_up(N, 8)), 8))
    n_pad = _round_up(N, tile_n)
    grid = (B, n_pad // tile_n)

    # --- zero-padding (keeps the math exact; see kernel masking) ------------------
    def pad_to(a, shape):
        pads = [(0, s - d) for d, s in zip(a.shape, shape)]
        if any(p[1] for p in pads):
            a = jnp.pad(a, pads)
        return a

    x_p = pad_to(input_states, (B, n_pad, Cp))
    xpos_p = pad_to(input_pos, (B, n_pad, Cp))
    mem_p = pad_to(memory_states, (B, Mp, Cp))
    mpos_p = pad_to(memory_pos, (B, Mp, Cp))

    weight_mats = {"wq", "wk", "wv", "wo", "we", "ws"}

    def prep(name, shape):
        p = pad_to(params[name], shape)
        if name in weight_mats and compute_dtype != f32:
            p = p.astype(compute_dtype)        # halve weight DMA / VMEM in bf16 mode
        return p

    param_args = [
        prep("wq", (Cp, C)), prep("bq", (1, C)),
        prep("wk", (Cp, C)), prep("bk", (1, C)),
        prep("wv", (Cp, C)), prep("bv", (1, C)),
        prep("wo", (C, Cp)), prep("bo", (1, Cp)),
        prep("g1", (1, Cp)), prep("b1", (1, Cp)),
        prep("we", (Cp, E)), prep("be", (1, E)),
        prep("ws", (E, Cp)), prep("bs", (1, Cp)),
        prep("g2", (1, Cp)), prep("b2", (1, Cp)),
    ]

    seq_q = pl.BlockSpec((1, tile_n, Cp), lambda b, t: (b, t, 0))
    seq_m = pl.BlockSpec((1, Mp, Cp), lambda b, t: (b, 0, 0))

    def full_spec(arr):
        nd = arr.ndim
        return pl.BlockSpec(arr.shape, lambda b, t, _nd=nd: (0,) * _nd)

    in_specs = [seq_q, seq_q, seq_m, seq_m] + [full_spec(p) for p in param_args]
    out_specs = [
        pl.BlockSpec((1, tile_n, Cp), lambda b, t: (b, t, 0)),
        pl.BlockSpec((1, H, tile_n, Mp), lambda b, t: (b, 0, t, 0)),
    ]
    out_shape = (
        jax.ShapeDtypeStruct((B, n_pad, Cp), f32),
        jax.ShapeDtypeStruct((B, H, n_pad, Mp), attn_dtype),
    )
    scratch_shapes = [
        pltpu.VMEM((C, Mp), compute_dtype),     # K^T  (per-batch resident)
        pltpu.VMEM((Mp, C), compute_dtype),     # V    (per-batch resident)
        pltpu.VMEM((tile_n, C), jnp.float32),   # per-head A@V hidden slab
    ]

    # advisory cost estimate for the XLA scheduler
    flops = 2 * B * (C * C * (N + 2 * M)        # q/k/v projections
                     + 2 * N * M * C            # scores + A@V
                     + N * C * C                # output projection
                     + 2 * N * C * E)           # FFN
    bytes_accessed = int(
        4 * B * C * (2 * N + 2 * M)
        + 4 * B * N * C
        + attn_bytes * B * H * N * M
        + 4 * (4 * C * C + 2 * C * E)
    )
    cost = pl.CostEstimate(flops=flops, transcendentals=B * H * N * M,
                           bytes_accessed=bytes_accessed)

    kernel = functools.partial(
        transformer_layer_kernel, num_heads=H, c_true=C, m_true=M,
        eps=eps, compute_dtype=compute_dtype)

    vmem_lim = int(min(0.9 * vmem_cap, 100 * 1024 * 1024))

    out, attn = pl.pallas_call(
        kernel,
        out_shape=out_shape,
        grid_spec=pltpu.PrefetchScalarGridSpec(
            num_scalar_prefetch=0,
            grid=grid,
            in_specs=in_specs,
            out_specs=out_specs,
            scratch_shapes=scratch_shapes,
        ),
        compiler_params=pltpu.CompilerParams(
            # batch axis parallel (megacore / v7x 2-TC sharding); tile axis must be
            # sequential so the per-batch K/V hoist at t == 0 is valid.
            dimension_semantics=("parallel", "arbitrary"),
            vmem_limit_bytes=vmem_lim,
        ),
        cost_estimate=cost,
    )(x_p, xpos_p, mem_p, mpos_p, *param_args)

    out = out[:, :N, :C]
    attn = attn[:, :, :N, :M]
    return out, attn


def transformer_layer_ref(x, mem, xpos, mpos, p, num_heads, eps=1e-5):
    """Pure-JAX reference of the torch forward."""
    B, N, C = x.shape
    Dh = C // num_heads
    xq = x + xpos
    xk = mem + mpos
    q = xq @ p["wq"] + p["bq"]
    k = xk @ p["wk"] + p["bk"]
    v = mem @ p["wv"] + p["bv"]

    def split(t):  # (B, L, C) -> (B, H, L, Dh)
        return t.reshape(B, -1, num_heads, Dh).transpose(0, 2, 1, 3)

    qh, kh, vh = split(q), split(k), split(v)
    scores = jnp.einsum("bhnc,bhmc->bhnm", qh, kh) / math.sqrt(Dh)
    attn = jax.nn.softmax(scores, axis=-1)
    hid = jnp.einsum("bhnm,bhmc->bhnc", attn, vh)
    hid = hid.transpose(0, 2, 1, 3).reshape(B, -1, C)
    hid = hid @ p["wo"] + p["bo"]

    def ln(t, g, b):
        mu = t.mean(-1, keepdims=True)
        var = ((t - mu) ** 2).mean(-1, keepdims=True)
        return (t - mu) * jax.lax.rsqrt(var + eps) * g + b

    h1 = ln(hid + x, p["g1"], p["b1"])
    e = jnp.maximum(h1 @ p["we"] + p["be"], 0.0)
    s = e @ p["ws"] + p["bs"]
    out = ln(h1 + s, p["g2"], p["b2"])
    return out, attn


if __name__ == "__main__":
    B, N, M, C, H = 2, 8, 8, 32, 4

    key = jax.random.PRNGKey(0)
    ks = jax.random.split(key, 20)

    input_states = jax.random.normal(ks[0], (B, N, C), jnp.float32)
    memory_states = jax.random.normal(ks[1], (B, M, C), jnp.float32)
    input_pos = 0.1 * jax.random.normal(ks[2], (B, N, C), jnp.float32)
    memory_pos = 0.1 * jax.random.normal(ks[3], (B, M, C), jnp.float32)

    def w(k, shape, scale=0.1):
        return scale * jax.random.normal(k, shape, jnp.float32)

    params = {
        "wq": w(ks[4], (C, C)),  "bq": w(ks[5], (1, C)),
        "wk": w(ks[6], (C, C)),  "bk": w(ks[7], (1, C)),
        "wv": w(ks[8], (C, C)),  "bv": w(ks[9], (1, C)),
        "wo": w(ks[10], (C, C)), "bo": w(ks[11], (1, C)),
        "g1": jnp.ones((1, C), jnp.float32), "b1": jnp.zeros((1, C), jnp.float32),
        "we": w(ks[12], (C, 2 * C)), "be": w(ks[13], (1, 2 * C)),
        "ws": w(ks[14], (2 * C, C)), "bs": w(ks[15], (1, C)),
        "g2": jnp.ones((1, C), jnp.float32), "b2": jnp.zeros((1, C), jnp.float32),
    }

    out_exp, attn_exp = transformer_layer_ref(input_states, memory_states,
                                              input_pos, memory_pos, params, H)

    # f32 path (tight-tolerance check)
    out, attn = transformer_layer(input_states, memory_states,
                                  input_pos, memory_pos, params, H)
    jax.block_until_ready(out)
    jax.block_until_ready(attn)
    assert out.shape == (B, N, C) and attn.shape == (B, H, N, M)
    assert jnp.allclose(out, out_exp, atol=1e-4, rtol=1e-4), "output mismatch (f32)"
    assert jnp.allclose(attn, attn_exp, atol=1e-5, rtol=1e-4), "attn mismatch (f32)"

    # bf16 operands + bf16 attention output (MXU / HBM friendly) — loose check
    out_bf, attn_bf = transformer_layer(input_states, memory_states,
                                        input_pos, memory_pos, params, H,
                                        compute_dtype=jnp.bfloat16,
                                        attn_dtype=jnp.bfloat16)
    jax.block_until_ready(out_bf)
    jax.block_until_ready(attn_bf)
    assert float(jnp.max(jnp.abs(out_bf - out_exp))) < 0.2, "output mismatch (bf16)"
    assert float(jnp.max(jnp.abs(attn_bf.astype(jnp.float32) - attn_exp))) < 0.1, \
        "attn mismatch (bf16)"

    print("KERNEL_OK")
</pallas_src>

<mosaic_0001>
module attributes {stable_mosaic.version = 11 : i64} {
  func.func @transformer_layer_kernel(%arg0: i32, %arg1: i32, %arg2: memref<1x8x128xf32, #tpu.memory_space<vmem>>, %arg3: memref<1x8x128xf32, #tpu.memory_space<vmem>>, %arg4: memref<1x128x128xf32, #tpu.memory_space<vmem>>, %arg5: memref<1x128x128xf32, #tpu.memory_space<vmem>>, %arg6: memref<128x32xf32, #tpu.memory_space<vmem>>, %arg7: memref<1x32xf32, #tpu.memory_space<vmem>>, %arg8: memref<128x32xf32, #tpu.memory_space<vmem>>, %arg9: memref<1x32xf32, #tpu.memory_space<vmem>>, %arg10: memref<128x32xf32, #tpu.memory_space<vmem>>, %arg11: memref<1x32xf32, #tpu.memory_space<vmem>>, %arg12: memref<32x128xf32, #tpu.memory_space<vmem>>, %arg13: memref<1x128xf32, #tpu.memory_space<vmem>>, %arg14: memref<1x128xf32, #tpu.memory_space<vmem>>, %arg15: memref<1x128xf32, #tpu.memory_space<vmem>>, %arg16: memref<128x64xf32, #tpu.memory_space<vmem>>, %arg17: memref<1x64xf32, #tpu.memory_space<vmem>>, %arg18: memref<64x128xf32, #tpu.memory_space<vmem>>, %arg19: memref<1x128xf32, #tpu.memory_space<vmem>>, %arg20: memref<1x128xf32, #tpu.memory_space<vmem>>, %arg21: memref<1x128xf32, #tpu.memory_space<vmem>>, %arg22: memref<1x8x128xf32, #tpu.memory_space<vmem>>, %arg23: memref<1x4x8x128xf32, #tpu.memory_space<vmem>>, %arg24: memref<32x128xf32, #tpu.memory_space<vmem>>, %arg25: memref<128x32xf32, #tpu.memory_space<vmem>>, %arg26: memref<8x32xf32, #tpu.memory_space<vmem>>) attributes {dimension_semantics = [#tpu.dimension_semantics<parallel>, #tpu.dimension_semantics<arbitrary>], iteration_bounds = array<i64: 2, 1>, scalar_prefetch = 0 : i64, scratch_operands = 3 : i64, tpu.core_type = #tpu.core_type<tc>, window_params = [{transform_indices = @transform_0, window_bounds = array<i64: 1, 8, 128>}, {transform_indices = @transform_1, window_bounds = array<i64: 1, 8, 128>}, {transform_indices = @transform_2, window_bounds = array<i64: 1, 128, 128>}, {transform_indices = @transform_3, window_bounds = array<i64: 1, 128, 128>}, {pipeline_mode = #tpu.pipeline_mode<synchronous>, transform_indices = @transform_4, window_bounds = array<i64: 128, 32>}, {pipeline_mode = #tpu.pipeline_mode<synchronous>, transform_indices = @transform_5, window_bounds = array<i64: 1, 32>}, {pipeline_mode = #tpu.pipeline_mode<synchronous>, transform_indices = @transform_6, window_bounds = array<i64: 128, 32>}, {pipeline_mode = #tpu.pipeline_mode<synchronous>, transform_indices = @transform_7, window_bounds = array<i64: 1, 32>}, {pipeline_mode = #tpu.pipeline_mode<synchronous>, transform_indices = @transform_8, window_bounds = array<i64: 128, 32>}, {pipeline_mode = #tpu.pipeline_mode<synchronous>, transform_indices = @transform_9, window_bounds = array<i64: 1, 32>}, {pipeline_mode = #tpu.pipeline_mode<synchronous>, transform_indices = @transform_10, window_bounds = array<i64: 32, 128>}, {pipeline_mode = #tpu.pipeline_mode<synchronous>, transform_indices = @transform_11, window_bounds = array<i64: 1, 128>}, {pipeline_mode = #tpu.pipeline_mode<synchronous>, transform_indices = @transform_12, window_bounds = array<i64: 1, 128>}, {pipeline_mode = #tpu.pipeline_mode<synchronous>, transform_indices = @transform_13, window_bounds = array<i64: 1, 128>}, {pipeline_mode = #tpu.pipeline_mode<synchronous>, transform_indices = @transform_14, window_bounds = array<i64: 128, 64>}, {pipeline_mode = #tpu.pipeline_mode<synchronous>, transform_indices = @transform_15, window_bounds = array<i64: 1, 64>}, {pipeline_mode = #tpu.pipeline_mode<synchronous>, transform_indices = @transform_16, window_bounds = array<i64: 64, 128>}, {pipeline_mode = #tpu.pipeline_mode<synchronous>, transform_indices = @transform_17, window_bounds = array<i64: 1, 128>}, {pipeline_mode = #tpu.pipeline_mode<synchronous>, transform_indices = @transform_18, window_bounds = array<i64: 1, 128>}, {pipeline_mode = #tpu.pipeline_mode<synchronous>, transform_indices = @transform_19, window_bounds = array<i64: 1, 128>}, {transform_indices = @transform_20, window_bounds = array<i64: 1, 8, 128>}, {transform_indices = @transform_21, window_bounds = array<i64: 1, 4, 8, 128>}]} {
    %c0_i32 = arith.constant 0 : i32
    %0 = arith.cmpi eq, %arg1, %c0_i32 : i32
    %1 = arith.extui %0 : i1 to i32
    %c0_i32_0 = arith.constant 0 : i32
    %2 = arith.cmpi ne, %1, %c0_i32_0 : i32
    scf.if %2 {
      %c0_111 = arith.constant 0 : index
      %c0_112 = arith.constant 0 : index
      %c0_113 = arith.constant 0 : index
      %205 = vector.load %arg4[%c0_111, %c0_112, %c0_113] : memref<1x128x128xf32, #tpu.memory_space<vmem>>, vector<1x128x128xf32>
      %206 = vector.shape_cast %205 : vector<1x128x128xf32> to vector<128x128xf32>
      %c0_114 = arith.constant 0 : index
      %c0_115 = arith.constant 0 : index
      %c0_116 = arith.constant 0 : index
      %207 = vector.load %arg5[%c0_114, %c0_115, %c0_116] : memref<1x128x128xf32, #tpu.memory_space<vmem>>, vector<1x128x128xf32>
      %208 = vector.shape_cast %207 : vector<1x128x128xf32> to vector<128x128xf32>
      %209 = arith.addf %206, %208 : vector<128x128xf32>
      %c0_117 = arith.constant 0 : index
      %c0_118 = arith.constant 0 : index
      %210 = vector.load %arg8[%c0_117, %c0_118] : memref<128x32xf32, #tpu.memory_space<vmem>>, vector<128x32xf32>
      %cst_119 = arith.constant dense<0.000000e+00> : vector<128x32xf32>
      %211 = tpu.matmul %209, %210, %cst_119 {dimension_numbers = #tpu.dot_dimension_numbers<[1], [0], [0], [1], [0, 0, 1, 1], [], []>} : vector<128x128xf32>, vector<128x32xf32>, vector<128x32xf32> -> vector<128x32xf32>
      %c0_120 = arith.constant 0 : index
      %c0_121 = arith.constant 0 : index
      %212 = vector.load %arg9[%c0_120, %c0_121] : memref<1x32xf32, #tpu.memory_space<vmem>>, vector<1x32xf32>
      %213 = vector.broadcast %212 : vector<1x32xf32> to vector<128x32xf32>
      %214 = arith.addf %211, %213 : vector<128x32xf32>
      %215 = tpu.transpose %214, [1, 0] : vector<128x32xf32> -> vector<32x128xf32>
      %c0_122 = arith.constant 0 : index
      %c0_123 = arith.constant 0 : index
      %216 = vector.load %arg24[%c0_122, %c0_123] : memref<32x128xf32, #tpu.memory_space<vmem>>, vector<32x128xf32>
      tpu.vector_store %arg24[%c0_122, %c0_123], %215 {strides = array<i32>} : memref<32x128xf32, #tpu.memory_space<vmem>>, vector<32x128xf32>,
      %c0_124 = arith.constant 0 : index
      %c0_125 = arith.constant 0 : index
      %217 = vector.load %arg10[%c0_124, %c0_125] : memref<128x32xf32, #tpu.memory_space<vmem>>, vector<128x32xf32>
      %cst_126 = arith.constant dense<0.000000e+00> : vector<128x32xf32>
      %218 = tpu.matmul %206, %217, %cst_126 {dimension_numbers = #tpu.dot_dimension_numbers<[1], [0], [0], [1], [0, 0, 1, 1], [], []>} : vector<128x128xf32>, vector<128x32xf32>, vector<128x32xf32> -> vector<128x32xf32>
      %c0_127 = arith.constant 0 : index
      %c0_128 = arith.constant 0 : index
      %219 = vector.load %arg11[%c0_127, %c0_128] : memref<1x32xf32, #tpu.memory_space<vmem>>, vector<1x32xf32>
      %220 = vector.broadcast %219 : vector<1x32xf32> to vector<128x32xf32>
      %221 = arith.addf %218, %220 : vector<128x32xf32>
      %c0_129 = arith.constant 0 : index
      %c0_130 = arith.constant 0 : index
      %222 = vector.load %arg25[%c0_129, %c0_130] : memref<128x32xf32, #tpu.memory_space<vmem>>, vector<128x32xf32>
      tpu.vector_store %arg25[%c0_129, %c0_130], %221 {strides = array<i32>} : memref<128x32xf32, #tpu.memory_space<vmem>>, vector<128x32xf32>,
    } else {
    }
    %c0 = arith.constant 0 : index
    %c0_1 = arith.constant 0 : index
    %c0_2 = arith.constant 0 : index
    %3 = vector.load %arg2[%c0, %c0_1, %c0_2] : memref<1x8x128xf32, #tpu.memory_space<vmem>>, vector<1x8x128xf32>
    %4 = vector.shape_cast %3 : vector<1x8x128xf32> to vector<8x128xf32>
    %c0_3 = arith.constant 0 : index
    %c0_4 = arith.constant 0 : index
    %c0_5 = arith.constant 0 : index
    %5 = vector.load %arg3[%c0_3, %c0_4, %c0_5] : memref<1x8x128xf32, #tpu.memory_space<vmem>>, vector<1x8x128xf32>
    %6 = vector.shape_cast %5 : vector<1x8x128xf32> to vector<8x128xf32>
    %7 = arith.addf %4, %6 : vector<8x128xf32>
    %c0_6 = arith.constant 0 : index
    %c0_7 = arith.constant 0 : index
    %8 = vector.load %arg6[%c0_6, %c0_7] : memref<128x32xf32, #tpu.memory_space<vmem>>, vector<128x32xf32>
    %cst = arith.constant dense<0.000000e+00> : vector<8x32xf32>
    %9 = tpu.matmul %7, %8, %cst {dimension_numbers = #tpu.dot_dimension_numbers<[1], [0], [0], [1], [0, 0, 1, 1], [], []>} : vector<8x128xf32>, vector<128x32xf32>, vector<8x32xf32> -> vector<8x32xf32>
    %c0_8 = arith.constant 0 : index
    %c0_9 = arith.constant 0 : index
    %10 = vector.load %arg7[%c0_8, %c0_9] : memref<1x32xf32, #tpu.memory_space<vmem>>, vector<1x32xf32>
    %11 = vector.broadcast %10 : vector<1x32xf32> to vector<8x32xf32>
    %12 = arith.addf %9, %11 : vector<8x32xf32>
    %13 = tpu.iota {dimensions = array<i32: 1>} : vector<1x128xi32>
    %c8_i32 = arith.constant 8 : i32
    %14 = vector.broadcast %c8_i32 : i32 to vector<1x128xi32>
    %15 = arith.cmpi slt, %13, %14 : vector<1x128xi32>
    %cst_10 = arith.constant 0.000000e+00 : f32
    %cst_11 = arith.constant -1.000000e+30 : f32
    %16 = vector.broadcast %cst_10 : f32 to vector<1x128xf32>
    %17 = vector.broadcast %cst_11 : f32 to vector<1x128xf32>
    %18 = arith.select %15, %16, %17 : vector<1x128xi1>, vector<1x128xf32>
    %19 = vector.extract_strided_slice %12 {offsets = [0, 0], sizes = [8, 8], strides = [1, 1]} : vector<8x32xf32> to vector<8x8xf32>
    %c0_12 = arith.constant 0 : index
    %c0_13 = arith.constant 0 : index
    %20 = vector.load %arg24[%c0_12, %c0_13] : memref<32x128xf32, #tpu.memory_space<vmem>>, vector<8x128xf32>
    %cst_14 = arith.constant dense<0.000000e+00> : vector<8x128xf32>
    %21 = tpu.matmul %19, %20, %cst_14 {dimension_numbers = #tpu.dot_dimension_numbers<[1], [0], [0], [1], [0, 0, 1, 1], [], []>} : vector<8x8xf32>, vector<8x128xf32>, vector<8x128xf32> -> vector<8x128xf32>
    %cst_15 = arith.constant 0.353553385 : f32
    %22 = vector.broadcast %cst_15 : f32 to vector<8x128xf32>
    %23 = arith.mulf %21, %22 : vector<8x128xf32>
    %24 = vector.broadcast %18 : vector<1x128xf32> to vector<8x128xf32>
    %25 = arith.addf %23, %24 : vector<8x128xf32>
    %cst_16 = arith.constant dense<0xFF800000> : vector<8xf32>
    %26 = vector.multi_reduction <maximumf>, %25, %cst_16 [1] : vector<8x128xf32> to vector<8xf32>
    %27 = vector.shape_cast %26 : vector<8xf32> to vector<8x1xf32>
    %28 = vector.broadcast %27 : vector<8x1xf32> to vector<8x128xf32>
    %29 = arith.subf %25, %28 : vector<8x128xf32>
    %30 = math.exp %29 : vector<8x128xf32>
    %cst_17 = arith.constant dense<0.000000e+00> : vector<8xf32>
    %31 = vector.multi_reduction <add>, %30, %cst_17 [1] : vector<8x128xf32> to vector<8xf32>
    %32 = vector.shape_cast %31 : vector<8xf32> to vector<8x1xf32>
    %33 = tpu.reciprocal %32 {approx = true} : vector<8x1xf32> -> vector<8x1xf32>
    %34 = arith.mulf %32, %33 : vector<8x1xf32>
    %cst_18 = arith.constant 2.000000e+00 : f32
    %35 = vector.broadcast %cst_18 : f32 to vector<8x1xf32>
    %36 = arith.subf %35, %34 : vector<8x1xf32>
    %37 = arith.mulf %33, %36 : vector<8x1xf32>
    %38 = vector.broadcast %37 : vector<8x1xf32> to vector<8x128xf32>
    %39 = arith.mulf %30, %38 : vector<8x128xf32>
    %c0_19 = arith.constant 0 : index
    %c0_20 = arith.constant 0 : index
    %c0_21 = arith.constant 0 : index
    %c0_22 = arith.constant 0 : index
    %40 = vector.load %arg23[%c0_19, %c0_20, %c0_21, %c0_22] : memref<1x4x8x128xf32, #tpu.memory_space<vmem>>, vector<1x1x8x128xf32>
    %41 = vector.shape_cast %40 : vector<1x1x8x128xf32> to vector<8x128xf32>
    %42 = vector.shape_cast %39 : vector<8x128xf32> to vector<1x1x8x128xf32>
    tpu.vector_store %arg23[%c0_19, %c0_20, %c0_21, %c0_22], %42 {strides = array<i32>} : memref<1x4x8x128xf32, #tpu.memory_space<vmem>>, vector<1x1x8x128xf32>,
    %c0_23 = arith.constant 0 : index
    %c0_24 = arith.constant 0 : index
    %43 = vector.load %arg25[%c0_23, %c0_24] : memref<128x32xf32, #tpu.memory_space<vmem>>, vector<128x8xf32>
    %cst_25 = arith.constant dense<0.000000e+00> : vector<8x8xf32>
    %44 = tpu.matmul %39, %43, %cst_25 {dimension_numbers = #tpu.dot_dimension_numbers<[1], [0], [0], [1], [0, 0, 1, 1], [], []>} : vector<8x128xf32>, vector<128x8xf32>, vector<8x8xf32> -> vector<8x8xf32>
    %c0_26 = arith.constant 0 : index
    %c0_27 = arith.constant 0 : index
    %45 = vector.load %arg26[%c0_26, %c0_27] : memref<8x32xf32, #tpu.memory_space<vmem>>, vector<8x8xf32>
    tpu.vector_store %arg26[%c0_26, %c0_27], %44 {strides = array<i32>} : memref<8x32xf32, #tpu.memory_space<vmem>>, vector<8x8xf32>,
    %46 = vector.extract_strided_slice %12 {offsets = [0, 8], sizes = [8, 8], strides = [1, 1]} : vector<8x32xf32> to vector<8x8xf32>
    %c8 = arith.constant 8 : index
    %c0_28 = arith.constant 0 : index
    %47 = vector.load %arg24[%c8, %c0_28] : memref<32x128xf32, #tpu.memory_space<vmem>>, vector<8x128xf32>
    %cst_29 = arith.constant dense<0.000000e+00> : vector<8x128xf32>
    %48 = tpu.matmul %46, %47, %cst_29 {dimension_numbers = #tpu.dot_dimension_numbers<[1], [0], [0], [1], [0, 0, 1, 1], [], []>} : vector<8x8xf32>, vector<8x128xf32>, vector<8x128xf32> -> vector<8x128xf32>
    %cst_30 = arith.constant 0.353553385 : f32
    %49 = vector.broadcast %cst_30 : f32 to vector<8x128xf32>
    %50 = arith.mulf %48, %49 : vector<8x128xf32>
    %51 = vector.broadcast %18 : vector<1x128xf32> to vector<8x128xf32>
    %52 = arith.addf %50, %51 : vector<8x128xf32>
    %cst_31 = arith.constant dense<0xFF800000> : vector<8xf32>
    %53 = vector.multi_reduction <maximumf>, %52, %cst_31 [1] : vector<8x128xf32> to vector<8xf32>
    %54 = vector.shape_cast %53 : vector<8xf32> to vector<8x1xf32>
    %55 = vector.broadcast %54 : vector<8x1xf32> to vector<8x128xf32>
    %56 = arith.subf %52, %55 : vector<8x128xf32>
    %57 = math.exp %56 : vector<8x128xf32>
    %cst_32 = arith.constant dense<0.000000e+00> : vector<8xf32>
    %58 = vector.multi_reduction <add>, %57, %cst_32 [1] : vector<8x128xf32> to vector<8xf32>
    %59 = vector.shape_cast %58 : vector<8xf32> to vector<8x1xf32>
    %60 = tpu.reciprocal %59 {approx = true} : vector<8x1xf32> -> vector<8x1xf32>
    %61 = arith.mulf %59, %60 : vector<8x1xf32>
    %cst_33 = arith.constant 2.000000e+00 : f32
    %62 = vector.broadcast %cst_33 : f32 to vector<8x1xf32>
    %63 = arith.subf %62, %61 : vector<8x1xf32>
    %64 = arith.mulf %60, %63 : vector<8x1xf32>
    %65 = vector.broadcast %64 : vector<8x1xf32> to vector<8x128xf32>
    %66 = arith.mulf %57, %65 : vector<8x128xf32>
    %c0_34 = arith.constant 0 : index
    %c1 = arith.constant 1 : index
    %c0_35 = arith.constant 0 : index
    %c0_36 = arith.constant 0 : index
    %67 = vector.load %arg23[%c0_34, %c1, %c0_35, %c0_36] : memref<1x4x8x128xf32, #tpu.memory_space<vmem>>, vector<1x1x8x128xf32>
    %68 = vector.shape_cast %67 : vector<1x1x8x128xf32> to vector<8x128xf32>
    %69 = vector.shape_cast %66 : vector<8x128xf32> to vector<1x1x8x128xf32>
    tpu.vector_store %arg23[%c0_34, %c1, %c0_35, %c0_36], %69 {strides = array<i32>} : memref<1x4x8x128xf32, #tpu.memory_space<vmem>>, vector<1x1x8x128xf32>,
    %c0_37 = arith.constant 0 : index
    %c8_38 = arith.constant 8 : index
    %70 = vector.load %arg25[%c0_37, %c8_38] : memref<128x32xf32, #tpu.memory_space<vmem>>, vector<128x8xf32>
    %cst_39 = arith.constant dense<0.000000e+00> : vector<8x8xf32>
    %71 = tpu.matmul %66, %70, %cst_39 {dimension_numbers = #tpu.dot_dimension_numbers<[1], [0], [0], [1], [0, 0, 1, 1], [], []>} : vector<8x128xf32>, vector<128x8xf32>, vector<8x8xf32> -> vector<8x8xf32>
    %c0_40 = arith.constant 0 : index
    %c8_41 = arith.constant 8 : index
    %72 = vector.load %arg26[%c0_40, %c8_41] : memref<8x32xf32, #tpu.memory_space<vmem>>, vector<8x8xf32>
    tpu.vector_store %arg26[%c0_40, %c8_41], %71 {strides = array<i32>} : memref<8x32xf32, #tpu.memory_space<vmem>>, vector<8x8xf32>,
    %73 = vector.extract_strided_slice %12 {offsets = [0, 16], sizes = [8, 8], strides = [1, 1]} : vector<8x32xf32> to vector<8x8xf32>
    %c16 = arith.constant 16 : index
    %c0_42 = arith.constant 0 : index
    %74 = vector.load %arg24[%c16, %c0_42] : memref<32x128xf32, #tpu.memory_space<vmem>>, vector<8x128xf32>
    %cst_43 = arith.constant dense<0.000000e+00> : vector<8x128xf32>
    %75 = tpu.matmul %73, %74, %cst_43 {dimension_numbers = #tpu.dot_dimension_numbers<[1], [0], [0], [1], [0, 0, 1, 1], [], []>} : vector<8x8xf32>, vector<8x128xf32>, vector<8x128xf32> -> vector<8x128xf32>
    %cst_44 = arith.constant 0.353553385 : f32
    %76 = vector.broadcast %cst_44 : f32 to vector<8x128xf32>
    %77 = arith.mulf %75, %76 : vector<8x128xf32>
    %78 = vector.broadcast %18 : vector<1x128xf32> to vector<8x128xf32>
    %79 = arith.addf %77, %78 : vector<8x128xf32>
    %cst_45 = arith.constant dense<0xFF800000> : vector<8xf32>
    %80 = vector.multi_reduction <maximumf>, %79, %cst_45 [1] : vector<8x128xf32> to vector<8xf32>
    %81 = vector.shape_cast %80 : vector<8xf32> to vector<8x1xf32>
    %82 = vector.broadcast %81 : vector<8x1xf32> to vector<8x128xf32>
    %83 = arith.subf %79, %82 : vector<8x128xf32>
    %84 = math.exp %83 : vector<8x128xf32>
    %cst_46 = arith.constant dense<0.000000e+00> : vector<8xf32>
    %85 = vector.multi_reduction <add>, %84, %cst_46 [1] : vector<8x128xf32> to vector<8xf32>
    %86 = vector.shape_cast %85 : vector<8xf32> to vector<8x1xf32>
    %87 = tpu.reciprocal %86 {approx = true} : vector<8x1xf32> -> vector<8x1xf32>
    %88 = arith.mulf %86, %87 : vector<8x1xf32>
    %cst_47 = arith.constant 2.000000e+00 : f32
    %89 = vector.broadcast %cst_47 : f32 to vector<8x1xf32>
    %90 = arith.subf %89, %88 : vector<8x1xf32>
    %91 = arith.mulf %87, %90 : vector<8x1xf32>
    %92 = vector.broadcast %91 : vector<8x1xf32> to vector<8x128xf32>
    %93 = arith.mulf %84, %92 : vector<8x128xf32>
    %c0_48 = arith.constant 0 : index
    %c2 = arith.constant 2 : index
    %c0_49 = arith.constant 0 : index
    %c0_50 = arith.constant 0 : index
    %94 = vector.load %arg23[%c0_48, %c2, %c0_49, %c0_50] : memref<1x4x8x128xf32, #tpu.memory_space<vmem>>, vector<1x1x8x128xf32>
    %95 = vector.shape_cast %94 : vector<1x1x8x128xf32> to vector<8x128xf32>
    %96 = vector.shape_cast %93 : vector<8x128xf32> to vector<1x1x8x128xf32>
    tpu.vector_store %arg23[%c0_48, %c2, %c0_49, %c0_50], %96 {strides = array<i32>} : memref<1x4x8x128xf32, #tpu.memory_space<vmem>>, vector<1x1x8x128xf32>,
    %c0_51 = arith.constant 0 : index
    %c16_52 = arith.constant 16 : index
    %97 = vector.load %arg25[%c0_51, %c16_52] : memref<128x32xf32, #tpu.memory_space<vmem>>, vector<128x8xf32>
    %cst_53 = arith.constant dense<0.000000e+00> : vector<8x8xf32>
    %98 = tpu.matmul %93, %97, %cst_53 {dimension_numbers = #tpu.dot_dimension_numbers<[1], [0], [0], [1], [0, 0, 1, 1], [], []>} : vector<8x128xf32>, vector<128x8xf32>, vector<8x8xf32> -> vector<8x8xf32>
    %c0_54 = arith.constant 0 : index
    %c16_55 = arith.constant 16 : index
    %99 = vector.load %arg26[%c0_54, %c16_55] : memref<8x32xf32, #tpu.memory_space<vmem>>, vector<8x8xf32>
    tpu.vector_store %arg26[%c0_54, %c16_55], %98 {strides = array<i32>} : memref<8x32xf32, #tpu.memory_space<vmem>>, vector<8x8xf32>,
    %100 = vector.extract_strided_slice %12 {offsets = [0, 24], sizes = [8, 8], strides = [1, 1]} : vector<8x32xf32> to vector<8x8xf32>
    %c24 = arith.constant 24 : index
    %c0_56 = arith.constant 0 : index
    %101 = vector.load %arg24[%c24, %c0_56] : memref<32x128xf32, #tpu.memory_space<vmem>>, vector<8x128xf32>
    %cst_57 = arith.constant dense<0.000000e+00> : vector<8x128xf32>
    %102 = tpu.matmul %100, %101, %cst_57 {dimension_numbers = #tpu.dot_dimension_numbers<[1], [0], [0], [1], [0, 0, 1, 1], [], []>} : vector<8x8xf32>, vector<8x128xf32>, vector<8x128xf32> -> vector<8x128xf32>
    %cst_58 = arith.constant 0.353553385 : f32
    %103 = vector.broadcast %cst_58 : f32 to vector<8x128xf32>
    %104 = arith.mulf %102, %103 : vector<8x128xf32>
    %105 = vector.broadcast %18 : vector<1x128xf32> to vector<8x128xf32>
    %106 = arith.addf %104, %105 : vector<8x128xf32>
    %cst_59 = arith.constant dense<0xFF800000> : vector<8xf32>
    %107 = vector.multi_reduction <maximumf>, %106, %cst_59 [1] : vector<8x128xf32> to vector<8xf32>
    %108 = vector.shape_cast %107 : vector<8xf32> to vector<8x1xf32>
    %109 = vector.broadcast %108 : vector<8x1xf32> to vector<8x128xf32>
    %110 = arith.subf %106, %109 : vector<8x128xf32>
    %111 = math.exp %110 : vector<8x128xf32>
    %cst_60 = arith.constant dense<0.000000e+00> : vector<8xf32>
    %112 = vector.multi_reduction <add>, %111, %cst_60 [1] : vector<8x128xf32> to vector<8xf32>
    %113 = vector.shape_cast %112 : vector<8xf32> to vector<8x1xf32>
    %114 = tpu.reciprocal %113 {approx = true} : vector<8x1xf32> -> vector<8x1xf32>
    %115 = arith.mulf %113, %114 : vector<8x1xf32>
    %cst_61 = arith.constant 2.000000e+00 : f32
    %116 = vector.broadcast %cst_61 : f32 to vector<8x1xf32>
    %117 = arith.subf %116, %115 : vector<8x1xf32>
    %118 = arith.mulf %114, %117 : vector<8x1xf32>
    %119 = vector.broadcast %118 : vector<8x1xf32> to vector<8x128xf32>
    %120 = arith.mulf %111, %119 : vector<8x128xf32>
    %c0_62 = arith.constant 0 : index
    %c3 = arith.constant 3 : index
    %c0_63 = arith.constant 0 : index
    %c0_64 = arith.constant 0 : index
    %121 = vector.load %arg23[%c0_62, %c3, %c0_63, %c0_64] : memref<1x4x8x128xf32, #tpu.memory_space<vmem>>, vector<1x1x8x128xf32>
    %122 = vector.shape_cast %121 : vector<1x1x8x128xf32> to vector<8x128xf32>
    %123 = vector.shape_cast %120 : vector<8x128xf32> to vector<1x1x8x128xf32>
    tpu.vector_store %arg23[%c0_62, %c3, %c0_63, %c0_64], %123 {strides = array<i32>} : memref<1x4x8x128xf32, #tpu.memory_space<vmem>>, vector<1x1x8x128xf32>,
    %c0_65 = arith.constant 0 : index
    %c24_66 = arith.constant 24 : index
    %124 = vector.load %arg25[%c0_65, %c24_66] : memref<128x32xf32, #tpu.memory_space<vmem>>, vector<128x8xf32>
    %cst_67 = arith.constant dense<0.000000e+00> : vector<8x8xf32>
    %125 = tpu.matmul %120, %124, %cst_67 {dimension_numbers = #tpu.dot_dimension_numbers<[1], [0], [0], [1], [0, 0, 1, 1], [], []>} : vector<8x128xf32>, vector<128x8xf32>, vector<8x8xf32> -> vector<8x8xf32>
    %c0_68 = arith.constant 0 : index
    %c24_69 = arith.constant 24 : index
    %126 = vector.load %arg26[%c0_68, %c24_69] : memref<8x32xf32, #tpu.memory_space<vmem>>, vector<8x8xf32>
    tpu.vector_store %arg26[%c0_68, %c24_69], %125 {strides = array<i32>} : memref<8x32xf32, #tpu.memory_space<vmem>>, vector<8x8xf32>,
    %c0_70 = arith.constant 0 : index
    %c0_71 = arith.constant 0 : index
    %127 = vector.load %arg26[%c0_70, %c0_71] : memref<8x32xf32, #tpu.memory_space<vmem>>, vector<8x32xf32>
    %c0_72 = arith.constant 0 : index
    %c0_73 = arith.constant 0 : index
    %128 = vector.load %arg12[%c0_72, %c0_73] : memref<32x128xf32, #tpu.memory_space<vmem>>, vector<32x128xf32>
    %cst_74 = arith.constant dense<0.000000e+00> : vector<8x128xf32>
    %129 = tpu.matmul %127, %128, %cst_74 {dimension_numbers = #tpu.dot_dimension_numbers<[1], [0], [0], [1], [0, 0, 1, 1], [], []>} : vector<8x32xf32>, vector<32x128xf32>, vector<8x128xf32> -> vector<8x128xf32>
    %c0_75 = arith.constant 0 : index
    %c0_76 = arith.constant 0 : index
    %130 = vector.load %arg13[%c0_75, %c0_76] : memref<1x128xf32, #tpu.memory_space<vmem>>, vector<1x128xf32>
    %131 = vector.broadcast %130 : vector<1x128xf32> to vector<8x128xf32>
    %132 = arith.addf %129, %131 : vector<8x128xf32>
    %133 = tpu.iota {dimensions = array<i32: 1>} : vector<1x128xi32>
    %c32_i32 = arith.constant 32 : i32
    %134 = vector.broadcast %c32_i32 : i32 to vector<1x128xi32>
    %135 = arith.cmpi slt, %133, %134 : vector<1x128xi32>
    %136 = arith.addf %132, %4 : vector<8x128xf32>
    %c0_77 = arith.constant 0 : index
    %c0_78 = arith.constant 0 : index
    %137 = vector.load %arg14[%c0_77, %c0_78] : memref<1x128xf32, #tpu.memory_space<vmem>>, vector<1x128xf32>
    %c0_79 = arith.constant 0 : index
    %c0_80 = arith.constant 0 : index
    %138 = vector.load %arg15[%c0_79, %c0_80] : memref<1x128xf32, #tpu.memory_space<vmem>>, vector<1x128xf32>
    %cst_81 = arith.constant dense<0.000000e+00> : vector<8xf32>
    %139 = vector.multi_reduction <add>, %136, %cst_81 [1] : vector<8x128xf32> to vector<8xf32>
    %140 = vector.shape_cast %139 : vector<8xf32> to vector<8x1xf32>
    %cst_82 = arith.constant 3.125000e-02 : f32
    %141 = vector.broadcast %cst_82 : f32 to vector<8x1xf32>
    %142 = arith.mulf %140, %141 : vector<8x1xf32>
    %143 = vector.broadcast %142 : vector<8x1xf32> to vector<8x128xf32>
    %144 = arith.subf %136, %143 : vector<8x128xf32>
    %cst_83 = arith.constant 0.000000e+00 : f32
    %145 = vector.shape_cast %135 : vector<1x128xi1> to vector<1x128xi1>
    %146 = vector.broadcast %145 : vector<1x128xi1> to vector<8x128xi1>
    %147 = vector.broadcast %cst_83 : f32 to vector<8x128xf32>
    %148 = arith.select %146, %144, %147 : vector<8x128xi1>, vector<8x128xf32>
    %149 = arith.mulf %148, %148 : vector<8x128xf32>
    %cst_84 = arith.constant dense<0.000000e+00> : vector<8xf32>
    %150 = vector.multi_reduction <add>, %149, %cst_84 [1] : vector<8x128xf32> to vector<8xf32>
    %151 = vector.shape_cast %150 : vector<8xf32> to vector<8x1xf32>
    %cst_85 = arith.constant 3.125000e-02 : f32
    %152 = vector.broadcast %cst_85 : f32 to vector<8x1xf32>
    %153 = arith.mulf %151, %152 : vector<8x1xf32>
    %cst_86 = arith.constant 9.99999974E-6 : f32
    %154 = vector.broadcast %cst_86 : f32 to vector<8x1xf32>
    %155 = arith.addf %153, %154 : vector<8x1xf32>
    %156 = math.rsqrt %155 : vector<8x1xf32>
    %157 = vector.broadcast %156 : vector<8x1xf32> to vector<8x128xf32>
    %158 = arith.mulf %148, %157 : vector<8x128xf32>
    %159 = vector.broadcast %137 : vector<1x128xf32> to vector<8x128xf32>
    %160 = arith.mulf %158, %159 : vector<8x128xf32>
    %161 = vector.broadcast %138 : vector<1x128xf32> to vector<8x128xf32>
    %162 = arith.addf %160, %161 : vector<8x128xf32>
    %c0_87 = arith.constant 0 : index
    %c0_88 = arith.constant 0 : index
    %163 = vector.load %arg16[%c0_87, %c0_88] : memref<128x64xf32, #tpu.memory_space<vmem>>, vector<128x64xf32>
    %cst_89 = arith.constant dense<0.000000e+00> : vector<8x64xf32>
    %164 = tpu.matmul %162, %163, %cst_89 {dimension_numbers = #tpu.dot_dimension_numbers<[1], [0], [0], [1], [0, 0, 1, 1], [], []>} : vector<8x128xf32>, vector<128x64xf32>, vector<8x64xf32> -> vector<8x64xf32>
    %c0_90 = arith.constant 0 : index
    %c0_91 = arith.constant 0 : index
    %165 = vector.load %arg17[%c0_90, %c0_91] : memref<1x64xf32, #tpu.memory_space<vmem>>, vector<1x64xf32>
    %166 = vector.broadcast %165 : vector<1x64xf32> to vector<8x64xf32>
    %167 = arith.addf %164, %166 : vector<8x64xf32>
    %cst_92 = arith.constant 0.000000e+00 : f32
    %168 = vector.broadcast %cst_92 : f32 to vector<8x64xf32>
    %169 = arith.maximumf %167, %168 : vector<8x64xf32>
    %c0_93 = arith.constant 0 : index
    %c0_94 = arith.constant 0 : index
    %170 = vector.load %arg18[%c0_93, %c0_94] : memref<64x128xf32, #tpu.memory_space<vmem>>, vector<64x128xf32>
    %cst_95 = arith.constant dense<0.000000e+00> : vector<8x128xf32>
    %171 = tpu.matmul %169, %170, %cst_95 {dimension_numbers = #tpu.dot_dimension_numbers<[1], [0], [0], [1], [0, 0, 1, 1], [], []>} : vector<8x64xf32>, vector<64x128xf32>, vector<8x128xf32> -> vector<8x128xf32>
    %c0_96 = arith.constant 0 : index
    %c0_97 = arith.constant 0 : index
    %172 = vector.load %arg19[%c0_96, %c0_97] : memref<1x128xf32, #tpu.memory_space<vmem>>, vector<1x128xf32>
    %173 = vector.broadcast %172 : vector<1x128xf32> to vector<8x128xf32>
    %174 = arith.addf %171, %173 : vector<8x128xf32>
    %175 = arith.addf %162, %174 : vector<8x128xf32>
    %c0_98 = arith.constant 0 : index
    %c0_99 = arith.constant 0 : index
    %176 = vector.load %arg20[%c0_98, %c0_99] : memref<1x128xf32, #tpu.memory_space<vmem>>, vector<1x128xf32>
    %c0_100 = arith.constant 0 : index
    %c0_101 = arith.constant 0 : index
    %177 = vector.load %arg21[%c0_100, %c0_101] : memref<1x128xf32, #tpu.memory_space<vmem>>, vector<1x128xf32>
    %cst_102 = arith.constant dense<0.000000e+00> : vector<8xf32>
    %178 = vector.multi_reduction <add>, %175, %cst_102 [1] : vector<8x128xf32> to vector<8xf32>
    %179 = vector.shape_cast %178 : vector<8xf32> to vector<8x1xf32>
    %cst_103 = arith.constant 3.125000e-02 : f32
    %180 = vector.broadcast %cst_103 : f32 to vector<8x1xf32>
    %181 = arith.mulf %179, %180 : vector<8x1xf32>
    %182 = vector.broadcast %181 : vector<8x1xf32> to vector<8x128xf32>
    %183 = arith.subf %175, %182 : vector<8x128xf32>
    %cst_104 = arith.constant 0.000000e+00 : f32
    %184 = vector.shape_cast %135 : vector<1x128xi1> to vector<1x128xi1>
    %185 = vector.broadcast %184 : vector<1x128xi1> to vector<8x128xi1>
    %186 = vector.broadcast %cst_104 : f32 to vector<8x128xf32>
    %187 = arith.select %185, %183, %186 : vector<8x128xi1>, vector<8x128xf32>
    %188 = arith.mulf %187, %187 : vector<8x128xf32>
    %cst_105 = arith.constant dense<0.000000e+00> : vector<8xf32>
    %189 = vector.multi_reduction <add>, %188, %cst_105 [1] : vector<8x128xf32> to vector<8xf32>
    %190 = vector.shape_cast %189 : vector<8xf32> to vector<8x1xf32>
    %cst_106 = arith.constant 3.125000e-02 : f32
    %191 = vector.broadcast %cst_106 : f32 to vector<8x1xf32>
    %192 = arith.mulf %190, %191 : vector<8x1xf32>
    %cst_107 = arith.constant 9.99999974E-6 : f32
    %193 = vector.broadcast %cst_107 : f32 to vector<8x1xf32>
    %194 = arith.addf %192, %193 : vector<8x1xf32>
    %195 = math.rsqrt %194 : vector<8x1xf32>
    %196 = vector.broadcast %195 : vector<8x1xf32> to vector<8x128xf32>
    %197 = arith.mulf %187, %196 : vector<8x128xf32>
    %198 = vector.broadcast %176 : vector<1x128xf32> to vector<8x128xf32>
    %199 = arith.mulf %197, %198 : vector<8x128xf32>
    %200 = vector.broadcast %177 : vector<1x128xf32> to vector<8x128xf32>
    %201 = arith.addf %199, %200 : vector<8x128xf32>
    %c0_108 = arith.constant 0 : index
    %c0_109 = arith.constant 0 : index
    %c0_110 = arith.constant 0 : index
    %202 = vector.load %arg22[%c0_108, %c0_109, %c0_110] : memref<1x8x128xf32, #tpu.memory_space<vmem>>, vector<1x8x128xf32>
    %203 = vector.shape_cast %202 : vector<1x8x128xf32> to vector<8x128xf32>
    %204 = vector.shape_cast %201 : vector<8x128xf32> to vector<1x8x128xf32>
    tpu.vector_store %arg22[%c0_108, %c0_109, %c0_110], %204 {strides = array<i32>} : memref<1x8x128xf32, #tpu.memory_space<vmem>>, vector<1x8x128xf32>,
    return
  }
  func.func @transform_0(%arg0: i32, %arg1: i32) -> (i32, i32, i32) {
    %c0_i32 = arith.constant 0 : i32
    %c0_i32_0 = arith.constant 0 : i32
    return %arg0, %arg1, %c0_i32 : i32, i32, i32
  }
  func.func @transform_1(%arg0: i32, %arg1: i32) -> (i32, i32, i32) {
    %c0_i32 = arith.constant 0 : i32
    %c0_i32_0 = arith.constant 0 : i32
    return %arg0, %arg1, %c0_i32 : i32, i32, i32
  }
  func.func @transform_2(%arg0: i32, %arg1: i32) -> (i32, i32, i32) {
    %c0_i32 = arith.constant 0 : i32
    %c0_i32_0 = arith.constant 0 : i32
    %c0_i32_1 = arith.constant 0 : i32
    return %arg0, %c0_i32, %c0_i32_0 : i32, i32, i32
  }
  func.func @transform_3(%arg0: i32, %arg1: i32) -> (i32, i32, i32) {
    %c0_i32 = arith.constant 0 : i32
    %c0_i32_0 = arith.constant 0 : i32
    %c0_i32_1 = arith.constant 0 : i32
    return %arg0, %c0_i32, %c0_i32_0 : i32, i32, i32
  }
  func.func @transform_4(%arg0: i32, %arg1: i32) -> (i32, i32) {
    %c0_i32 = arith.constant 0 : i32
    %c0_i32_0 = arith.constant 0 : i32
    %c0_i32_1 = arith.constant 0 : i32
    return %c0_i32, %c0_i32_0 : i32, i32
  }
  func.func @transform_5(%arg0: i32, %arg1: i32) -> (i32, i32) {
    %c0_i32 = arith.constant 0 : i32
    %c0_i32_0 = arith.constant 0 : i32
    %c0_i32_1 = arith.constant 0 : i32
    return %c0_i32, %c0_i32_0 : i32, i32
  }
  func.func @transform_6(%arg0: i32, %arg1: i32) -> (i32, i32) {
    %c0_i32 = arith.constant 0 : i32
    %c0_i32_0 = arith.constant 0 : i32
    %c0_i32_1 = arith.constant 0 : i32
    return %c0_i32, %c0_i32_0 : i32, i32
  }
  func.func @transform_7(%arg0: i32, %arg1: i32) -> (i32, i32) {
    %c0_i32 = arith.constant 0 : i32
    %c0_i32_0 = arith.constant 0 : i32
    %c0_i32_1 = arith.constant 0 : i32
    return %c0_i32, %c0_i32_0 : i32, i32
  }
  func.func @transform_8(%arg0: i32, %arg1: i32) -> (i32, i32) {
    %c0_i32 = arith.constant 0 : i32
    %c0_i32_0 = arith.constant 0 : i32
    %c0_i32_1 = arith.constant 0 : i32
    return %c0_i32, %c0_i32_0 : i32, i32
  }
  func.func @transform_9(%arg0: i32, %arg1: i32) -> (i32, i32) {
    %c0_i32 = arith.constant 0 : i32
    %c0_i32_0 = arith.constant 0 : i32
    %c0_i32_1 = arith.constant 0 : i32
    return %c0_i32, %c0_i32_0 : i32, i32
  }
  func.func @transform_10(%arg0: i32, %arg1: i32) -> (i32, i32) {
    %c0_i32 = arith.constant 0 : i32
    %c0_i32_0 = arith.constant 0 : i32
    %c0_i32_1 = arith.constant 0 : i32
    return %c0_i32, %c0_i32_0 : i32, i32
  }
  func.func @transform_11(%arg0: i32, %arg1: i32) -> (i32, i32) {
    %c0_i32 = arith.constant 0 : i32
    %c0_i32_0 = arith.constant 0 : i32
    %c0_i32_1 = arith.constant 0 : i32
    return %c0_i32, %c0_i32_0 : i32, i32
  }
  func.func @transform_12(%arg0: i32, %arg1: i32) -> (i32, i32) {
    %c0_i32 = arith.constant 0 : i32
    %c0_i32_0 = arith.constant 0 : i32
    %c0_i32_1 = arith.constant 0 : i32
    return %c0_i32, %c0_i32_0 : i32, i32
  }
  func.func @transform_13(%arg0: i32, %arg1: i32) -> (i32, i32) {
    %c0_i32 = arith.constant 0 : i32
    %c0_i32_0 = arith.constant 0 : i32
    %c0_i32_1 = arith.constant 0 : i32
    return %c0_i32, %c0_i32_0 : i32, i32
  }
  func.func @transform_14(%arg0: i32, %arg1: i32) -> (i32, i32) {
    %c0_i32 = arith.constant 0 : i32
    %c0_i32_0 = arith.constant 0 : i32
    %c0_i32_1 = arith.constant 0 : i32
    return %c0_i32, %c0_i32_0 : i32, i32
  }
  func.func @transform_15(%arg0: i32, %arg1: i32) -> (i32, i32) {
    %c0_i32 = arith.constant 0 : i32
    %c0_i32_0 = arith.constant 0 : i32
    %c0_i32_1 = arith.constant 0 : i32
    return %c0_i32, %c0_i32_0 : i32, i32
  }
  func.func @transform_16(%arg0: i32, %arg1: i32) -> (i32, i32) {
    %c0_i32 = arith.constant 0 : i32
    %c0_i32_0 = arith.constant 0 : i32
    %c0_i32_1 = arith.constant 0 : i32
    return %c0_i32, %c0_i32_0 : i32, i32
  }
  func.func @transform_17(%arg0: i32, %arg1: i32) -> (i32, i32) {
    %c0_i32 = arith.constant 0 : i32
    %c0_i32_0 = arith.constant 0 : i32
    %c0_i32_1 = arith.constant 0 : i32
    return %c0_i32, %c0_i32_0 : i32, i32
  }
  func.func @transform_18(%arg0: i32, %arg1: i32) -> (i32, i32) {
    %c0_i32 = arith.constant 0 : i32
    %c0_i32_0 = arith.constant 0 : i32
    %c0_i32_1 = arith.constant 0 : i32
    return %c0_i32, %c0_i32_0 : i32, i32
  }
  func.func @transform_19(%arg0: i32, %arg1: i32) -> (i32, i32) {
    %c0_i32 = arith.constant 0 : i32
    %c0_i32_0 = arith.constant 0 : i32
    %c0_i32_1 = arith.constant 0 : i32
    return %c0_i32, %c0_i32_0 : i32, i32
  }
  func.func @transform_20(%arg0: i32, %arg1: i32) -> (i32, i32, i32) {
    %c0_i32 = arith.constant 0 : i32
    %c0_i32_0 = arith.constant 0 : i32
    return %arg0, %arg1, %c0_i32 : i32, i32, i32
  }
  func.func @transform_21(%arg0: i32, %arg1: i32) -> (i32, i32, i32, i32) {
    %c0_i32 = arith.constant 0 : i32
    %c0_i32_0 = arith.constant 0 : i32
    %c0_i32_1 = arith.constant 0 : i32
    return %arg0, %c0_i32, %arg1, %c0_i32_0 : i32, i32, i32, i32
  }
}

</mosaic_0001>

<llo_original>
// kernel: tpu_custom_call.1
$region0: #{tpu_custom_call.1}
  #allocation0 [shape = 'u32[]', space=smem, size = 0x4, offset = 0x4, fixed_abs, tag = 'smem constant byte address 0x4 - core index']
  #allocation1 [shape = 'u32[144,128]{1,0:T(1,128)}', space=vmem, size = 0x12000, scoped, tag = 'internal scratch']
  #allocation2 [shape = 'f32[32,128]{1,0:T(8,128)}', space=vmem, size = 0x4000, scoped, tag = 'scratch operand']
  #allocation3 [shape = 'f32[128,32]{1,0:T(8,128)}', space=vmem, size = 0x10000, scoped, tag = 'scratch operand']
  #allocation4 [shape = 'f32[8,32]{1,0:T(8,128)}', space=vmem, size = 0x1000, scoped, tag = 'scratch operand']
  %s0 = inlined_call_operand.hbm [shape: f32[2,8,128], index: 0, kind: input, shape index: {}]
  %s1 = inlined_call_operand.hbm [shape: f32[2,8,128], index: 1, kind: input, shape index: {}]
  %s2 = inlined_call_operand.vmem [shape: f32[2,128,128], index: 2, kind: input, shape index: {}]
  %s3 = inlined_call_operand.vmem [shape: f32[2,128,128], index: 3, kind: input, shape index: {}]
  %s4 = inlined_call_operand.vmem [shape: f32[128,32], index: 4, kind: input, shape index: {}]
  %s5 = inlined_call_operand.vmem [shape: f32[1,32], index: 5, kind: input, shape index: {}]
  %s6 = inlined_call_operand.vmem [shape: f32[128,32], index: 6, kind: input, shape index: {}]
  %s7 = inlined_call_operand.vmem [shape: f32[1,32], index: 7, kind: input, shape index: {}]
  %s8 = inlined_call_operand.vmem [shape: f32[128,32], index: 8, kind: input, shape index: {}]
  %s9 = inlined_call_operand.vmem [shape: f32[1,32], index: 9, kind: input, shape index: {}]
  %s10 = inlined_call_operand.vmem [shape: f32[32,128], index: 10, kind: input, shape index: {}]
  %s11 = inlined_call_operand.vmem [shape: f32[1,128], index: 11, kind: input, shape index: {}]
  %s12 = inlined_call_operand.vmem [shape: f32[1,128], index: 12, kind: input, shape index: {}]
  %s13 = inlined_call_operand.vmem [shape: f32[1,128], index: 13, kind: input, shape index: {}]
  %s14 = inlined_call_operand.vmem [shape: f32[128,64], index: 14, kind: input, shape index: {}]
  %s15 = inlined_call_operand.vmem [shape: f32[1,64], index: 15, kind: input, shape index: {}]
  %s16 = inlined_call_operand.vmem [shape: f32[64,128], index: 16, kind: input, shape index: {}]
  %s17 = inlined_call_operand.vmem [shape: f32[1,128], index: 17, kind: input, shape index: {}]
  %s18 = inlined_call_operand.vmem [shape: f32[1,128], index: 18, kind: input, shape index: {}]
  %s19 = inlined_call_operand.vmem [shape: f32[1,128], index: 19, kind: input, shape index: {}]
  %s20 = inlined_call_operand.hbm [shape: f32[2,8,128], index: 20, kind: output, shape index: {0}]
  %s21 = inlined_call_operand.hbm [shape: f32[2,4,8,128], index: 21, kind: output, shape index: {1}]
  %22 = xla_tuple %s20, %s21
  %s23 = sld [smem:[#allocation0]]
  $region133: #{tpu_custom_call.1} parent=0
    _
  %s25 = ssub.s32 1, %s23
  %s26 = scalar_select 0, %s25, %s23
  $region1: #{tpu_custom_call.1} parent=0
    #allocation5 [shape = 'u8[8192]{0}', space=vmem, size = 0x2000, scoped, tag = 'input window, operand 0']
    #allocation6 [shape = 's32[2]{0}', space=sflag, size = 0x8, scoped, tag = 'scoped memory for tpu_custom_call.1']
    #allocation7 [shape = 's32[2]{0}', space=sflag, size = 0x8, scoped, tag = 'scoped memory for tpu_custom_call.1']
    #allocation8 [shape = 'u8[8192]{0}', space=vmem, size = 0x2000, scoped, tag = 'input window, operand 1']
    #allocation9 [shape = 's32[2]{0}', space=sflag, size = 0x8, scoped, tag = 'scoped memory for tpu_custom_call.1']
    #allocation10 [shape = 'u8[8192]{0}', space=vmem, size = 0x2000, scoped, tag = 'output window, operand 0']
    #allocation11 [shape = 'u8[32768]{0}', space=vmem, size = 0x8000, scoped, tag = 'output window, operand 1']
    #allocation12 [shape = 's32[2]{0}', space=sflag, size = 0x8, scoped, tag = 'scoped memory for tpu_custom_call.1']
    %27 = vsyncpa [#allocation6], 0
    %s28 = scalar_lea.sflag [#allocation6], 1
    %29 = vsyncpa %s28, 0
    %30 = vsyncpa [#allocation9], 0
    %s31 = scalar_lea.sflag [#allocation9], 1
    %32 = vsyncpa %s31, 0
    %33 = vsyncpa [#allocation7], 0
    %s34 = scalar_lea.sflag [#allocation7], 1
    %35 = vsyncpa %s34, 0
    %36 = vsyncpa [#allocation12], 0
    %s37 = scalar_lea.sflag [#allocation12], 1
    %38 = vsyncpa %s37, 0
    loop: start=0, step=1, limit=4
    $region2: #{tpu_custom_call.1} parent=1 // loop_pre_header
      _
    $region3: #{tpu_custom_call.1} parent=1 // loop_header
      %s40 = sphi 0, %s44
      %p41 = scmp.ge.s32.totalorder %s40, 4
      %s47 = sphi 0, %s59
      %s48 = sphi 0, %s55
      %s49 = sphi 0, %s47
      %s50 = sphi 0, %s48
      %s51 = sphi 0, %s49
      %s52 = sphi 0, %s50
      %s64 = sphi 0, %s66
      %s67 = sphi 0, %s64
      %s68 = sphi 0, %s67
      %s84 = sphi 0, %s68
      %s92 = sphi 0, %s94
      %s95 = sphi 0, %s92
      %s96 = sphi 0, %s95
      %s112 = sphi 0, %s96
      %s118 = sphi 0, %s120
      %s121 = sphi 0, %s118
      %s122 = sphi 0, %s121
      %s138 = sphi 0, %s122
      %s144 = sphi 0, %s146
      %s147 = sphi 0, %s144
      %s148 = sphi 0, %s147
      %s164 = sphi 0, %s148
      %s168 = sphi 0, %s168
      %s170 = sphi 0, %s168
      %s171 = sphi 0, %s170
      %s185 = sphi 0, %s171
      %s189 = sphi 0, %s189
      %s191 = sphi 0, %s189
      %s192 = sphi 0, %s191
      %s206 = sphi 0, %s192
      %s210 = sphi 0, %s210
      %s212 = sphi 0, %s210
      %s213 = sphi 0, %s212
      %s227 = sphi 0, %s213
      %s231 = sphi 0, %s231
      %s233 = sphi 0, %s231
      %s234 = sphi 0, %s233
      %s248 = sphi 0, %s234
      %s252 = sphi 0, %s252
      %s254 = sphi 0, %s252
      %s255 = sphi 0, %s254
      %s269 = sphi 0, %s255
      %s273 = sphi 0, %s273
      %s275 = sphi 0, %s273
      %s276 = sphi 0, %s275
      %s290 = sphi 0, %s276
      %s294 = sphi 0, %s294
      %s296 = sphi 0, %s294
      %s297 = sphi 0, %s296
      %s311 = sphi 0, %s297
      %s315 = sphi 0, %s315
      %s317 = sphi 0, %s315
      %s318 = sphi 0, %s317
      %s332 = sphi 0, %s318
      %s336 = sphi 0, %s336
      %s338 = sphi 0, %s336
      %s339 = sphi 0, %s338
      %s353 = sphi 0, %s339
      %s357 = sphi 0, %s357
      %s359 = sphi 0, %s357
      %s360 = sphi 0, %s359
      %s374 = sphi 0, %s360
      %s378 = sphi 0, %s378
      %s380 = sphi 0, %s378
      %s381 = sphi 0, %s380
      %s395 = sphi 0, %s381
      %s399 = sphi 0, %s399
      %s401 = sphi 0, %s399
      %s402 = sphi 0, %s401
      %s416 = sphi 0, %s402
      %s420 = sphi 0, %s420
      %s422 = sphi 0, %s420
      %s423 = sphi 0, %s422
      %s437 = sphi 0, %s423
      %s441 = sphi 0, %s441
      %s443 = sphi 0, %s441
      %s444 = sphi 0, %s443
      %s458 = sphi 0, %s444
      %s462 = sphi 0, %s462
      %s464 = sphi 0, %s462
      %s465 = sphi 0, %s464
      %s479 = sphi 0, %s465
      %s483 = sphi 0, %s483
      %s485 = sphi 0, %s483
      %s486 = sphi 0, %s485
      %s500 = sphi 0, %s486
      %s508 = sphi 0, %s510
      %s511 = sphi 0, %s508
      %s512 = sphi 0, %s511
      %s528 = sphi 0, %s512
      %s536 = sphi 0, %s538
      %s539 = sphi 0, %s536
      %s540 = sphi 0, %s539
      %s556 = sphi 0, %s540
    $region4: #{tpu_custom_call.1} parent=1 // loop_header_branch
      %43 = sbr.rel (%p41) target = $region8
    $region5: #{tpu_custom_call.1} parent=1 // loop_body
      %s45 = ssub.s32 %s40, 1
      %s46 = ssub.s32 %s40, 2
      %s53 = sadd.s32 1, %s48
      %p54 = scmp.ge.s32.totalorder %s53, 1
      %s55 = scalar_select %p54, 0, %s53
      %s56 = sadd.s32 1, %s47
      %s57 = scalar_select %p54, %s56, %s47
      %p58 = scmp.ge.s32.totalorder %s57, 2
      %s59 = scalar_select %p58, 0, %s57
      %s60 = ssub.s32 %s47, %s59
      %s61 = ssub.s32 %s48, %s55
      %s62 = sor.u32 %s60, %s61
      %p63 = scmp.eq.s32.totalorder %s62, 0
      %s65 = sadd.s32 %s64, 1
      %s66 = scalar_select %p63, %s64, %s65
      %p69 = pneg %p63
      %p70 = scmp.eq.s32.totalorder %s40, 1
      %p71 = por %p69, %p70
      %p72 = scmp.ne.s32.totalorder %s64, %s67
      %p73 = scmp.eq.s32.totalorder %s40, 0
      %p74 = por %p72, %p73
      %p75 = scmp.ne.s32.totalorder %s64, %s67
      %p76 = scmp.eq.s32.totalorder %s45, 1
      %p77 = por %p75, %p76
      %p78 = scmp.ne.s32.totalorder %s67, %s68
      %p79 = scmp.eq.s32.totalorder %s45, 0
      %p80 = por %p78, %p79
      %p81 = scmp.ne.s32.totalorder %s67, %s68
      %p82 = scmp.eq.s32.totalorder %s46, 1
      %p83 = por %p81, %p82
      %p85 = scmp.ne.s32.totalorder %s68, %s84
      %p86 = scmp.eq.s32.totalorder %s46, 0
      %p87 = por %p85, %p86
      %s88 = ssub.s32 %s47, %s59
      %s89 = ssub.s32 %s48, %s55
      %s90 = sor.u32 %s88, %s89
      %p91 = scmp.eq.s32.totalorder %s90, 0
      %s93 = sadd.s32 %s92, 1
      %s94 = scalar_select %p91, %s92, %s93
      %p97 = pneg %p91
      %p98 = scmp.eq.s32.totalorder %s40, 1
      %p99 = por %p97, %p98
      %p100 = scmp.ne.s32.totalorder %s92, %s95
      %p101 = scmp.eq.s32.totalorder %s40, 0
      %p102 = por %p100, %p101
      %p103 = scmp.ne.s32.totalorder %s92, %s95
      %p104 = scmp.eq.s32.totalorder %s45, 1
      %p105 = por %p103, %p104
      %p106 = scmp.ne.s32.totalorder %s95, %s96
      %p107 = scmp.eq.s32.totalorder %s45, 0
      %p108 = por %p106, %p107
      %p109 = scmp.ne.s32.totalorder %s95, %s96
      %p110 = scmp.eq.s32.totalorder %s46, 1
      %p111 = por %p109, %p110
      %p113 = scmp.ne.s32.totalorder %s96, %s112
      %p114 = scmp.eq.s32.totalorder %s46, 0
      %p115 = por %p113, %p114
      %s116 = ssub.s32 %s47, %s59
      %p117 = scmp.eq.s32.totalorder %s116, 0
      %s119 = sadd.s32 %s118, 1
      %s120 = scalar_select %p117, %s118, %s119
      %p123 = pneg %p117
      %p124 = scmp.eq.s32.totalorder %s40, 1
      %p125 = por %p123, %p124
      %p126 = scmp.ne.s32.totalorder %s118, %s121
      %p127 = scmp.eq.s32.totalorder %s40, 0
      %p128 = por %p126, %p127
      %p129 = scmp.ne.s32.totalorder %s118, %s121
      %p130 = scmp.eq.s32.totalorder %s45, 1
      %p131 = por %p129, %p130
      %p132 = scmp.ne.s32.totalorder %s121, %s122
      %p133 = scmp.eq.s32.totalorder %s45, 0
      %p134 = por %p132, %p133
      %p135 = scmp.ne.s32.totalorder %s121, %s122
      %p136 = scmp.eq.s32.totalorder %s46, 1
      %p137 = por %p135, %p136
      %p139 = scmp.ne.s32.totalorder %s122, %s138
      %p140 = scmp.eq.s32.totalorder %s46, 0
      %p141 = por %p139, %p140
      %s142 = ssub.s32 %s47, %s59
      %p143 = scmp.eq.s32.totalorder %s142, 0
      %s145 = sadd.s32 %s144, 1
      %s146 = scalar_select %p143, %s144, %s145
      %p149 = pneg %p143
      %p150 = scmp.eq.s32.totalorder %s40, 1
      %p151 = por %p149, %p150
      %p152 = scmp.ne.s32.totalorder %s144, %s147
      %p153 = scmp.eq.s32.totalorder %s40, 0
      %p154 = por %p152, %p153
      %p155 = scmp.ne.s32.totalorder %s144, %s147
      %p156 = scmp.eq.s32.totalorder %s45, 1
      %p157 = por %p155, %p156
      %p158 = scmp.ne.s32.totalorder %s147, %s148
      %p159 = scmp.eq.s32.totalorder %s45, 0
      %p160 = por %p158, %p159
      %p161 = scmp.ne.s32.totalorder %s147, %s148
      %p162 = scmp.eq.s32.totalorder %s46, 1
      %p163 = por %p161, %p162
      %p165 = scmp.ne.s32.totalorder %s148, %s164
      %p166 = scmp.eq.s32.totalorder %s46, 0
      %p167 = por %p165, %p166
      %s169 = sadd.s32 %s168, 1
      %p172 = scmp.eq.s32.totalorder %s40, 1
      %p173 = scmp.ne.s32.totalorder %s168, %s170
      %p174 = scmp.eq.s32.totalorder %s40, 0
      %p175 = por %p173, %p174
      %p176 = scmp.ne.s32.totalorder %s168, %s170
      %p177 = scmp.eq.s32.totalorder %s45, 1
      %p178 = por %p176, %p177
      %p179 = scmp.ne.s32.totalorder %s170, %s171
      %p180 = scmp.eq.s32.totalorder %s45, 0
      %p181 = por %p179, %p180
      %p182 = scmp.ne.s32.totalorder %s170, %s171
      %p183 = scmp.eq.s32.totalorder %s46, 1
      %p184 = por %p182, %p183
      %p186 = scmp.ne.s32.totalorder %s171, %s185
      %p187 = scmp.eq.s32.totalorder %s46, 0
      %p188 = por %p186, %p187
      %s190 = sadd.s32 %s189, 1
      %p193 = scmp.eq.s32.totalorder %s40, 1
      %p194 = scmp.ne.s32.totalorder %s189, %s191
      %p195 = scmp.eq.s32.totalorder %s40, 0
      %p196 = por %p194, %p195
      %p197 = scmp.ne.s32.totalorder %s189, %s191
      %p198 = scmp.eq.s32.totalorder %s45, 1
      %p199 = por %p197, %p198
      %p200 = scmp.ne.s32.totalorder %s191, %s192
      %p201 = scmp.eq.s32.totalorder %s45, 0
      %p202 = por %p200, %p201
      %p203 = scmp.ne.s32.totalorder %s191, %s192
      %p204 = scmp.eq.s32.totalorder %s46, 1
      %p205 = por %p203, %p204
      %p207 = scmp.ne.s32.totalorder %s192, %s206
      %p208 = scmp.eq.s32.totalorder %s46, 0
      %p209 = por %p207, %p208
      %s211 = sadd.s32 %s210, 1
      %p214 = scmp.eq.s32.totalorder %s40, 1
      %p215 = scmp.ne.s32.totalorder %s210, %s212
      %p216 = scmp.eq.s32.totalorder %s40, 0
      %p217 = por %p215, %p216
      %p218 = scmp.ne.s32.totalorder %s210, %s212
      %p219 = scmp.eq.s32.totalorder %s45, 1
      %p220 = por %p218, %p219
      %p221 = scmp.ne.s32.totalorder %s212, %s213
      %p222 = scmp.eq.s32.totalorder %s45, 0
      %p223 = por %p221, %p222
      %p224 = scmp.ne.s32.totalorder %s212, %s213
      %p225 = scmp.eq.s32.totalorder %s46, 1
      %p226 = por %p224, %p225
      %p228 = scmp.ne.s32.totalorder %s213, %s227
      %p229 = scmp.eq.s32.totalorder %s46, 0
      %p230 = por %p228, %p229
      %s232 = sadd.s32 %s231, 1
      %p235 = scmp.eq.s32.totalorder %s40, 1
      %p236 = scmp.ne.s32.totalorder %s231, %s233
      %p237 = scmp.eq.s32.totalorder %s40, 0
      %p238 = por %p236, %p237
      %p239 = scmp.ne.s32.totalorder %s231, %s233
      %p240 = scmp.eq.s32.totalorder %s45, 1
      %p241 = por %p239, %p240
      %p242 = scmp.ne.s32.totalorder %s233, %s234
      %p243 = scmp.eq.s32.totalorder %s45, 0
      %p244 = por %p242, %p243
      %p245 = scmp.ne.s32.totalorder %s233, %s234
      %p246 = scmp.eq.s32.totalorder %s46, 1
      %p247 = por %p245, %p246
      %p249 = scmp.ne.s32.totalorder %s234, %s248
      %p250 = scmp.eq.s32.totalorder %s46, 0
      %p251 = por %p249, %p250
      %s253 = sadd.s32 %s252, 1
      %p256 = scmp.eq.s32.totalorder %s40, 1
      %p257 = scmp.ne.s32.totalorder %s252, %s254
      %p258 = scmp.eq.s32.totalorder %s40, 0
      %p259 = por %p257, %p258
      %p260 = scmp.ne.s32.totalorder %s252, %s254
      %p261 = scmp.eq.s32.totalorder %s45, 1
      %p262 = por %p260, %p261
      %p263 = scmp.ne.s32.totalorder %s254, %s255
      %p264 = scmp.eq.s32.totalorder %s45, 0
      %p265 = por %p263, %p264
      %p266 = scmp.ne.s32.totalorder %s254, %s255
      %p267 = scmp.eq.s32.totalorder %s46, 1
      %p268 = por %p266, %p267
      %p270 = scmp.ne.s32.totalorder %s255, %s269
      %p271 = scmp.eq.s32.totalorder %s46, 0
      %p272 = por %p270, %p271
      %s274 = sadd.s32 %s273, 1
      %p277 = scmp.eq.s32.totalorder %s40, 1
      %p278 = scmp.ne.s32.totalorder %s273, %s275
      %p279 = scmp.eq.s32.totalorder %s40, 0
      %p280 = por %p278, %p279
      %p281 = scmp.ne.s32.totalorder %s273, %s275
      %p282 = scmp.eq.s32.totalorder %s45, 1
      %p283 = por %p281, %p282
      %p284 = scmp.ne.s32.totalorder %s275, %s276
      %p285 = scmp.eq.s32.totalorder %s45, 0
      %p286 = por %p284, %p285
      %p287 = scmp.ne.s32.totalorder %s275, %s276
      %p288 = scmp.eq.s32.totalorder %s46, 1
      %p289 = por %p287, %p288
      %p291 = scmp.ne.s32.totalorder %s276, %s290
      %p292 = scmp.eq.s32.totalorder %s46, 0
      %p293 = por %p291, %p292
      %s295 = sadd.s32 %s294, 1
      %p298 = scmp.eq.s32.totalorder %s40, 1
      %p299 = scmp.ne.s32.totalorder %s294, %s296
      %p300 = scmp.eq.s32.totalorder %s40, 0
      %p301 = por %p299, %p300
      %p302 = scmp.ne.s32.totalorder %s294, %s296
      %p303 = scmp.eq.s32.totalorder %s45, 1
      %p304 = por %p302, %p303
      %p305 = scmp.ne.s32.totalorder %s296, %s297
      %p306 = scmp.eq.s32.totalorder %s45, 0
      %p307 = por %p305, %p306
      %p308 = scmp.ne.s32.totalorder %s296, %s297
      %p309 = scmp.eq.s32.totalorder %s46, 1
      %p310 = por %p308, %p309
      %p312 = scmp.ne.s32.totalorder %s297, %s311
      %p313 = scmp.eq.s32.totalorder %s46, 0
      %p314 = por %p312, %p313
      %s316 = sadd.s32 %s315, 1
      %p319 = scmp.eq.s32.totalorder %s40, 1
      %p320 = scmp.ne.s32.totalorder %s315, %s317
      %p321 = scmp.eq.s32.totalorder %s40, 0
      %p322 = por %p320, %p321
      %p323 = scmp.ne.s32.totalorder %s315, %s317
      %p324 = scmp.eq.s32.totalorder %s45, 1
      %p325 = por %p323, %p324
      %p326 = scmp.ne.s32.totalorder %s317, %s318
      %p327 = scmp.eq.s32.totalorder %s45, 0
      %p328 = por %p326, %p327
      %p329 = scmp.ne.s32.totalorder %s317, %s318
      %p330 = scmp.eq.s32.totalorder %s46, 1
      %p331 = por %p329, %p330
      %p333 = scmp.ne.s32.totalorder %s318, %s332
      %p334 = scmp.eq.s32.totalorder %s46, 0
      %p335 = por %p333, %p334
      %s337 = sadd.s32 %s336, 1
      %p340 = scmp.eq.s32.totalorder %s40, 1
      %p341 = scmp.ne.s32.totalorder %s336, %s338
      %p342 = scmp.eq.s32.totalorder %s40, 0
      %p343 = por %p341, %p342
      %p344 = scmp.ne.s32.totalorder %s336, %s338
      %p345 = scmp.eq.s32.totalorder %s45, 1
      %p346 = por %p344, %p345
      %p347 = scmp.ne.s32.totalorder %s338, %s339
      %p348 = scmp.eq.s32.totalorder %s45, 0
      %p349 = por %p347, %p348
      %p350 = scmp.ne.s32.totalorder %s338, %s339
      %p351 = scmp.eq.s32.totalorder %s46, 1
      %p352 = por %p350, %p351
      %p354 = scmp.ne.s32.totalorder %s339, %s353
      %p355 = scmp.eq.s32.totalorder %s46, 0
      %p356 = por %p354, %p355
      %s358 = sadd.s32 %s357, 1
      %p361 = scmp.eq.s32.totalorder %s40, 1
      %p362 = scmp.ne.s32.totalorder %s357, %s359
      %p363 = scmp.eq.s32.totalorder %s40, 0
      %p364 = por %p362, %p363
      %p365 = scmp.ne.s32.totalorder %s357, %s359
      %p366 = scmp.eq.s32.totalorder %s45, 1
      %p367 = por %p365, %p366
      %p368 = scmp.ne.s32.totalorder %s359, %s360
      %p369 = scmp.eq.s32.totalorder %s45, 0
      %p370 = por %p368, %p369
      %p371 = scmp.ne.s32.totalorder %s359, %s360
      %p372 = scmp.eq.s32.totalorder %s46, 1
      %p373 = por %p371, %p372
      %p375 = scmp.ne.s32.totalorder %s360, %s374
      %p376 = scmp.eq.s32.totalorder %s46, 0
      %p377 = por %p375, %p376
      %s379 = sadd.s32 %s378, 1
      %p382 = scmp.eq.s32.totalorder %s40, 1
      %p383 = scmp.ne.s32.totalorder %s378, %s380
      %p384 = scmp.eq.s32.totalorder %s40, 0
      %p385 = por %p383, %p384
      %p386 = scmp.ne.s32.totalorder %s378, %s380
      %p387 = scmp.eq.s32.totalorder %s45, 1
      %p388 = por %p386, %p387
      %p389 = scmp.ne.s32.totalorder %s380, %s381
      %p390 = scmp.eq.s32.totalorder %s45, 0
      %p391 = por %p389, %p390
      %p392 = scmp.ne.s32.totalorder %s380, %s381
      %p393 = scmp.eq.s32.totalorder %s46, 1
      %p394 = por %p392, %p393
      %p396 = scmp.ne.s32.totalorder %s381, %s395
      %p397 = scmp.eq.s32.totalorder %s46, 0
      %p398 = por %p396, %p397
      %s400 = sadd.s32 %s399, 1
      %p403 = scmp.eq.s32.totalorder %s40, 1
      %p404 = scmp.ne.s32.totalorder %s399, %s401
      %p405 = scmp.eq.s32.totalorder %s40, 0
      %p406 = por %p404, %p405
      %p407 = scmp.ne.s32.totalorder %s399, %s401
      %p408 = scmp.eq.s32.totalorder %s45, 1
      %p409 = por %p407, %p408
      %p410 = scmp.ne.s32.totalorder %s401, %s402
      %p411 = scmp.eq.s32.totalorder %s45, 0
      %p412 = por %p410, %p411
      %p413 = scmp.ne.s32.totalorder %s401, %s402
      %p414 = scmp.eq.s32.totalorder %s46, 1
      %p415 = por %p413, %p414
      %p417 = scmp.ne.s32.totalorder %s402, %s416
      %p418 = scmp.eq.s32.totalorder %s46, 0
      %p419 = por %p417, %p418
      %s421 = sadd.s32 %s420, 1
      %p424 = scmp.eq.s32.totalorder %s40, 1
      %p425 = scmp.ne.s32.totalorder %s420, %s422
      %p426 = scmp.eq.s32.totalorder %s40, 0
      %p427 = por %p425, %p426
      %p428 = scmp.ne.s32.totalorder %s420, %s422
      %p429 = scmp.eq.s32.totalorder %s45, 1
      %p430 = por %p428, %p429
      %p431 = scmp.ne.s32.totalorder %s422, %s423
      %p432 = scmp.eq.s32.totalorder %s45, 0
      %p433 = por %p431, %p432
      %p434 = scmp.ne.s32.totalorder %s422, %s423
      %p435 = scmp.eq.s32.totalorder %s46, 1
      %p436 = por %p434, %p435
      %p438 = scmp.ne.s32.totalorder %s423, %s437
      %p439 = scmp.eq.s32.totalorder %s46, 0
      %p440 = por %p438, %p439
      %s442 = sadd.s32 %s441, 1
      %p445 = scmp.eq.s32.totalorder %s40, 1
      %p446 = scmp.ne.s32.totalorder %s441, %s443
      %p447 = scmp.eq.s32.totalorder %s40, 0
      %p448 = por %p446, %p447
      %p449 = scmp.ne.s32.totalorder %s441, %s443
      %p450 = scmp.eq.s32.totalorder %s45, 1
      %p451 = por %p449, %p450
      %p452 = scmp.ne.s32.totalorder %s443, %s444
      %p453 = scmp.eq.s32.totalorder %s45, 0
      %p454 = por %p452, %p453
      %p455 = scmp.ne.s32.totalorder %s443, %s444
      %p456 = scmp.eq.s32.totalorder %s46, 1
      %p457 = por %p455, %p456
      %p459 = scmp.ne.s32.totalorder %s444, %s458
      %p460 = scmp.eq.s32.totalorder %s46, 0
      %p461 = por %p459, %p460
      %s463 = sadd.s32 %s462, 1
      %p466 = scmp.eq.s32.totalorder %s40, 1
      %p467 = scmp.ne.s32.totalorder %s462, %s464
      %p468 = scmp.eq.s32.totalorder %s40, 0
      %p469 = por %p467, %p468
      %p470 = scmp.ne.s32.totalorder %s462, %s464
      %p471 = scmp.eq.s32.totalorder %s45, 1
      %p472 = por %p470, %p471
      %p473 = scmp.ne.s32.totalorder %s464, %s465
      %p474 = scmp.eq.s32.totalorder %s45, 0
      %p475 = por %p473, %p474
      %p476 = scmp.ne.s32.totalorder %s464, %s465
      %p477 = scmp.eq.s32.totalorder %s46, 1
      %p478 = por %p476, %p477
      %p480 = scmp.ne.s32.totalorder %s465, %s479
      %p481 = scmp.eq.s32.totalorder %s46, 0
      %p482 = por %p480, %p481
      %s484 = sadd.s32 %s483, 1
      %p487 = scmp.eq.s32.totalorder %s40, 1
      %p488 = scmp.ne.s32.totalorder %s483, %s485
      %p489 = scmp.eq.s32.totalorder %s40, 0
      %p490 = por %p488, %p489
      %p491 = scmp.ne.s32.totalorder %s483, %s485
      %p492 = scmp.eq.s32.totalorder %s45, 1
      %p493 = por %p491, %p492
      %p494 = scmp.ne.s32.totalorder %s485, %s486
      %p495 = scmp.eq.s32.totalorder %s45, 0
      %p496 = por %p494, %p495
      %p497 = scmp.ne.s32.totalorder %s485, %s486
      %p498 = scmp.eq.s32.totalorder %s46, 1
      %p499 = por %p497, %p498
      %p501 = scmp.ne.s32.totalorder %s486, %s500
      %p502 = scmp.eq.s32.totalorder %s46, 0
      %p503 = por %p501, %p502
      %s504 = ssub.s32 %s47, %s59
      %s505 = ssub.s32 %s48, %s55
      %s506 = sor.u32 %s504, %s505
      %p507 = scmp.eq.s32.totalorder %s506, 0
      %s509 = sadd.s32 %s508, 1
      %s510 = scalar_select %p507, %s508, %s509
      %p513 = pneg %p507
      %p514 = scmp.eq.s32.totalorder %s40, 1
      %p515 = por %p513, %p514
      %p516 = scmp.ne.s32.totalorder %s508, %s511
      %p517 = scmp.eq.s32.totalorder %s40, 0
      %p518 = por %p516, %p517
      %p519 = scmp.ne.s32.totalorder %s508, %s511
      %p520 = scmp.eq.s32.totalorder %s45, 1
      %p521 = por %p519, %p520
      %p522 = scmp.ne.s32.totalorder %s511, %s512
      %p523 = scmp.eq.s32.totalorder %s45, 0
      %p524 = por %p522, %p523
      %p525 = scmp.ne.s32.totalorder %s511, %s512
      %p526 = scmp.eq.s32.totalorder %s46, 1
      %p527 = por %p525, %p526
      %p529 = scmp.ne.s32.totalorder %s512, %s528
      %p530 = scmp.eq.s32.totalorder %s46, 0
      %p531 = por %p529, %p530
      %s532 = ssub.s32 %s47, %s59
      %s533 = ssub.s32 %s48, %s55
      %s534 = sor.u32 %s532, %s533
      %p535 = scmp.eq.s32.totalorder %s534, 0
      %s537 = sadd.s32 %s536, 1
      %s538 = scalar_select %p535, %s536, %s537
      %p541 = pneg %p535
      %p542 = scmp.eq.s32.totalorder %s40, 1
      %p543 = por %p541, %p542
      %p544 = scmp.ne.s32.totalorder %s536, %s539
      %p545 = scmp.eq.s32.totalorder %s40, 0
      %p546 = por %p544, %p545
      %p547 = scmp.ne.s32.totalorder %s536, %s539
      %p548 = scmp.eq.s32.totalorder %s45, 1
      %p549 = por %p547, %p548
      %p550 = scmp.ne.s32.totalorder %s539, %s540
      %p551 = scmp.eq.s32.totalorder %s45, 0
      %p552 = por %p550, %p551
      %p553 = scmp.ne.s32.totalorder %s539, %s540
      %p554 = scmp.eq.s32.totalorder %s46, 1
      %p555 = por %p553, %p554
      %p557 = scmp.ne.s32.totalorder %s540, %s556
      %p558 = scmp.eq.s32.totalorder %s46, 0
      %p559 = por %p557, %p558
      %p560 = scmp.le.s32.totalorder 1, %s40
      %p561 = scmp.lt.s32.totalorder %s40, 3
      %p562 = pnand %p560, %p561
      %p563 = pneg %p562
      // Predicated region
      $region9: #{tpu_custom_call.1} parent=5 // pred_check
        _
      $region10: #{tpu_custom_call.1} parent=5 // pred_check_branch
        %565 = sbr.rel (%p562) target = $region12
      $region11: #{tpu_custom_call.1} parent=5 // pred_region
        %s566 = ssub.s32 %s40, 1
        // Predicated region
        $region13: #{tpu_custom_call.1} parent=11 // pred_check
          %p567 = pneg %p181
        $region14: #{tpu_custom_call.1} parent=11 // pred_check_branch
          %569 = sbr.rel (%p567) target = $region16
        $region15: #{tpu_custom_call.1} parent=11 // pred_region
          _
        $region16: #{tpu_custom_call.1} parent=11 // pred_fallthru
          _
        // Predicated region
        $region17: #{tpu_custom_call.1} parent=11 // pred_check
          %p570 = pneg %p202
        $region18: #{tpu_custom_call.1} parent=11 // pred_check_branch
          %572 = sbr.rel (%p570) target = $region20
        $region19: #{tpu_custom_call.1} parent=11 // pred_region
          _
        $region20: #{tpu_custom_call.1} parent=11 // pred_fallthru
          _
        // Predicated region
        $region21: #{tpu_custom_call.1} parent=11 // pred_check
          %p573 = pneg %p223
        $region22: #{tpu_custom_call.1} parent=11 // pred_check_branch
          %575 = sbr.rel (%p573) target = $region24
        $region23: #{tpu_custom_call.1} parent=11 // pred_region
          _
        $region24: #{tpu_custom_call.1} parent=11 // pred_fallthru
          _
        // Predicated region
        $region25: #{tpu_custom_call.1} parent=11 // pred_check
          %p576 = pneg %p244
        $region26: #{tpu_custom_call.1} parent=11 // pred_check_branch
          %578 = sbr.rel (%p576) target = $region28
        $region27: #{tpu_custom_call.1} parent=11 // pred_region
          _
        $region28: #{tpu_custom_call.1} parent=11 // pred_fallthru
          _
        // Predicated region
        $region29: #{tpu_custom_call.1} parent=11 // pred_check
          %p579 = pneg %p265
        $region30: #{tpu_custom_call.1} parent=11 // pred_check_branch
          %581 = sbr.rel (%p579) target = $region32
        $region31: #{tpu_custom_call.1} parent=11 // pred_region
          _
        $region32: #{tpu_custom_call.1} parent=11 // pred_fallthru
          _
        // Predicated region
        $region33: #{tpu_custom_call.1} parent=11 // pred_check
          %p582 = pneg %p286
        $region34: #{tpu_custom_call.1} parent=11 // pred_check_branch
          %584 = sbr.rel (%p582) target = $region36
        $region35: #{tpu_custom_call.1} parent=11 // pred_region
          _
        $region36: #{tpu_custom_call.1} parent=11 // pred_fallthru
          _
        // Predicated region
        $region37: #{tpu_custom_call.1} parent=11 // pred_check
          %p585 = pneg %p307
        $region38: #{tpu_custom_call.1} parent=11 // pred_check_branch
          %587 = sbr.rel (%p585) target = $region40
        $region39: #{tpu_custom_call.1} parent=11 // pred_region
          _
        $region40: #{tpu_custom_call.1} parent=11 // pred_fallthru
          _
        // Predicated region
        $region41: #{tpu_custom_call.1} parent=11 // pred_check
          %p588 = pneg %p328
        $region42: #{tpu_custom_call.1} parent=11 // pred_check_branch
          %590 = sbr.rel (%p588) target = $region44
        $region43: #{tpu_custom_call.1} parent=11 // pred_region
          _
        $region44: #{tpu_custom_call.1} parent=11 // pred_fallthru
          _
        // Predicated region
        $region45: #{tpu_custom_call.1} parent=11 // pred_check
          %p591 = pneg %p349
        $region46: #{tpu_custom_call.1} parent=11 // pred_check_branch
          %593 = sbr.rel (%p591) target = $region48
        $region47: #{tpu_custom_call.1} parent=11 // pred_region
          _
        $region48: #{tpu_custom_call.1} parent=11 // pred_fallthru
          _
        // Predicated region
        $region49: #{tpu_custom_call.1} parent=11 // pred_check
          %p594 = pneg %p370
        $region50: #{tpu_custom_call.1} parent=11 // pred_check_branch
          %596 = sbr.rel (%p594) target = $region52
        $region51: #{tpu_custom_call.1} parent=11 // pred_region
          _
        $region52: #{tpu_custom_call.1} parent=11 // pred_fallthru
          _
        // Predicated region
        $region53: #{tpu_custom_call.1} parent=11 // pred_check
          %p597 = pneg %p391
        $region54: #{tpu_custom_call.1} parent=11 // pred_check_branch
          %599 = sbr.rel (%p597) target = $region56
        $region55: #{tpu_custom_call.1} parent=11 // pred_region
          _
        $region56: #{tpu_custom_call.1} parent=11 // pred_fallthru
          _
        // Predicated region
        $region57: #{tpu_custom_call.1} parent=11 // pred_check
          %p600 = pneg %p412
        $region58: #{tpu_custom_call.1} parent=11 // pred_check_branch
          %602 = sbr.rel (%p600) target = $region60
        $region59: #{tpu_custom_call.1} parent=11 // pred_region
          _
        $region60: #{tpu_custom_call.1} parent=11 // pred_fallthru
          _
        // Predicated region
        $region61: #{tpu_custom_call.1} parent=11 // pred_check
          %p603 = pneg %p433
        $region62: #{tpu_custom_call.1} parent=11 // pred_check_branch
          %605 = sbr.rel (%p603) target = $region64
        $region63: #{tpu_custom_call.1} parent=11 // pred_region
          _
        $region64: #{tpu_custom_call.1} parent=11 // pred_fallthru
          _
        // Predicated region
        $region65: #{tpu_custom_call.1} parent=11 // pred_check
          %p606 = pneg %p454
        $region66: #{tpu_custom_call.1} parent=11 // pred_check_branch
          %608 = sbr.rel (%p606) target = $region68
        $region67: #{tpu_custom_call.1} parent=11 // pred_region
          _
        $region68: #{tpu_custom_call.1} parent=11 // pred_fallthru
          _
        // Predicated region
        $region69: #{tpu_custom_call.1} parent=11 // pred_check
          %p609 = pneg %p475
        $region70: #{tpu_custom_call.1} parent=11 // pred_check_branch
          %611 = sbr.rel (%p609) target = $region72
        $region71: #{tpu_custom_call.1} parent=11 // pred_region
          _
        $region72: #{tpu_custom_call.1} parent=11 // pred_fallthru
          _
        // Predicated region
        $region73: #{tpu_custom_call.1} parent=11 // pred_check
          %p612 = pneg %p496
        $region74: #{tpu_custom_call.1} parent=11 // pred_check_branch
          %614 = sbr.rel (%p612) target = $region76
        $region75: #{tpu_custom_call.1} parent=11 // pred_region
          _
        $region76: #{tpu_custom_call.1} parent=11 // pred_fallthru
          _
      $region12: #{tpu_custom_call.1} parent=5 // pred_fallthru
        _
      %p615 = scmp.lt.s32.totalorder %s40, 2
      // Predicated region
      $region77: #{tpu_custom_call.1} parent=5 // pred_check
        %p616 = pneg %p615
      $region78: #{tpu_custom_call.1} parent=5 // pred_check_branch
        %618 = sbr.rel (%p616) target = $region80
      $region79: #{tpu_custom_call.1} parent=5 // pred_region
        // Predicated region
        $region81: #{tpu_custom_call.1} parent=79 // pred_check
          %p619 = pneg %p74
        $region82: #{tpu_custom_call.1} parent=79 // pred_check_branch
          %621 = sbr.rel (%p619) target = $region84
        $region83: #{tpu_custom_call.1} parent=79 // pred_region
          %s622 = sand.u32 %s64, 1
          %s623 = scalar_lea.sflag [#allocation6], %s622
          %s624 = sand.u32 %s64, 1
          %s625 = smul.addr %s624, 8
          %s626 = scalar_lea.vmem [#allocation5], %s625
          %s628 = ssub.s32 128, 128
          %629 = vsyncadd %s623, %s628
          %s630 = sadd.s32 %s48, %s47
          %s631 = smul.addr %s630, 128
          %s632 = scalar_lea.hbm %s0, %s631
          %s634 = sshll.u32 %s626, 4
          %s635 = int_to_ptr.vmem [resolvable:$true] %s634
          %637 = dma.hbm_to_vmem [thread:$0]  %s632, 128, %s635, %s623
        $region84: #{tpu_custom_call.1} parent=79 // pred_fallthru
          _
        // Predicated region
        $region85: #{tpu_custom_call.1} parent=79 // pred_check
          %p638 = pneg %p102
        $region86: #{tpu_custom_call.1} parent=79 // pred_check_branch
          %640 = sbr.rel (%p638) target = $region88
        $region87: #{tpu_custom_call.1} parent=79 // pred_region
          %s641 = sand.u32 %s92, 1
          %s642 = scalar_lea.sflag [#allocation9], %s641
          %s643 = sand.u32 %s92, 1
          %s644 = smul.addr %s643, 8
          %s645 = scalar_lea.vmem [#allocation8], %s644
          %s647 = ssub.s32 128, 128
          %648 = vsyncadd %s642, %s647
          %s649 = sadd.s32 %s48, %s47
          %s650 = smul.addr %s649, 128
          %s651 = scalar_lea.hbm %s1, %s650
          %s653 = sshll.u32 %s645, 4
          %s654 = int_to_ptr.vmem [resolvable:$true] %s653
          %656 = dma.hbm_to_vmem [thread:$0]  %s651, 128, %s654, %s642
        $region88: #{tpu_custom_call.1} parent=79 // pred_fallthru
          _
        // Predicated region
        $region89: #{tpu_custom_call.1} parent=79 // pred_check
          %p657 = pneg %p128
        $region90: #{tpu_custom_call.1} parent=79 // pred_check_branch
          %659 = sbr.rel (%p657) target = $region92
        $region91: #{tpu_custom_call.1} parent=79 // pred_region
          %p660 = scmp.lt.s32.totalorder %s47, 1
          %s661 = scalar_select %p660, %s47, 1
          %s662 = smul.addr %s661, 16
          %s663 = smul.addr %s662, 8
          %s664 = scalar_lea.vmem %s2, %s663
        $region92: #{tpu_custom_call.1} parent=79 // pred_fallthru
          _
        // Predicated region
        $region93: #{tpu_custom_call.1} parent=79 // pred_check
          %p665 = pneg %p154
        $region94: #{tpu_custom_call.1} parent=79 // pred_check_branch
          %667 = sbr.rel (%p665) target = $region96
        $region95: #{tpu_custom_call.1} parent=79 // pred_region
          %p668 = scmp.lt.s32.totalorder %s47, 1
          %s669 = scalar_select %p668, %s47, 1
          %s670 = smul.addr %s669, 16
          %s671 = smul.addr %s670, 8
          %s672 = scalar_lea.vmem %s3, %s671
        $region96: #{tpu_custom_call.1} parent=79 // pred_fallthru
          _
      $region80: #{tpu_custom_call.1} parent=5 // pred_fallthru
        _
      %p673 = scmp.le.s32.totalorder 1, %s40
      %p674 = scmp.lt.s32.totalorder %s40, 3
      %p675 = pnand %p673, %p674
      %p676 = pneg %p675
      // Predicated region
      $region97: #{tpu_custom_call.1} parent=5 // pred_check
        _
      $region98: #{tpu_custom_call.1} parent=5 // pred_check_branch
        %678 = sbr.rel (%p675) target = $region100
      $region99: #{tpu_custom_call.1} parent=5 // pred_region
        %s679 = ssub.s32 %s40, 1
        %s680 = sand.u32 %s67, 1
        %s681 = scalar_lea.sflag [#allocation6], %s680
        %s682 = sand.u32 %s67, 1
        %s683 = smul.addr %s682, 8
        %s684 = scalar_lea.vmem [#allocation5], %s683
        // Predicated region
        $region101: #{tpu_custom_call.1} parent=99 // pred_check
          %p685 = pneg %p80
        $region102: #{tpu_custom_call.1} parent=99 // pred_check_branch
          %687 = sbr.rel (%p685) target = $region104
        $region103: #{tpu_custom_call.1} parent=99 // pred_region
          %688 = dma.done %s681, 128
        $region104: #{tpu_custom_call.1} parent=99 // pred_fallthru
          _
        %s689 = sand.u32 %s95, 1
        %s690 = scalar_lea.sflag [#allocation9], %s689
        %s691 = sand.u32 %s95, 1
        %s692 = smul.addr %s691, 8
        %s693 = scalar_lea.vmem [#allocation8], %s692
        // Predicated region
        $region105: #{tpu_custom_call.1} parent=99 // pred_check
          %p694 = pneg %p108
        $region106: #{tpu_custom_call.1} parent=99 // pred_check_branch
          %696 = sbr.rel (%p694) target = $region108
        $region107: #{tpu_custom_call.1} parent=99 // pred_region
          %697 = dma.done %s690, 128
        $region108: #{tpu_custom_call.1} parent=99 // pred_fallthru
          _
        %s698 = sand.u32 %s67, 1
        %s699 = scalar_lea.sflag [#allocation6], %s698
        %s700 = sand.u32 %s67, 1
        %s701 = smul.addr %s700, 8
        %s702 = scalar_lea.vmem [#allocation5], %s701
        %p703 = pneg %p80
        %p704 = pneg %p77
        %s705 = sand.u32 %s95, 1
        %s706 = scalar_lea.sflag [#allocation9], %s705
        %s707 = sand.u32 %s95, 1
        %s708 = smul.addr %s707, 8
        %s709 = scalar_lea.vmem [#allocation8], %s708
        %p710 = pneg %p108
        %p711 = pneg %p105
        %p712 = scmp.lt.s32.totalorder %s49, 1
        %s713 = scalar_select %p712, %s49, 1
        %s714 = smul.addr %s713, 16
        %s715 = smul.addr %s714, 8
        %s716 = scalar_lea.vmem %s2, %s715
        %p717 = pneg %p134
        %p718 = pneg %p131
        %p719 = scmp.lt.s32.totalorder %s49, 1
        %s720 = scalar_select %p719, %s49, 1
        %s721 = smul.addr %s720, 16
        %s722 = smul.addr %s721, 8
        %s723 = scalar_lea.vmem %s3, %s722
        %p724 = pneg %p160
        %p725 = pneg %p157
        %p726 = pneg %p181
        %p727 = pneg %p178
        %p728 = pneg %p202
        %p729 = pneg %p199
        %p730 = pneg %p223
        %p731 = pneg %p220
        %p732 = pneg %p244
        %p733 = pneg %p241
        %p734 = pneg %p265
        %p735 = pneg %p262
        %p736 = pneg %p286
        %p737 = pneg %p283
        %p738 = pneg %p307
        %p739 = pneg %p304
        %p740 = pneg %p328
        %p741 = pneg %p325
        %p742 = pneg %p349
        %p743 = pneg %p346
        %p744 = pneg %p370
        %p745 = pneg %p367
        %p746 = pneg %p391
        %p747 = pneg %p388
        %p748 = pneg %p412
        %p749 = pneg %p409
        %p750 = pneg %p433
        %p751 = pneg %p430
        %p752 = pneg %p454
        %p753 = pneg %p451
        %p754 = pneg %p475
        %p755 = pneg %p472
        %p756 = pneg %p496
        %p757 = pneg %p493
        %p758 = pneg %p524
        %p759 = pneg %p521
        %s760 = sand.u32 %s511, 1
        %s761 = scalar_lea.sflag [#allocation7], %s760
        %s762 = sand.u32 %s511, 1
        %s763 = smul.addr %s762, 8
        %s764 = scalar_lea.vmem [#allocation10], %s763
        %p765 = pneg %p552
        %p766 = pneg %p549
        %s767 = sand.u32 %s539, 1
        %s768 = scalar_lea.sflag [#allocation12], %s767
        %s769 = sand.u32 %s539, 1
        %s770 = smul.addr %s769, 32
        %s771 = scalar_lea.vmem [#allocation11], %s770
        %p772 = scmp.lt.s32.totalorder %s49, 1
        %s773 = scalar_select %p772, %s49, 1
        %s774 = smul.addr %s773, 16
        %s775 = smul.addr %s774, 8
        %s776 = scalar_lea.vmem %s2, %s775
        %p777 = scmp.lt.s32.totalorder %s49, 1
        %s778 = scalar_select %p777, %s49, 1
        %s779 = smul.addr %s778, 16
        %s780 = smul.addr %s779, 8
        %s781 = scalar_lea.vmem %s3, %s780
        %p782 = scmp.eq.s32.totalorder %s50, 0
        // Predicated region
        $region109: #{tpu_custom_call.1} parent=99 // pred_check
          %p783 = pneg %p782
        $region110: #{tpu_custom_call.1} parent=99 // pred_check_branch
          %785 = sbr.rel (%p783) target = $region112
        $region111: #{tpu_custom_call.1} parent=99 // pred_region
          %v786 = vld [vmem:[%s776] sm:$0xff]
          %v787 = vld [vmem:[%s776 + $0x8] sm:$0xff]
          %v788 = vld [vmem:[%s776 + $0x10] sm:$0xff]
          %v789 = vld [vmem:[%s776 + $0x18] sm:$0xff]
          %v790 = vld [vmem:[%s776 + $0x20] sm:$0xff]
          %v791 = vld [vmem:[%s776 + $0x28] sm:$0xff]
          %v792 = vld [vmem:[%s776 + $0x30] sm:$0xff]
          %v793 = vld [vmem:[%s776 + $0x38] sm:$0xff]
          %v794 = vld [vmem:[%s776 + $0x40] sm:$0xff]
          %v795 = vld [vmem:[%s776 + $0x48] sm:$0xff]
          %v796 = vld [vmem:[%s776 + $0x50] sm:$0xff]
          %v797 = vld [vmem:[%s776 + $0x58] sm:$0xff]
          %v798 = vld [vmem:[%s776 + $0x60] sm:$0xff]
          %v799 = vld [vmem:[%s776 + $0x68] sm:$0xff]
          %v800 = vld [vmem:[%s776 + $0x70] sm:$0xff]
          %v801 = vld [vmem:[%s776 + $0x78] sm:$0xff]
          %v802 = vld [vmem:[%s781] sm:$0xff]
          %v803 = vld [vmem:[%s781 + $0x8] sm:$0xff]
          %v804 = vld [vmem:[%s781 + $0x10] sm:$0xff]
          %v805 = vld [vmem:[%s781 + $0x18] sm:$0xff]
          %v806 = vld [vmem:[%s781 + $0x20] sm:$0xff]
          %v807 = vld [vmem:[%s781 + $0x28] sm:$0xff]
          %v808 = vld [vmem:[%s781 + $0x30] sm:$0xff]
          %v809 = vld [vmem:[%s781 + $0x38] sm:$0xff]
          %v810 = vld [vmem:[%s781 + $0x40] sm:$0xff]
          %v811 = vld [vmem:[%s781 + $0x48] sm:$0xff]
          %v812 = vld [vmem:[%s781 + $0x50] sm:$0xff]
          %v813 = vld [vmem:[%s781 + $0x58] sm:$0xff]
          %v814 = vld [vmem:[%s781 + $0x60] sm:$0xff]
          %v815 = vld [vmem:[%s781 + $0x68] sm:$0xff]
          %v816 = vld [vmem:[%s781 + $0x70] sm:$0xff]
          %v817 = vld [vmem:[%s781 + $0x78] sm:$0xff]
          %v818 = vadd.f32 %v786, %v802
          %v819 = vadd.f32 %v787, %v803
          %v820 = vadd.f32 %v788, %v804
          %v821 = vadd.f32 %v789, %v805
          %v822 = vadd.f32 %v790, %v806
          %v823 = vadd.f32 %v791, %v807
          %v824 = vadd.f32 %v792, %v808
          %v825 = vadd.f32 %v793, %v809
          %v826 = vadd.f32 %v794, %v810
          %v827 = vadd.f32 %v795, %v811
          %v828 = vadd.f32 %v796, %v812
          %v829 = vadd.f32 %v797, %v813
          %v830 = vadd.f32 %v798, %v814
          %v831 = vadd.f32 %v799, %v815
          %v832 = vadd.f32 %v800, %v816
          %v833 = vadd.f32 %v801, %v817
          %v834 = vld [vmem:[%s6] sm:$0xff]
          %v835 = vld [vmem:[%s6 + $0x8] sm:$0xff]
          %v836 = vld [vmem:[%s6 + $0x10] sm:$0xff]
          %v837 = vld [vmem:[%s6 + $0x18] sm:$0xff]
          %v838 = vld [vmem:[%s6 + $0x20] sm:$0xff]
          %v839 = vld [vmem:[%s6 + $0x28] sm:$0xff]
          %v840 = vld [vmem:[%s6 + $0x30] sm:$0xff]
          %v841 = vld [vmem:[%s6 + $0x38] sm:$0xff]
          %v842 = vld [vmem:[%s6 + $0x40] sm:$0xff]
          %v843 = vld [vmem:[%s6 + $0x48] sm:$0xff]
          %v844 = vld [vmem:[%s6 + $0x50] sm:$0xff]
          %v845 = vld [vmem:[%s6 + $0x58] sm:$0xff]
          %v846 = vld [vmem:[%s6 + $0x60] sm:$0xff]
          %v847 = vld [vmem:[%s6 + $0x68] sm:$0xff]
          %v848 = vld [vmem:[%s6 + $0x70] sm:$0xff]
          %v849 = vld [vmem:[%s6 + $0x78] sm:$0xff]
          %v850 = vld [vmem:[%s7] sm:$0x1]
          %v852 = vlaneseq
          %v853 = vshrl.u32 %v852, 7
          %v854 = vsub.s32 0, %v853
          %v855 = vrot.slane %v850, %v854
          %857 = vmatprep.subr.mxu0 0.0
          %858 = vmatpush1.msra.mxu0 %v834
          %859 = vmatprep.subr.mxu0 0.0
          %860 = vmatpush1.msra.mxu0 %v835
          %861 = vmatprep.subr.mxu0 0.0
          %862 = vmatpush1.msra.mxu0 %v836
          %863 = vmatprep.subr.mxu0 0.0
          %864 = vmatpush1.msra.mxu0 %v837
          %865 = vmatprep.subr.mxu0 0.0
          %866 = vmatpush1.msra.mxu0 %v838
          %867 = vmatprep.subr.mxu0 0.0
          %868 = vmatpush1.msra.mxu0 %v839
          %869 = vmatprep.subr.mxu0 0.0
          %870 = vmatpush1.msra.mxu0 %v840
          %871 = vmatprep.subr.mxu0 0.0
          %872 = vmatpush1.msra.mxu0 %v841
          %873 = vmatprep.subr.mxu0 0.0
          %874 = vmatpush1.msra.mxu0 %v842
          %875 = vmatprep.subr.mxu0 0.0
          %876 = vmatpush1.msra.mxu0 %v843
          %877 = vmatprep.subr.mxu0 0.0
          %878 = vmatpush1.msra.mxu0 %v844
          %879 = vmatprep.subr.mxu0 0.0
          %880 = vmatpush1.msra.mxu0 %v845
          %881 = vmatprep.subr.mxu0 0.0
          %882 = vmatpush1.msra.mxu0 %v846
          %883 = vmatprep.subr.mxu0 0.0
          %884 = vmatpush1.msra.mxu0 %v847
          %885 = vmatprep.subr.mxu0 0.0
          %886 = vmatpush1.msra.mxu0 %v848
          %887 = vmatprep.subr.mxu0 0.0
          %888 = vmatpush1.msra.mxu0 %v849
          %889 = vmatprep.subr.mxu0 0.0
          %890 = vmatpush1.msra.mxu0 0.0
          %891 = vmatprep.subr.mxu0 0.0
          %892 = vmatpush1.msra.mxu0 0.0
          %893 = vmatprep.subr.mxu0 0.0
          %894 = vmatpush1.msra.mxu0 0.0
          %895 = vmatprep.subr.mxu0 0.0
          %896 = vmatpush1.msra.mxu0 0.0
          %897 = vmatprep.subr.mxu0 0.0
          %898 = vmatpush1.msra.mxu0 0.0
          %899 = vmatprep.subr.mxu0 0.0
          %900 = vmatpush1.msra.mxu0 0.0
          %901 = vmatprep.subr.mxu0 0.0
          %902 = vmatpush1.msra.mxu0 0.0
          %903 = vmatprep.subr.mxu0 0.0
          %904 = vmatpush1.msra.mxu0 0.0
          %905 = vmatprep.subr.mxu0 0.0
          %906 = vmatpush1.msra.mxu0 0.0
          %907 = vmatprep.subr.mxu0 0.0
          %908 = vmatpush1.msra.mxu0 0.0
          %909 = vmatprep.subr.mxu0 0.0
          %910 = vmatpush1.msra.mxu0 0.0
          %911 = vmatprep.subr.mxu0 0.0
          %912 = vmatpush1.msra.mxu0 0.0
          %913 = vmatprep.subr.mxu0 0.0
          %914 = vmatpush1.msra.mxu0 0.0
          %915 = vmatprep.subr.mxu0 0.0
          %916 = vmatpush1.msra.mxu0 0.0
          %917 = vmatprep.subr.mxu0 0.0
          %918 = vmatpush1.msra.mxu0 0.0
          %919 = vmatprep.subr.mxu0 0.0
          %920 = vmatpush1.msra.mxu0 0.0
          %921 = vmatprep.mubr.f32.mxu0 0.0
          %922 = vmatmul.mubr.f32.gmra.mrb[0].mxu0 %v818
          %v923 = vpop.f32.mrb[0].mxu0
          %v924 = vadd.f32 %v855, %v923
          %v925 = vpop.f32.mrb[0].mxu0
          %926 = vmatprep.mubr.f32.mxu0 0.0
          %927 = vmatmul.mubr.f32.gmra.mrb[0].mxu0 %v819
          %v928 = vpop.f32.mrb[0].mxu0
          %v929 = vadd.f32 %v855, %v928
          %v930 = vpop.f32.mrb[0].mxu0
          %931 = vmatprep.mubr.f32.mxu0 0.0
          %932 = vmatmul.mubr.f32.gmra.mrb[0].mxu0 %v820
          %v933 = vpop.f32.mrb[0].mxu0
          %v934 = vadd.f32 %v855, %v933
          %v935 = vpop.f32.mrb[0].mxu0
          %936 = vmatprep.mubr.f32.mxu0 0.0
          %937 = vmatmul.mubr.f32.gmra.mrb[0].mxu0 %v821
          %v938 = vpop.f32.mrb[0].mxu0
          %v939 = vadd.f32 %v855, %v938
          %v940 = vpop.f32.mrb[0].mxu0
          %941 = vmatprep.mubr.f32.mxu0 0.0
          %942 = vmatmul.mubr.f32.gmra.mrb[0].mxu0 %v822
          %v943 = vpop.f32.mrb[0].mxu0
          %v944 = vadd.f32 %v855, %v943
          %v945 = vpop.f32.mrb[0].mxu0
          %946 = vmatprep.mubr.f32.mxu0 0.0
          %947 = vmatmul.mubr.f32.gmra.mrb[0].mxu0 %v823
          %v948 = vpop.f32.mrb[0].mxu0
          %v949 = vadd.f32 %v855, %v948
          %v950 = vpop.f32.mrb[0].mxu0
          %951 = vmatprep.mubr.f32.mxu0 0.0
          %952 = vmatmul.mubr.f32.gmra.mrb[0].mxu0 %v824
          %v953 = vpop.f32.mrb[0].mxu0
          %v954 = vadd.f32 %v855, %v953
          %v955 = vpop.f32.mrb[0].mxu0
          %956 = vmatprep.mubr.f32.mxu0 0.0
          %957 = vmatmul.mubr.f32.gmra.mrb[0].mxu0 %v825
          %v958 = vpop.f32.mrb[0].mxu0
          %v959 = vadd.f32 %v855, %v958
          %v960 = vpop.f32.mrb[0].mxu0
          %961 = vmatprep.mubr.f32.mxu0 0.0
          %962 = vmatmul.mubr.f32.gmra.mrb[0].mxu0 %v826
          %v963 = vpop.f32.mrb[0].mxu0
          %v964 = vadd.f32 %v855, %v963
          %v965 = vpop.f32.mrb[0].mxu0
          %966 = vmatprep.mubr.f32.mxu0 0.0
          %967 = vmatmul.mubr.f32.gmra.mrb[0].mxu0 %v827
          %v968 = vpop.f32.mrb[0].mxu0
          %v969 = vadd.f32 %v855, %v968
          %v970 = vpop.f32.mrb[0].mxu0
          %971 = vmatprep.mubr.f32.mxu0 0.0
          %972 = vmatmul.mubr.f32.gmra.mrb[0].mxu0 %v828
          %v973 = vpop.f32.mrb[0].mxu0
          %v974 = vadd.f32 %v855, %v973
          %v975 = vpop.f32.mrb[0].mxu0
          %976 = vmatprep.mubr.f32.mxu0 0.0
          %977 = vmatmul.mubr.f32.gmra.mrb[0].mxu0 %v829
          %v978 = vpop.f32.mrb[0].mxu0
          %v979 = vadd.f32 %v855, %v978
          %v980 = vpop.f32.mrb[0].mxu0
          %981 = vmatprep.mubr.f32.mxu0 0.0
          %982 = vmatmul.mubr.f32.gmra.mrb[0].mxu0 %v830
          %v983 = vpop.f32.mrb[0].mxu0
          %v984 = vadd.f32 %v855, %v983
          %v985 = vpop.f32.mrb[0].mxu0
          %986 = vmatprep.mubr.f32.mxu0 0.0
          %987 = vmatmul.mubr.f32.gmra.mrb[0].mxu0 %v831
          %v988 = vpop.f32.mrb[0].mxu0
          %v989 = vadd.f32 %v855, %v988
          %v990 = vpop.f32.mrb[0].mxu0
          %991 = vmatprep.mubr.f32.mxu0 0.0
          %992 = vmatmul.mubr.f32.gmra.mrb[0].mxu0 %v832
          %v993 = vpop.f32.mrb[0].mxu0
          %v994 = vadd.f32 %v855, %v993
          %v995 = vpop.f32.mrb[0].mxu0
          %996 = vmatprep.mubr.f32.mxu0 0.0
          %997 = vmatmul.mubr.f32.gmra.mrb[0].mxu0 %v833
          %v998 = vpop.f32.mrb[0].mxu0
          %v999 = vadd.f32 %v855, %v998
          %v1000 = vpop.f32.mrb[0].mxu0
          %1001 = vdwg.mxu0
          %1002 = vxpose.xlu0.b32.start [1/16] %v924, 128
          %1003 = vxpose.xlu0.b32.cont [2/16] %v929, 128
          %1004 = vxpose.xlu0.b32.cont [3/16] %v934, 128
          %1005 = vxpose.xlu0.b32.cont [4/16] %v939, 128
          %1006 = vxpose.xlu0.b32.cont [5/16] %v944, 128
          %1007 = vxpose.xlu0.b32.cont [6/16] %v949, 128
          %1008 = vxpose.xlu0.b32.cont [7/16] %v954, 128
          %1009 = vxpose.xlu0.b32.cont [8/16] %v959, 128
          %1010 = vxpose.xlu0.b32.cont [9/16] %v964, 128
          %1011 = vxpose.xlu0.b32.cont [10/16] %v969, 128
          %1012 = vxpose.xlu0.b32.cont [11/16] %v974, 128
          %1013 = vxpose.xlu0.b32.cont [12/16] %v979, 128
          %1014 = vxpose.xlu0.b32.cont [13/16] %v984, 128
          %1015 = vxpose.xlu0.b32.cont [14/16] %v989, 128
          %1016 = vxpose.xlu0.b32.cont [15/16] %v994, 128
          %1017 = vxpose.xlu0.b32.end [16/16] %v999, 128
          %v1018 = vpop.trf.xlu0
          %v1019 = vpop.trf.xlu0
          %v1020 = vpop.trf.xlu0
          %v1021 = vpop.trf.xlu0
          %v1022 = vpop.trf.xlu0
          %v1023 = vpop.trf.xlu0
          %v1024 = vpop.trf.xlu0
          %v1025 = vpop.trf.xlu0
          %v1026 = vpop.trf.xlu0
          %v1027 = vpop.trf.xlu0
          %v1028 = vpop.trf.xlu0
          %v1029 = vpop.trf.xlu0
          %v1030 = vpop.trf.xlu0
          %v1031 = vpop.trf.xlu0
          %v1032 = vpop.trf.xlu0
          %v1033 = vpop.trf.xlu0
          %1034 = vst [vmem:[#allocation2] sm:$0xff] %v1018
          %1035 = vst [vmem:[#allocation2 + $0x8] sm:$0xff] %v1019
          %1036 = vst [vmem:[#allocation2 + $0x10] sm:$0xff] %v1020
          %1037 = vst [vmem:[#allocation2 + $0x18] sm:$0xff] %v1021
          %v1038 = vld [vmem:[%s8] sm:$0xff]
          %v1039 = vld [vmem:[%s8 + $0x8] sm:$0xff]
          %v1040 = vld [vmem:[%s8 + $0x10] sm:$0xff]
          %v1041 = vld [vmem:[%s8 + $0x18] sm:$0xff]
          %v1042 = vld [vmem:[%s8 + $0x20] sm:$0xff]
          %v1043 = vld [vmem:[%s8 + $0x28] sm:$0xff]
          %v1044 = vld [vmem:[%s8 + $0x30] sm:$0xff]
          %v1045 = vld [vmem:[%s8 + $0x38] sm:$0xff]
          %v1046 = vld [vmem:[%s8 + $0x40] sm:$0xff]
          %v1047 = vld [vmem:[%s8 + $0x48] sm:$0xff]
          %v1048 = vld [vmem:[%s8 + $0x50] sm:$0xff]
          %v1049 = vld [vmem:[%s8 + $0x58] sm:$0xff]
          %v1050 = vld [vmem:[%s8 + $0x60] sm:$0xff]
          %v1051 = vld [vmem:[%s8 + $0x68] sm:$0xff]
          %v1052 = vld [vmem:[%s8 + $0x70] sm:$0xff]
          %v1053 = vld [vmem:[%s8 + $0x78] sm:$0xff]
          %v1054 = vld [vmem:[%s9] sm:$0x1]
          %v1056 = vlaneseq
          %v1057 = vshrl.u32 %v1056, 7
          %v1058 = vsub.s32 0, %v1057
          %v1059 = vrot.slane %v1054, %v1058
          %1061 = vmatprep.subr.mxu0 0.0
          %1062 = vmatpush1.msra.mxu0 %v1038
          %1063 = vmatprep.subr.mxu0 0.0
          %1064 = vmatpush1.msra.mxu0 %v1039
          %1065 = vmatprep.subr.mxu0 0.0
          %1066 = vmatpush1.msra.mxu0 %v1040
          %1067 = vmatprep.subr.mxu0 0.0
          %1068 = vmatpush1.msra.mxu0 %v1041
          %1069 = vmatprep.subr.mxu0 0.0
          %1070 = vmatpush1.msra.mxu0 %v1042
          %1071 = vmatprep.subr.mxu0 0.0
          %1072 = vmatpush1.msra.mxu0 %v1043
          %1073 = vmatprep.subr.mxu0 0.0
          %1074 = vmatpush1.msra.mxu0 %v1044
          %1075 = vmatprep.subr.mxu0 0.0
          %1076 = vmatpush1.msra.mxu0 %v1045
          %1077 = vmatprep.subr.mxu0 0.0
          %1078 = vmatpush1.msra.mxu0 %v1046
          %1079 = vmatprep.subr.mxu0 0.0
          %1080 = vmatpush1.msra.mxu0 %v1047
          %1081 = vmatprep.subr.mxu0 0.0
          %1082 = vmatpush1.msra.mxu0 %v1048
          %1083 = vmatprep.subr.mxu0 0.0
          %1084 = vmatpush1.msra.mxu0 %v1049
          %1085 = vmatprep.subr.mxu0 0.0
          %1086 = vmatpush1.msra.mxu0 %v1050
          %1087 = vmatprep.subr.mxu0 0.0
          %1088 = vmatpush1.msra.mxu0 %v1051
          %1089 = vmatprep.subr.mxu0 0.0
          %1090 = vmatpush1.msra.mxu0 %v1052
          %1091 = vmatprep.subr.mxu0 0.0
          %1092 = vmatpush1.msra.mxu0 %v1053
          %1093 = vmatprep.subr.mxu0 0.0
          %1094 = vmatpush1.msra.mxu0 0.0
          %1095 = vmatprep.subr.mxu0 0.0
          %1096 = vmatpush1.msra.mxu0 0.0
          %1097 = vmatprep.subr.mxu0 0.0
          %1098 = vmatpush1.msra.mxu0 0.0
          %1099 = vmatprep.subr.mxu0 0.0
          %1100 = vmatpush1.msra.mxu0 0.0
          %1101 = vmatprep.subr.mxu0 0.0
          %1102 = vmatpush1.msra.mxu0 0.0
          %1103 = vmatprep.subr.mxu0 0.0
          %1104 = vmatpush1.msra.mxu0 0.0
          %1105 = vmatprep.subr.mxu0 0.0
          %1106 = vmatpush1.msra.mxu0 0.0
          %1107 = vmatprep.subr.mxu0 0.0
          %1108 = vmatpush1.msra.mxu0 0.0
          %1109 = vmatprep.subr.mxu0 0.0
          %1110 = vmatpush1.msra.mxu0 0.0
          %1111 = vmatprep.subr.mxu0 0.0
          %1112 = vmatpush1.msra.mxu0 0.0
          %1113 = vmatprep.subr.mxu0 0.0
          %1114 = vmatpush1.msra.mxu0 0.0
          %1115 = vmatprep.subr.mxu0 0.0
          %1116 = vmatpush1.msra.mxu0 0.0
          %1117 = vmatprep.subr.mxu0 0.0
          %1118 = vmatpush1.msra.mxu0 0.0
          %1119 = vmatprep.subr.mxu0 0.0
          %1120 = vmatpush1.msra.mxu0 0.0
          %1121 = vmatprep.subr.mxu0 0.0
          %1122 = vmatpush1.msra.mxu0 0.0
          %1123 = vmatprep.subr.mxu0 0.0
          %1124 = vmatpush1.msra.mxu0 0.0
          %1125 = vmatprep.mubr.f32.mxu0 0.0
          %1126 = vmatmul.mubr.f32.gmra.mrb[0].mxu0 %v786
          %v1127 = vpop.f32.mrb[0].mxu0
          %v1128 = vadd.f32 %v1059, %v1127
          %v1129 = vpop.f32.mrb[0].mxu0
          %1130 = vmatprep.mubr.f32.mxu0 0.0
          %1131 = vmatmul.mubr.f32.gmra.mrb[0].mxu0 %v787
          %v1132 = vpop.f32.mrb[0].mxu0
          %v1133 = vadd.f32 %v1059, %v1132
          %v1134 = vpop.f32.mrb[0].mxu0
          %1135 = vmatprep.mubr.f32.mxu0 0.0
          %1136 = vmatmul.mubr.f32.gmra.mrb[0].mxu0 %v788
          %v1137 = vpop.f32.mrb[0].mxu0
          %v1138 = vadd.f32 %v1059, %v1137
          %v1139 = vpop.f32.mrb[0].mxu0
          %1140 = vmatprep.mubr.f32.mxu0 0.0
          %1141 = vmatmul.mubr.f32.gmra.mrb[0].mxu0 %v789
          %v1142 = vpop.f32.mrb[0].mxu0
          %v1143 = vadd.f32 %v1059, %v1142
          %v1144 = vpop.f32.mrb[0].mxu0
          %1145 = vmatprep.mubr.f32.mxu0 0.0
          %1146 = vmatmul.mubr.f32.gmra.mrb[0].mxu0 %v790
          %v1147 = vpop.f32.mrb[0].mxu0
          %v1148 = vadd.f32 %v1059, %v1147
          %v1149 = vpop.f32.mrb[0].mxu0
          %1150 = vmatprep.mubr.f32.mxu0 0.0
          %1151 = vmatmul.mubr.f32.gmra.mrb[0].mxu0 %v791
          %v1152 = vpop.f32.mrb[0].mxu0
          %v1153 = vadd.f32 %v1059, %v1152
          %v1154 = vpop.f32.mrb[0].mxu0
          %1155 = vmatprep.mubr.f32.mxu0 0.0
          %1156 = vmatmul.mubr.f32.gmra.mrb[0].mxu0 %v792
          %v1157 = vpop.f32.mrb[0].mxu0
          %v1158 = vadd.f32 %v1059, %v1157
          %v1159 = vpop.f32.mrb[0].mxu0
          %1160 = vmatprep.mubr.f32.mxu0 0.0
          %1161 = vmatmul.mubr.f32.gmra.mrb[0].mxu0 %v793
          %v1162 = vpop.f32.mrb[0].mxu0
          %v1163 = vadd.f32 %v1059, %v1162
          %v1164 = vpop.f32.mrb[0].mxu0
          %1165 = vmatprep.mubr.f32.mxu0 0.0
          %1166 = vmatmul.mubr.f32.gmra.mrb[0].mxu0 %v794
          %v1167 = vpop.f32.mrb[0].mxu0
          %v1168 = vadd.f32 %v1059, %v1167
          %v1169 = vpop.f32.mrb[0].mxu0
          %1170 = vmatprep.mubr.f32.mxu0 0.0
          %1171 = vmatmul.mubr.f32.gmra.mrb[0].mxu0 %v795
          %v1172 = vpop.f32.mrb[0].mxu0
          %v1173 = vadd.f32 %v1059, %v1172
          %v1174 = vpop.f32.mrb[0].mxu0
          %1175 = vmatprep.mubr.f32.mxu0 0.0
          %1176 = vmatmul.mubr.f32.gmra.mrb[0].mxu0 %v796
          %v1177 = vpop.f32.mrb[0].mxu0
          %v1178 = vadd.f32 %v1059, %v1177
          %v1179 = vpop.f32.mrb[0].mxu0
          %1180 = vmatprep.mubr.f32.mxu0 0.0
          %1181 = vmatmul.mubr.f32.gmra.mrb[0].mxu0 %v797
          %v1182 = vpop.f32.mrb[0].mxu0
          %v1183 = vadd.f32 %v1059, %v1182
          %v1184 = vpop.f32.mrb[0].mxu0
          %1185 = vmatprep.mubr.f32.mxu0 0.0
          %1186 = vmatmul.mubr.f32.gmra.mrb[0].mxu0 %v798
          %v1187 = vpop.f32.mrb[0].mxu0
          %v1188 = vadd.f32 %v1059, %v1187
          %v1189 = vpop.f32.mrb[0].mxu0
          %1190 = vmatprep.mubr.f32.mxu0 0.0
          %1191 = vmatmul.mubr.f32.gmra.mrb[0].mxu0 %v799
          %v1192 = vpop.f32.mrb[0].mxu0
          %v1193 = vadd.f32 %v1059, %v1192
          %v1194 = vpop.f32.mrb[0].mxu0
          %1195 = vmatprep.mubr.f32.mxu0 0.0
          %1196 = vmatmul.mubr.f32.gmra.mrb[0].mxu0 %v800
          %v1197 = vpop.f32.mrb[0].mxu0
          %v1198 = vadd.f32 %v1059, %v1197
          %v1199 = vpop.f32.mrb[0].mxu0
          %1200 = vmatprep.mubr.f32.mxu0 0.0
          %1201 = vmatmul.mubr.f32.gmra.mrb[0].mxu0 %v801
          %v1202 = vpop.f32.mrb[0].mxu0
          %v1203 = vadd.f32 %v1059, %v1202
          %v1204 = vpop.f32.mrb[0].mxu0
          %1205 = vdwg.mxu0
          %vm1206 = vcmask 261120
          %1207 = vst.msk [vmem:[#allocation3] sm:$0xff] %vm1206, %v1128
          %1208 = vst.msk [vmem:[#allocation3 + $0x8] sm:$0xff] %vm1206, %v1133
          %1209 = vst.msk [vmem:[#allocation3 + $0x10] sm:$0xff] %vm1206, %v1138
          %1210 = vst.msk [vmem:[#allocation3 + $0x18] sm:$0xff] %vm1206, %v1143
          %1211 = vst.msk [vmem:[#allocation3 + $0x20] sm:$0xff] %vm1206, %v1148
          %1212 = vst.msk [vmem:[#allocation3 + $0x28] sm:$0xff] %vm1206, %v1153
          %1213 = vst.msk [vmem:[#allocation3 + $0x30] sm:$0xff] %vm1206, %v1158
          %1214 = vst.msk [vmem:[#allocation3 + $0x38] sm:$0xff] %vm1206, %v1163
          %1215 = vst.msk [vmem:[#allocation3 + $0x40] sm:$0xff] %vm1206, %v1168
          %1216 = vst.msk [vmem:[#allocation3 + $0x48] sm:$0xff] %vm1206, %v1173
          %1217 = vst.msk [vmem:[#allocation3 + $0x50] sm:$0xff] %vm1206, %v1178
          %1218 = vst.msk [vmem:[#allocation3 + $0x58] sm:$0xff] %vm1206, %v1183
          %1219 = vst.msk [vmem:[#allocation3 + $0x60] sm:$0xff] %vm1206, %v1188
          %1220 = vst.msk [vmem:[#allocation3 + $0x68] sm:$0xff] %vm1206, %v1193
          %1221 = vst.msk [vmem:[#allocation3 + $0x70] sm:$0xff] %vm1206, %v1198
          %1222 = vst.msk [vmem:[#allocation3 + $0x78] sm:$0xff] %vm1206, %v1203
        $region112: #{tpu_custom_call.1} parent=99 // pred_fallthru
          _
        %v1223 = vld [vmem:[%s684] sm:$0xff]
        %v1224 = vld [vmem:[%s693] sm:$0xff]
        %v1225 = vadd.f32 %v1223, %v1224
        %v1226 = vld [vmem:[%s4] sm:$0xff]
        %v1227 = vld [vmem:[%s4 + $0x8] sm:$0xff]
        %v1228 = vld [vmem:[%s4 + $0x10] sm:$0xff]
        %v1229 = vld [vmem:[%s4 + $0x18] sm:$0xff]
        %v1230 = vld [vmem:[%s4 + $0x20] sm:$0xff]
        %v1231 = vld [vmem:[%s4 + $0x28] sm:$0xff]
        %v1232 = vld [vmem:[%s4 + $0x30] sm:$0xff]
        %v1233 = vld [vmem:[%s4 + $0x38] sm:$0xff]
        %v1234 = vld [vmem:[%s4 + $0x40] sm:$0xff]
        %v1235 = vld [vmem:[%s4 + $0x48] sm:$0xff]
        %v1236 = vld [vmem:[%s4 + $0x50] sm:$0xff]
        %v1237 = vld [vmem:[%s4 + $0x58] sm:$0xff]
        %v1238 = vld [vmem:[%s4 + $0x60] sm:$0xff]
        %v1239 = vld [vmem:[%s4 + $0x68] sm:$0xff]
        %v1240 = vld [vmem:[%s4 + $0x70] sm:$0xff]
        %v1241 = vld [vmem:[%s4 + $0x78] sm:$0xff]
        %v1242 = vld [vmem:[%s5] sm:$0x1]
        %v1244 = vlaneseq
        %v1245 = vshrl.u32 %v1244, 7
        %v1246 = vsub.s32 0, %v1245
        %v1247 = vrot.slane %v1242, %v1246
        %1249 = vmatprep.subr.mxu0 0.0
        %1250 = vmatpush1.msra.mxu0 %v1226
        %1251 = vmatprep.subr.mxu0 0.0
        %1252 = vmatpush1.msra.mxu0 %v1227
        %1253 = vmatprep.subr.mxu0 0.0
        %1254 = vmatpush1.msra.mxu0 %v1228
        %1255 = vmatprep.subr.mxu0 0.0
        %1256 = vmatpush1.msra.mxu0 %v1229
        %1257 = vmatprep.subr.mxu0 0.0
        %1258 = vmatpush1.msra.mxu0 %v1230
        %1259 = vmatprep.subr.mxu0 0.0
        %1260 = vmatpush1.msra.mxu0 %v1231
        %1261 = vmatprep.subr.mxu0 0.0
        %1262 = vmatpush1.msra.mxu0 %v1232
        %1263 = vmatprep.subr.mxu0 0.0
        %1264 = vmatpush1.msra.mxu0 %v1233
        %1265 = vmatprep.subr.mxu0 0.0
        %1266 = vmatpush1.msra.mxu0 %v1234
        %1267 = vmatprep.subr.mxu0 0.0
        %1268 = vmatpush1.msra.mxu0 %v1235
        %1269 = vmatprep.subr.mxu0 0.0
        %1270 = vmatpush1.msra.mxu0 %v1236
        %1271 = vmatprep.subr.mxu0 0.0
        %1272 = vmatpush1.msra.mxu0 %v1237
        %1273 = vmatprep.subr.mxu0 0.0
        %1274 = vmatpush1.msra.mxu0 %v1238
        %1275 = vmatprep.subr.mxu0 0.0
        %1276 = vmatpush1.msra.mxu0 %v1239
        %1277 = vmatprep.subr.mxu0 0.0
        %1278 = vmatpush1.msra.mxu0 %v1240
        %1279 = vmatprep.subr.mxu0 0.0
        %1280 = vmatpush1.msra.mxu0 %v1241
        %1281 = vmatprep.subr.mxu0 0.0
        %1282 = vmatpush1.msra.mxu0 0.0
        %1283 = vmatprep.subr.mxu0 0.0
        %1284 = vmatpush1.msra.mxu0 0.0
        %1285 = vmatprep.subr.mxu0 0.0
        %1286 = vmatpush1.msra.mxu0 0.0
        %1287 = vmatprep.subr.mxu0 0.0
        %1288 = vmatpush1.msra.mxu0 0.0
        %1289 = vmatprep.subr.mxu0 0.0
        %1290 = vmatpush1.msra.mxu0 0.0
        %1291 = vmatprep.subr.mxu0 0.0
        %1292 = vmatpush1.msra.mxu0 0.0
        %1293 = vmatprep.subr.mxu0 0.0
        %1294 = vmatpush1.msra.mxu0 0.0
        %1295 = vmatprep.subr.mxu0 0.0
        %1296 = vmatpush1.msra.mxu0 0.0
        %1297 = vmatprep.subr.mxu0 0.0
        %1298 = vmatpush1.msra.mxu0 0.0
        %1299 = vmatprep.subr.mxu0 0.0
        %1300 = vmatpush1.msra.mxu0 0.0
        %1301 = vmatprep.subr.mxu0 0.0
        %1302 = vmatpush1.msra.mxu0 0.0
        %1303 = vmatprep.subr.mxu0 0.0
        %1304 = vmatpush1.msra.mxu0 0.0
        %1305 = vmatprep.subr.mxu0 0.0
        %1306 = vmatpush1.msra.mxu0 0.0
        %1307 = vmatprep.subr.mxu0 0.0
        %1308 = vmatpush1.msra.mxu0 0.0
        %1309 = vmatprep.subr.mxu0 0.0
        %1310 = vmatpush1.msra.mxu0 0.0
        %1311 = vmatprep.subr.mxu0 0.0
        %1312 = vmatpush1.msra.mxu0 0.0
        %1313 = vmatprep.mubr.f32.mxu0 0.0
        %1314 = vmatmul.mubr.f32.gmra.mrb[0].mxu0 %v1225
        %v1315 = vpop.f32.mrb[0].mxu0
        %v1316 = vadd.f32 %v1247, %v1315
        %v1317 = vpop.f32.mrb[0].mxu0
        %1318 = vdwg.mxu0
        %v1319 = vlaneseq
        %v1320 = vand.u32 %v1319, 127
        %vm1321 = vcmp.lt.s32.totalorder %v1320, 8
        %v1322 = vsel %vm1321, 0.0, -1e+30
        %v1323 = vld [vmem:[#allocation2] sm:$0xff]
        %vm1324 = vcmask 64512
        %v1326 = vsel %vm1324, %v1316, 0
        %1328 = vmatprep.subr.mxu0 0.0
        %1329 = vmatpush1.msra.mxu0 %v1323
        %1330 = vmatprep.subr.mxu0 0.0
        %1331 = vmatpush1.msra.mxu0 0.0
        %1332 = vmatprep.subr.mxu0 0.0
        %1333 = vmatpush1.msra.mxu0 0.0
        %1334 = vmatprep.subr.mxu0 0.0
        %1335 = vmatpush1.msra.mxu0 0.0
        %1336 = vmatprep.subr.mxu0 0.0
        %1337 = vmatpush1.msra.mxu0 0.0
        %1338 = vmatprep.subr.mxu0 0.0
        %1339 = vmatpush1.msra.mxu0 0.0
        %1340 = vmatprep.subr.mxu0 0.0
        %1341 = vmatpush1.msra.mxu0 0.0
        %1342 = vmatprep.subr.mxu0 0.0
        %1343 = vmatpush1.msra.mxu0 0.0
        %1344 = vmatprep.subr.mxu0 0.0
        %1345 = vmatpush1.msra.mxu0 0.0
        %1346 = vmatprep.subr.mxu0 0.0
        %1347 = vmatpush1.msra.mxu0 0.0
        %1348 = vmatprep.subr.mxu0 0.0
        %1349 = vmatpush1.msra.mxu0 0.0
        %1350 = vmatprep.subr.mxu0 0.0
        %1351 = vmatpush1.msra.mxu0 0.0
        %1352 = vmatprep.subr.mxu0 0.0
        %1353 = vmatpush1.msra.mxu0 0.0
        %1354 = vmatprep.subr.mxu0 0.0
        %1355 = vmatpush1.msra.mxu0 0.0
        %1356 = vmatprep.subr.mxu0 0.0
        %1357 = vmatpush1.msra.mxu0 0.0
        %1358 = vmatprep.subr.mxu0 0.0
        %1359 = vmatpush1.msra.mxu0 0.0
        %1360 = vmatprep.subr.mxu0 0.0
        %1361 = vmatpush1.msra.mxu0 0.0
        %1362 = vmatprep.subr.mxu0 0.0
        %1363 = vmatpush1.msra.mxu0 0.0
        %1364 = vmatprep.subr.mxu0 0.0
        %1365 = vmatpush1.msra.mxu0 0.0
        %1366 = vmatprep.subr.mxu0 0.0
        %1367 = vmatpush1.msra.mxu0 0.0
        %1368 = vmatprep.subr.mxu0 0.0
        %1369 = vmatpush1.msra.mxu0 0.0
        %1370 = vmatprep.subr.mxu0 0.0
        %1371 = vmatpush1.msra.mxu0 0.0
        %1372 = vmatprep.subr.mxu0 0.0
        %1373 = vmatpush1.msra.mxu0 0.0
        %1374 = vmatprep.subr.mxu0 0.0
        %1375 = vmatpush1.msra.mxu0 0.0
        %1376 = vmatprep.subr.mxu0 0.0
        %1377 = vmatpush1.msra.mxu0 0.0
        %1378 = vmatprep.subr.mxu0 0.0
        %1379 = vmatpush1.msra.mxu0 0.0
        %1380 = vmatprep.subr.mxu0 0.0
        %1381 = vmatpush1.msra.mxu0 0.0
        %1382 = vmatprep.subr.mxu0 0.0
        %1383 = vmatpush1.msra.mxu0 0.0
        %1384 = vmatprep.subr.mxu0 0.0
        %1385 = vmatpush1.msra.mxu0 0.0
        %1386 = vmatprep.subr.mxu0 0.0
        %1387 = vmatpush1.msra.mxu0 0.0
        %1388 = vmatprep.subr.mxu0 0.0
        %1389 = vmatpush1.msra.mxu0 0.0
        %1390 = vmatprep.subr.mxu0 0.0
        %1391 = vmatpush1.msra.mxu0 0.0
        %1392 = vmatprep.mubr.f32.mxu0 0.0
        %1393 = vmatmul.mubr.f32.gmra.mrb[0].mxu0 %v1326
        %v1394 = vpop.f32.mrb[0].mxu0
        %v1395 = vadd.f32 0.0, %v1394
        %v1396 = vpop.f32.mrb[0].mxu0
        %1397 = vdwg.mxu0
        %v1398 = vmul.f32 %v1395, 0.35355338
        %v1399 = vadd.f32 %v1398, %v1322
        %1400 = vmax.xlane.f32.xlu0 %v1399
        %v1401 = vpop.xlane.xlu0 %1400
        %v1402 = vsub.f32 %v1399, %v1401
        %v1403 = vmul.f32 %v1402, 1.442695
        %v1404 = vpow.pop %v1403
        %1405 = vadd.xlane.f32.xlu0 %v1404
        %v1406 = vpop.xlane.xlu0 %1405
        %v1407 = vrcp.pop %v1406
        %v1408 = vmul.f32 %v1406, %v1407
        %v1409 = vsub.f32 2.0, %v1408
        %v1410 = vmul.f32 %v1407, %v1409
        %v1411 = vmul.f32 %v1404, %v1410
        %1412 = vst [vmem:[%s771] sm:$0xff] %v1411
        %v1413 = vld [vmem:[#allocation3] sm:$0xff]
        %v1414 = vld [vmem:[#allocation3 + $0x8] sm:$0xff]
        %v1415 = vld [vmem:[#allocation3 + $0x10] sm:$0xff]
        %v1416 = vld [vmem:[#allocation3 + $0x18] sm:$0xff]
        %v1417 = vld [vmem:[#allocation3 + $0x20] sm:$0xff]
        %v1418 = vld [vmem:[#allocation3 + $0x28] sm:$0xff]
        %v1419 = vld [vmem:[#allocation3 + $0x30] sm:$0xff]
        %v1420 = vld [vmem:[#allocation3 + $0x38] sm:$0xff]
        %v1421 = vld [vmem:[#allocation3 + $0x40] sm:$0xff]
        %v1422 = vld [vmem:[#allocation3 + $0x48] sm:$0xff]
        %v1423 = vld [vmem:[#allocation3 + $0x50] sm:$0xff]
        %v1424 = vld [vmem:[#allocation3 + $0x58] sm:$0xff]
        %v1425 = vld [vmem:[#allocation3 + $0x60] sm:$0xff]
        %v1426 = vld [vmem:[#allocation3 + $0x68] sm:$0xff]
        %v1427 = vld [vmem:[#allocation3 + $0x70] sm:$0xff]
        %v1428 = vld [vmem:[#allocation3 + $0x78] sm:$0xff]
        %1429 = vmatprep.subr.mxu0 0.0
        %1430 = vmatpush1.msra.mxu0 %v1413
        %1431 = vmatprep.subr.mxu0 0.0
        %1432 = vmatpush1.msra.mxu0 %v1414
        %1433 = vmatprep.subr.mxu0 0.0
        %1434 = vmatpush1.msra.mxu0 %v1415
        %1435 = vmatprep.subr.mxu0 0.0
        %1436 = vmatpush1.msra.mxu0 %v1416
        %1437 = vmatprep.subr.mxu0 0.0
        %1438 = vmatpush1.msra.mxu0 %v1417
        %1439 = vmatprep.subr.mxu0 0.0
        %1440 = vmatpush1.msra.mxu0 %v1418
        %1441 = vmatprep.subr.mxu0 0.0
        %1442 = vmatpush1.msra.mxu0 %v1419
        %1443 = vmatprep.subr.mxu0 0.0
        %1444 = vmatpush1.msra.mxu0 %v1420
        %1445 = vmatprep.subr.mxu0 0.0
        %1446 = vmatpush1.msra.mxu0 %v1421
        %1447 = vmatprep.subr.mxu0 0.0
        %1448 = vmatpush1.msra.mxu0 %v1422
        %1449 = vmatprep.subr.mxu0 0.0
        %1450 = vmatpush1.msra.mxu0 %v1423
        %1451 = vmatprep.subr.mxu0 0.0
        %1452 = vmatpush1.msra.mxu0 %v1424
        %1453 = vmatprep.subr.mxu0 0.0
        %1454 = vmatpush1.msra.mxu0 %v1425
        %1455 = vmatprep.subr.mxu0 0.0
        %1456 = vmatpush1.msra.mxu0 %v1426
        %1457 = vmatprep.subr.mxu0 0.0
        %1458 = vmatpush1.msra.mxu0 %v1427
        %1459 = vmatprep.subr.mxu0 0.0
        %1460 = vmatpush1.msra.mxu0 %v1428
        %1461 = vmatprep.subr.mxu0 0.0
        %1462 = vmatpush1.msra.mxu0 0.0
        %1463 = vmatprep.subr.mxu0 0.0
        %1464 = vmatpush1.msra.mxu0 0.0
        %1465 = vmatprep.subr.mxu0 0.0
        %1466 = vmatpush1.msra.mxu0 0.0
        %1467 = vmatprep.subr.mxu0 0.0
        %1468 = vmatpush1.msra.mxu0 0.0
        %1469 = vmatprep.subr.mxu0 0.0
        %1470 = vmatpush1.msra.mxu0 0.0
        %1471 = vmatprep.subr.mxu0 0.0
        %1472 = vmatpush1.msra.mxu0 0.0
        %1473 = vmatprep.subr.mxu0 0.0
        %1474 = vmatpush1.msra.mxu0 0.0
        %1475 = vmatprep.subr.mxu0 0.0
        %1476 = vmatpush1.msra.mxu0 0.0
        %1477 = vmatprep.subr.mxu0 0.0
        %1478 = vmatpush1.msra.mxu0 0.0
        %1479 = vmatprep.subr.mxu0 0.0
        %1480 = vmatpush1.msra.mxu0 0.0
        %1481 = vmatprep.subr.mxu0 0.0
        %1482 = vmatpush1.msra.mxu0 0.0
        %1483 = vmatprep.subr.mxu0 0.0
        %1484 = vmatpush1.msra.mxu0 0.0
        %1485 = vmatprep.subr.mxu0 0.0
        %1486 = vmatpush1.msra.mxu0 0.0
        %1487 = vmatprep.subr.mxu0 0.0
        %1488 = vmatpush1.msra.mxu0 0.0
        %1489 = vmatprep.subr.mxu0 0.0
        %1490 = vmatpush1.msra.mxu0 0.0
        %1491 = vmatprep.subr.mxu0 0.0
        %1492 = vmatpush1.msra.mxu0 0.0
        %1493 = vmatprep.mubr.f32.mxu0 0.0
        %1494 = vmatmul.mubr.f32.gmra.mrb[0].mxu0 %v1411
        %v1495 = vpop.f32.mrb[0].mxu0
        %v1496 = vadd.f32 0.0, %v1495
        %v1497 = vpop.f32.mrb[0].mxu0
        %1498 = vdwg.mxu0
        %1499 = vst.msk [vmem:[#allocation4] sm:$0xff] %vm1324, %v1496
        %v1500 = vld [vmem:[#allocation2 + $0x8] sm:$0xff]
        %1501 = vrot.lane.b32.xlu0 %v1316, 120
        %v1502 = vpop.permute.xlu0 %1501
        %v1503 = vsel %vm1324, %v1502, 0
        %1505 = vmatprep.subr.mxu0 0.0
        %1506 = vmatpush1.msra.mxu0 %v1500
        %1507 = vmatprep.subr.mxu0 0.0
        %1508 = vmatpush1.msra.mxu0 0.0
        %1509 = vmatprep.subr.mxu0 0.0
        %1510 = vmatpush1.msra.mxu0 0.0
        %1511 = vmatprep.subr.mxu0 0.0
        %1512 = vmatpush1.msra.mxu0 0.0
        %1513 = vmatprep.subr.mxu0 0.0
        %1514 = vmatpush1.msra.mxu0 0.0
        %1515 = vmatprep.subr.mxu0 0.0
        %1516 = vmatpush1.msra.mxu0 0.0
        %1517 = vmatprep.subr.mxu0 0.0
        %1518 = vmatpush1.msra.mxu0 0.0
        %1519 = vmatprep.subr.mxu0 0.0
        %1520 = vmatpush1.msra.mxu0 0.0
        %1521 = vmatprep.subr.mxu0 0.0
        %1522 = vmatpush1.msra.mxu0 0.0
        %1523 = vmatprep.subr.mxu0 0.0
        %1524 = vmatpush1.msra.mxu0 0.0
        %1525 = vmatprep.subr.mxu0 0.0
        %1526 = vmatpush1.msra.mxu0 0.0
        %1527 = vmatprep.subr.mxu0 0.0
        %1528 = vmatpush1.msra.mxu0 0.0
        %1529 = vmatprep.subr.mxu0 0.0
        %1530 = vmatpush1.msra.mxu0 0.0
        %1531 = vmatprep.subr.mxu0 0.0
        %1532 = vmatpush1.msra.mxu0 0.0
        %1533 = vmatprep.subr.mxu0 0.0
        %1534 = vmatpush1.msra.mxu0 0.0
        %1535 = vmatprep.subr.mxu0 0.0
        %1536 = vmatpush1.msra.mxu0 0.0
        %1537 = vmatprep.subr.mxu0 0.0
        %1538 = vmatpush1.msra.mxu0 0.0
        %1539 = vmatprep.subr.mxu0 0.0
        %1540 = vmatpush1.msra.mxu0 0.0
        %1541 = vmatprep.subr.mxu0 0.0
        %1542 = vmatpush1.msra.mxu0 0.0
        %1543 = vmatprep.subr.mxu0 0.0
        %1544 = vmatpush1.msra.mxu0 0.0
        %1545 = vmatprep.subr.mxu0 0.0
        %1546 = vmatpush1.msra.mxu0 0.0
        %1547 = vmatprep.subr.mxu0 0.0
        %1548 = vmatpush1.msra.mxu0 0.0
        %1549 = vmatprep.subr.mxu0 0.0
        %1550 = vmatpush1.msra.mxu0 0.0
        %1551 = vmatprep.subr.mxu0 0.0
        %1552 = vmatpush1.msra.mxu0 0.0
        %1553 = vmatprep.subr.mxu0 0.0
        %1554 = vmatpush1.msra.mxu0 0.0
        %1555 = vmatprep.subr.mxu0 0.0
        %1556 = vmatpush1.msra.mxu0 0.0
        %1557 = vmatprep.subr.mxu0 0.0
        %1558 = vmatpush1.msra.mxu0 0.0
        %1559 = vmatprep.subr.mxu0 0.0
        %1560 = vmatpush1.msra.mxu0 0.0
        %1561 = vmatprep.subr.mxu0 0.0
        %1562 = vmatpush1.msra.mxu0 0.0
        %1563 = vmatprep.subr.mxu0 0.0
        %1564 = vmatpush1.msra.mxu0 0.0
        %1565 = vmatprep.subr.mxu0 0.0
        %1566 = vmatpush1.msra.mxu0 0.0
        %1567 = vmatprep.subr.mxu0 0.0
        %1568 = vmatpush1.msra.mxu0 0.0
        %1569 = vmatprep.mubr.f32.mxu0 0.0
        %1570 = vmatmul.mubr.f32.gmra.mrb[0].mxu0 %v1503
        %v1571 = vpop.f32.mrb[0].mxu0
        %v1572 = vadd.f32 0.0, %v1571
        %v1573 = vpop.f32.mrb[0].mxu0
        %1574 = vdwg.mxu0
        %v1575 = vmul.f32 %v1572, 0.35355338
        %v1576 = vadd.f32 %v1575, %v1322
        %1577 = vmax.xlane.f32.xlu0 %v1576
        %v1578 = vpop.xlane.xlu0 %1577
        %v1579 = vsub.f32 %v1576, %v1578
        %v1580 = vmul.f32 %v1579, 1.442695
        %v1581 = vpow.pop %v1580
        %1582 = vadd.xlane.f32.xlu0 %v1581
        %v1583 = vpop.xlane.xlu0 %1582
        %v1584 = vrcp.pop %v1583
        %v1585 = vmul.f32 %v1583, %v1584
        %v1586 = vsub.f32 2.0, %v1585
        %v1587 = vmul.f32 %v1584, %v1586
        %v1588 = vmul.f32 %v1581, %v1587
        %s1589 = scalar_lea.vmem %s771, 8 [#allocation11]
        %1590 = vst [vmem:[%s1589] sm:$0xff] %v1588
        %v1591 = vld [vmem:[#allocation3] sm:$0xff]
        %v1592 = vld [vmem:[#allocation3 + $0x8] sm:$0xff]
        %v1593 = vld [vmem:[#allocation3 + $0x10] sm:$0xff]
        %v1594 = vld [vmem:[#allocation3 + $0x18] sm:$0xff]
        %v1595 = vld [vmem:[#allocation3 + $0x20] sm:$0xff]
        %v1596 = vld [vmem:[#allocation3 + $0x28] sm:$0xff]
        %v1597 = vld [vmem:[#allocation3 + $0x30] sm:$0xff]
        %v1598 = vld [vmem:[#allocation3 + $0x38] sm:$0xff]
        %v1599 = vld [vmem:[#allocation3 + $0x40] sm:$0xff]
        %v1600 = vld [vmem:[#allocation3 + $0x48] sm:$0xff]
        %v1601 = vld [vmem:[#allocation3 + $0x50] sm:$0xff]
        %v1602 = vld [vmem:[#allocation3 + $0x58] sm:$0xff]
        %v1603 = vld [vmem:[#allocation3 + $0x60] sm:$0xff]
        %v1604 = vld [vmem:[#allocation3 + $0x68] sm:$0xff]
        %v1605 = vld [vmem:[#allocation3 + $0x70] sm:$0xff]
        %v1606 = vld [vmem:[#allocation3 + $0x78] sm:$0xff]
        %1623 = vrot.lane.b32.xlu0 %v1591, 120
        %v1624 = vpop.permute.xlu0 %1623
        %1625 = vrot.lane.b32.xlu0 %v1592, 120
        %v1626 = vpop.permute.xlu0 %1625
        %1627 = vrot.lane.b32.xlu0 %v1593, 120
        %v1628 = vpop.permute.xlu0 %1627
        %1629 = vrot.lane.b32.xlu0 %v1594, 120
        %v1630 = vpop.permute.xlu0 %1629
        %1631 = vrot.lane.b32.xlu0 %v1595, 120
        %v1632 = vpop.permute.xlu0 %1631
        %1633 = vrot.lane.b32.xlu0 %v1596, 120
        %v1634 = vpop.permute.xlu0 %1633
        %1635 = vrot.lane.b32.xlu0 %v1597, 120
        %v1636 = vpop.permute.xlu0 %1635
        %1637 = vrot.lane.b32.xlu0 %v1598, 120
        %v1638 = vpop.permute.xlu0 %1637
        %1639 = vrot.lane.b32.xlu0 %v1599, 120
        %v1640 = vpop.permute.xlu0 %1639
        %1641 = vrot.lane.b32.xlu0 %v1600, 120
        %v1642 = vpop.permute.xlu0 %1641
        %1643 = vrot.lane.b32.xlu0 %v1601, 120
        %v1644 = vpop.permute.xlu0 %1643
        %1645 = vrot.lane.b32.xlu0 %v1602, 120
        %v1646 = vpop.permute.xlu0 %1645
        %1647 = vrot.lane.b32.xlu0 %v1603, 120
        %v1648 = vpop.permute.xlu0 %1647
        %1649 = vrot.lane.b32.xlu0 %v1604, 120
        %v1650 = vpop.permute.xlu0 %1649
        %1651 = vrot.lane.b32.xlu0 %v1605, 120
        %v1652 = vpop.permute.xlu0 %1651
        %1653 = vrot.lane.b32.xlu0 %v1606, 120
        %v1654 = vpop.permute.xlu0 %1653
        %1671 = vmatprep.subr.mxu0 0.0
        %1672 = vmatpush1.msra.mxu0 %v1624
        %1673 = vmatprep.subr.mxu0 0.0
        %1674 = vmatpush1.msra.mxu0 %v1626
        %1675 = vmatprep.subr.mxu0 0.0
        %1676 = vmatpush1.msra.mxu0 %v1628
        %1677 = vmatprep.subr.mxu0 0.0
        %1678 = vmatpush1.msra.mxu0 %v1630
        %1679 = vmatprep.subr.mxu0 0.0
        %1680 = vmatpush1.msra.mxu0 %v1632
        %1681 = vmatprep.subr.mxu0 0.0
        %1682 = vmatpush1.msra.mxu0 %v1634
        %1683 = vmatprep.subr.mxu0 0.0
        %1684 = vmatpush1.msra.mxu0 %v1636
        %1685 = vmatprep.subr.mxu0 0.0
        %1686 = vmatpush1.msra.mxu0 %v1638
        %1687 = vmatprep.subr.mxu0 0.0
        %1688 = vmatpush1.msra.mxu0 %v1640
        %1689 = vmatprep.subr.mxu0 0.0
        %1690 = vmatpush1.msra.mxu0 %v1642
        %1691 = vmatprep.subr.mxu0 0.0
        %1692 = vmatpush1.msra.mxu0 %v1644
        %1693 = vmatprep.subr.mxu0 0.0
        %1694 = vmatpush1.msra.mxu0 %v1646
        %1695 = vmatprep.subr.mxu0 0.0
        %1696 = vmatpush1.msra.mxu0 %v1648
        %1697 = vmatprep.subr.mxu0 0.0
        %1698 = vmatpush1.msra.mxu0 %v1650
        %1699 = vmatprep.subr.mxu0 0.0
        %1700 = vmatpush1.msra.mxu0 %v1652
        %1701 = vmatprep.subr.mxu0 0.0
        %1702 = vmatpush1.msra.mxu0 %v1654
        %1703 = vmatprep.subr.mxu0 0.0
        %1704 = vmatpush1.msra.mxu0 0.0
        %1705 = vmatprep.subr.mxu0 0.0
        %1706 = vmatpush1.msra.mxu0 0.0
        %1707 = vmatprep.subr.mxu0 0.0
        %1708 = vmatpush1.msra.mxu0 0.0
        %1709 = vmatprep.subr.mxu0 0.0
        %1710 = vmatpush1.msra.mxu0 0.0
        %1711 = vmatprep.subr.mxu0 0.0
        %1712 = vmatpush1.msra.mxu0 0.0
        %1713 = vmatprep.subr.mxu0 0.0
        %1714 = vmatpush1.msra.mxu0 0.0
        %1715 = vmatprep.subr.mxu0 0.0
        %1716 = vmatpush1.msra.mxu0 0.0
        %1717 = vmatprep.subr.mxu0 0.0
        %1718 = vmatpush1.msra.mxu0 0.0
        %1719 = vmatprep.subr.mxu0 0.0
        %1720 = vmatpush1.msra.mxu0 0.0
        %1721 = vmatprep.subr.mxu0 0.0
        %1722 = vmatpush1.msra.mxu0 0.0
        %1723 = vmatprep.subr.mxu0 0.0
        %1724 = vmatpush1.msra.mxu0 0.0
        %1725 = vmatprep.subr.mxu0 0.0
        %1726 = vmatpush1.msra.mxu0 0.0
        %1727 = vmatprep.subr.mxu0 0.0
        %1728 = vmatpush1.msra.mxu0 0.0
        %1729 = vmatprep.subr.mxu0 0.0
        %1730 = vmatpush1.msra.mxu0 0.0
        %1731 = vmatprep.subr.mxu0 0.0
        %1732 = vmatpush1.msra.mxu0 0.0
        %1733 = vmatprep.subr.mxu0 0.0
        %1734 = vmatpush1.msra.mxu0 0.0
        %1735 = vmatprep.mubr.f32.mxu0 0.0
        %1736 = vmatmul.mubr.f32.gmra.mrb[0].mxu0 %v1588
        %v1737 = vpop.f32.mrb[0].mxu0
        %v1738 = vadd.f32 0.0, %v1737
        %v1739 = vpop.f32.mrb[0].mxu0
        %1740 = vdwg.mxu0
        %1742 = vrot.lane.b32.xlu0 %v1738, 8
        %v1743 = vpop.permute.xlu0 %1742
        %vm1745 = vcmask 130112
        %1746 = vst.msk [vmem:[#allocation4] sm:$0xff] %vm1745, %v1743
        %v1747 = vld [vmem:[#allocation2 + $0x10] sm:$0xff]
        %1748 = vrot.lane.b32.xlu0 %v1316, 112
        %v1749 = vpop.permute.xlu0 %1748
        %v1750 = vsel %vm1324, %v1749, 0
        %1752 = vmatprep.subr.mxu0 0.0
        %1753 = vmatpush1.msra.mxu0 %v1747
        %1754 = vmatprep.subr.mxu0 0.0
        %1755 = vmatpush1.msra.mxu0 0.0
        %1756 = vmatprep.subr.mxu0 0.0
        %1757 = vmatpush1.msra.mxu0 0.0
        %1758 = vmatprep.subr.mxu0 0.0
        %1759 = vmatpush1.msra.mxu0 0.0
        %1760 = vmatprep.subr.mxu0 0.0
        %1761 = vmatpush1.msra.mxu0 0.0
        %1762 = vmatprep.subr.mxu0 0.0
        %1763 = vmatpush1.msra.mxu0 0.0
        %1764 = vmatprep.subr.mxu0 0.0
        %1765 = vmatpush1.msra.mxu0 0.0
        %1766 = vmatprep.subr.mxu0 0.0
        %1767 = vmatpush1.msra.mxu0 0.0
        %1768 = vmatprep.subr.mxu0 0.0
        %1769 = vmatpush1.msra.mxu0 0.0
        %1770 = vmatprep.subr.mxu0 0.0
        %1771 = vmatpush1.msra.mxu0 0.0
        %1772 = vmatprep.subr.mxu0 0.0
        %1773 = vmatpush1.msra.mxu0 0.0
        %1774 = vmatprep.subr.mxu0 0.0
        %1775 = vmatpush1.msra.mxu0 0.0
        %1776 = vmatprep.subr.mxu0 0.0
        %1777 = vmatpush1.msra.mxu0 0.0
        %1778 = vmatprep.subr.mxu0 0.0
        %1779 = vmatpush1.msra.mxu0 0.0
        %1780 = vmatprep.subr.mxu0 0.0
        %1781 = vmatpush1.msra.mxu0 0.0
        %1782 = vmatprep.subr.mxu0 0.0
        %1783 = vmatpush1.msra.mxu0 0.0
        %1784 = vmatprep.subr.mxu0 0.0
        %1785 = vmatpush1.msra.mxu0 0.0
        %1786 = vmatprep.subr.mxu0 0.0
        %1787 = vmatpush1.msra.mxu0 0.0
        %1788 = vmatprep.subr.mxu0 0.0
        %1789 = vmatpush1.msra.mxu0 0.0
        %1790 = vmatprep.subr.mxu0 0.0
        %1791 = vmatpush1.msra.mxu0 0.0
        %1792 = vmatprep.subr.mxu0 0.0
        %1793 = vmatpush1.msra.mxu0 0.0
        %1794 = vmatprep.subr.mxu0 0.0
        %1795 = vmatpush1.msra.mxu0 0.0
        %1796 = vmatprep.subr.mxu0 0.0
        %1797 = vmatpush1.msra.mxu0 0.0
        %1798 = vmatprep.subr.mxu0 0.0
        %1799 = vmatpush1.msra.mxu0 0.0
        %1800 = vmatprep.subr.mxu0 0.0
        %1801 = vmatpush1.msra.mxu0 0.0
        %1802 = vmatprep.subr.mxu0 0.0
        %1803 = vmatpush1.msra.mxu0 0.0
        %1804 = vmatprep.subr.mxu0 0.0
        %1805 = vmatpush1.msra.mxu0 0.0
        %1806 = vmatprep.subr.mxu0 0.0
        %1807 = vmatpush1.msra.mxu0 0.0
        %1808 = vmatprep.subr.mxu0 0.0
        %1809 = vmatpush1.msra.mxu0 0.0
        %1810 = vmatprep.subr.mxu0 0.0
        %1811 = vmatpush1.msra.mxu0 0.0
        %1812 = vmatprep.subr.mxu0 0.0
        %1813 = vmatpush1.msra.mxu0 0.0
        %1814 = vmatprep.subr.mxu0 0.0
        %1815 = vmatpush1.msra.mxu0 0.0
        %1816 = vmatprep.mubr.f32.mxu0 0.0
        %1817 = vmatmul.mubr.f32.gmra.mrb[0].mxu0 %v1750
        %v1818 = vpop.f32.mrb[0].mxu0
        %v1819 = vadd.f32 0.0, %v1818
        %v1820 = vpop.f32.mrb[0].mxu0
        %1821 = vdwg.mxu0
        %v1822 = vmul.f32 %v1819, 0.35355338
        %v1823 = vadd.f32 %v1822, %v1322
        %1824 = vmax.xlane.f32.xlu0 %v1823
        %v1825 = vpop.xlane.xlu0 %1824
        %v1826 = vsub.f32 %v1823, %v1825
        %v1827 = vmul.f32 %v1826, 1.442695
        %v1828 = vpow.pop %v1827
        %1829 = vadd.xlane.f32.xlu0 %v1828
        %v1830 = vpop.xlane.xlu0 %1829
        %v1831 = vrcp.pop %v1830
        %v1832 = vmul.f32 %v1830, %v1831
        %v1833 = vsub.f32 2.0, %v1832
        %v1834 = vmul.f32 %v1831, %v1833
        %v1835 = vmul.f32 %v1828, %v1834
        %s1836 = scalar_lea.vmem %s771, 16 [#allocation11]
        %1837 = vst [vmem:[%s1836] sm:$0xff] %v1835
        %v1838 = vld [vmem:[#allocation3] sm:$0xff]
        %v1839 = vld [vmem:[#allocation3 + $0x8] sm:$0xff]
        %v1840 = vld [vmem:[#allocation3 + $0x10] sm:$0xff]
        %v1841 = vld [vmem:[#allocation3 + $0x18] sm:$0xff]
        %v1842 = vld [vmem:[#allocation3 + $0x20] sm:$0xff]
        %v1843 = vld [vmem:[#allocation3 + $0x28] sm:$0xff]
        %v1844 = vld [vmem:[#allocation3 + $0x30] sm:$0xff]
        %v1845 = vld [vmem:[#allocation3 + $0x38] sm:$0xff]
        %v1846 = vld [vmem:[#allocation3 + $0x40] sm:$0xff]
        %v1847 = vld [vmem:[#allocation3 + $0x48] sm:$0xff]
        %v1848 = vld [vmem:[#allocation3 + $0x50] sm:$0xff]
        %v1849 = vld [vmem:[#allocation3 + $0x58] sm:$0xff]
        %v1850 = vld [vmem:[#allocation3 + $0x60] sm:$0xff]
        %v1851 = vld [vmem:[#allocation3 + $0x68] sm:$0xff]
        %v1852 = vld [vmem:[#allocation3 + $0x70] sm:$0xff]
        %v1853 = vld [vmem:[#allocation3 + $0x78] sm:$0xff]
        %1870 = vrot.lane.b32.xlu0 %v1838, 112
        %v1871 = vpop.permute.xlu0 %1870
        %1872 = vrot.lane.b32.xlu0 %v1839, 112
        %v1873 = vpop.permute.xlu0 %1872
        %1874 = vrot.lane.b32.xlu0 %v1840, 112
        %v1875 = vpop.permute.xlu0 %1874
        %1876 = vrot.lane.b32.xlu0 %v1841, 112
        %v1877 = vpop.permute.xlu0 %1876
        %1878 = vrot.lane.b32.xlu0 %v1842, 112
        %v1879 = vpop.permute.xlu0 %1878
        %1880 = vrot.lane.b32.xlu0 %v1843, 112
        %v1881 = vpop.permute.xlu0 %1880
        %1882 = vrot.lane.b32.xlu0 %v1844, 112
        %v1883 = vpop.permute.xlu0 %1882
        %1884 = vrot.lane.b32.xlu0 %v1845, 112
        %v1885 = vpop.permute.xlu0 %1884
        %1886 = vrot.lane.b32.xlu0 %v1846, 112
        %v1887 = vpop.permute.xlu0 %1886
        %1888 = vrot.lane.b32.xlu0 %v1847, 112
        %v1889 = vpop.permute.xlu0 %1888
        %1890 = vrot.lane.b32.xlu0 %v1848, 112
        %v1891 = vpop.permute.xlu0 %1890
        %1892 = vrot.lane.b32.xlu0 %v1849, 112
        %v1893 = vpop.permute.xlu0 %1892
        %1894 = vrot.lane.b32.xlu0 %v1850, 112
        %v1895 = vpop.permute.xlu0 %1894
        %1896 = vrot.lane.b32.xlu0 %v1851, 112
        %v1897 = vpop.permute.xlu0 %1896
        %1898 = vrot.lane.b32.xlu0 %v1852, 112
        %v1899 = vpop.permute.xlu0 %1898
        %1900 = vrot.lane.b32.xlu0 %v1853, 112
        %v1901 = vpop.permute.xlu0 %1900
        %1918 = vmatprep.subr.mxu0 0.0
        %1919 = vmatpush1.msra.mxu0 %v1871
        %1920 = vmatprep.subr.mxu0 0.0
        %1921 = vmatpush1.msra.mxu0 %v1873
        %1922 = vmatprep.subr.mxu0 0.0
        %1923 = vmatpush1.msra.mxu0 %v1875
        %1924 = vmatprep.subr.mxu0 0.0
        %1925 = vmatpush1.msra.mxu0 %v1877
        %1926 = vmatprep.subr.mxu0 0.0
        %1927 = vmatpush1.msra.mxu0 %v1879
        %1928 = vmatprep.subr.mxu0 0.0
        %1929 = vmatpush1.msra.mxu0 %v1881
        %1930 = vmatprep.subr.mxu0 0.0
        %1931 = vmatpush1.msra.mxu0 %v1883
        %1932 = vmatprep.subr.mxu0 0.0
        %1933 = vmatpush1.msra.mxu0 %v1885
        %1934 = vmatprep.subr.mxu0 0.0
        %1935 = vmatpush1.msra.mxu0 %v1887
        %1936 = vmatprep.subr.mxu0 0.0
        %1937 = vmatpush1.msra.mxu0 %v1889
        %1938 = vmatprep.subr.mxu0 0.0
        %1939 = vmatpush1.msra.mxu0 %v1891
        %1940 = vmatprep.subr.mxu0 0.0
        %1941 = vmatpush1.msra.mxu0 %v1893
        %1942 = vmatprep.subr.mxu0 0.0
        %1943 = vmatpush1.msra.mxu0 %v1895
        %1944 = vmatprep.subr.mxu0 0.0
        %1945 = vmatpush1.msra.mxu0 %v1897
        %1946 = vmatprep.subr.mxu0 0.0
        %1947 = vmatpush1.msra.mxu0 %v1899
        %1948 = vmatprep.subr.mxu0 0.0
        %1949 = vmatpush1.msra.mxu0 %v1901
        %1950 = vmatprep.subr.mxu0 0.0
        %1951 = vmatpush1.msra.mxu0 0.0
        %1952 = vmatprep.subr.mxu0 0.0
        %1953 = vmatpush1.msra.mxu0 0.0
        %1954 = vmatprep.subr.mxu0 0.0
        %1955 = vmatpush1.msra.mxu0 0.0
        %1956 = vmatprep.subr.mxu0 0.0
        %1957 = vmatpush1.msra.mxu0 0.0
        %1958 = vmatprep.subr.mxu0 0.0
        %1959 = vmatpush1.msra.mxu0 0.0
        %1960 = vmatprep.subr.mxu0 0.0
        %1961 = vmatpush1.msra.mxu0 0.0
        %1962 = vmatprep.subr.mxu0 0.0
        %1963 = vmatpush1.msra.mxu0 0.0
        %1964 = vmatprep.subr.mxu0 0.0
        %1965 = vmatpush1.msra.mxu0 0.0
        %1966 = vmatprep.subr.mxu0 0.0
        %1967 = vmatpush1.msra.mxu0 0.0
        %1968 = vmatprep.subr.mxu0 0.0
        %1969 = vmatpush1.msra.mxu0 0.0
        %1970 = vmatprep.subr.mxu0 0.0
        %1971 = vmatpush1.msra.mxu0 0.0
        %1972 = vmatprep.subr.mxu0 0.0
        %1973 = vmatpush1.msra.mxu0 0.0
        %1974 = vmatprep.subr.mxu0 0.0
        %1975 = vmatpush1.msra.mxu0 0.0
        %1976 = vmatprep.subr.mxu0 0.0
        %1977 = vmatpush1.msra.mxu0 0.0
        %1978 = vmatprep.subr.mxu0 0.0
        %1979 = vmatpush1.msra.mxu0 0.0
        %1980 = vmatprep.subr.mxu0 0.0
        %1981 = vmatpush1.msra.mxu0 0.0
        %1982 = vmatprep.mubr.f32.mxu0 0.0
        %1983 = vmatmul.mubr.f32.gmra.mrb[0].mxu0 %v1835
        %v1984 = vpop.f32.mrb[0].mxu0
        %v1985 = vadd.f32 0.0, %v1984
        %v1986 = vpop.f32.mrb[0].mxu0
        %1987 = vdwg.mxu0
        %1989 = vrot.lane.b32.xlu0 %v1985, 16
        %v1990 = vpop.permute.xlu0 %1989
        %vm1992 = vcmask 195712
        %1993 = vst.msk [vmem:[#allocation4] sm:$0xff] %vm1992, %v1990
        %v1994 = vld [vmem:[#allocation2 + $0x18] sm:$0xff]
        %1995 = vrot.lane.b32.xlu0 %v1316, 104
        %v1996 = vpop.permute.xlu0 %1995
        %v1997 = vsel %vm1324, %v1996, 0
        %1999 = vmatprep.subr.mxu0 0.0
        %2000 = vmatpush1.msra.mxu0 %v1994
        %2001 = vmatprep.subr.mxu0 0.0
        %2002 = vmatpush1.msra.mxu0 0.0
        %2003 = vmatprep.subr.mxu0 0.0
        %2004 = vmatpush1.msra.mxu0 0.0
        %2005 = vmatprep.subr.mxu0 0.0
        %2006 = vmatpush1.msra.mxu0 0.0
        %2007 = vmatprep.subr.mxu0 0.0
        %2008 = vmatpush1.msra.mxu0 0.0
        %2009 = vmatprep.subr.mxu0 0.0
        %2010 = vmatpush1.msra.mxu0 0.0
        %2011 = vmatprep.subr.mxu0 0.0
        %2012 = vmatpush1.msra.mxu0 0.0
        %2013 = vmatprep.subr.mxu0 0.0
        %2014 = vmatpush1.msra.mxu0 0.0
        %2015 = vmatprep.subr.mxu0 0.0
        %2016 = vmatpush1.msra.mxu0 0.0
        %2017 = vmatprep.subr.mxu0 0.0
        %2018 = vmatpush1.msra.mxu0 0.0
        %2019 = vmatprep.subr.mxu0 0.0
        %2020 = vmatpush1.msra.mxu0 0.0
        %2021 = vmatprep.subr.mxu0 0.0
        %2022 = vmatpush1.msra.mxu0 0.0
        %2023 = vmatprep.subr.mxu0 0.0
        %2024 = vmatpush1.msra.mxu0 0.0
        %2025 = vmatprep.subr.mxu0 0.0
        %2026 = vmatpush1.msra.mxu0 0.0
        %2027 = vmatprep.subr.mxu0 0.0
        %2028 = vmatpush1.msra.mxu0 0.0
        %2029 = vmatprep.subr.mxu0 0.0
        %2030 = vmatpush1.msra.mxu0 0.0
        %2031 = vmatprep.subr.mxu0 0.0
        %2032 = vmatpush1.msra.mxu0 0.0
        %2033 = vmatprep.subr.mxu0 0.0
        %2034 = vmatpush1.msra.mxu0 0.0
        %2035 = vmatprep.subr.mxu0 0.0
        %2036 = vmatpush1.msra.mxu0 0.0
        %2037 = vmatprep.subr.mxu0 0.0
        %2038 = vmatpush1.msra.mxu0 0.0
        %2039 = vmatprep.subr.mxu0 0.0
        %2040 = vmatpush1.msra.mxu0 0.0
        %2041 = vmatprep.subr.mxu0 0.0
        %2042 = vmatpush1.msra.mxu0 0.0
        %2043 = vmatprep.subr.mxu0 0.0
        %2044 = vmatpush1.msra.mxu0 0.0
        %2045 = vmatprep.subr.mxu0 0.0
        %2046 = vmatpush1.msra.mxu0 0.0
        %2047 = vmatprep.subr.mxu0 0.0
        %2048 = vmatpush1.msra.mxu0 0.0
        %2049 = vmatprep.subr.mxu0 0.0
        %2050 = vmatpush1.msra.mxu0 0.0
        %2051 = vmatprep.subr.mxu0 0.0
        %2052 = vmatpush1.msra.mxu0 0.0
        %2053 = vmatprep.subr.mxu0 0.0
        %2054 = vmatpush1.msra.mxu0 0.0
        %2055 = vmatprep.subr.mxu0 0.0
        %2056 = vmatpush1.msra.mxu0 0.0
        %2057 = vmatprep.subr.mxu0 0.0
        %2058 = vmatpush1.msra.mxu0 0.0
        %2059 = vmatprep.subr.mxu0 0.0
        %2060 = vmatpush1.msra.mxu0 0.0
        %2061 = vmatprep.subr.mxu0 0.0
        %2062 = vmatpush1.msra.mxu0 0.0
        %2063 = vmatprep.mubr.f32.mxu0 0.0
        %2064 = vmatmul.mubr.f32.gmra.mrb[0].mxu0 %v1997
        %v2065 = vpop.f32.mrb[0].mxu0
        %v2066 = vadd.f32 0.0, %v2065
        %v2067 = vpop.f32.mrb[0].mxu0
        %2068 = vdwg.mxu0
        %v2069 = vmul.f32 %v2066, 0.35355338
        %v2070 = vadd.f32 %v2069, %v1322
        %2071 = vmax.xlane.f32.xlu0 %v2070
        %v2072 = vpop.xlane.xlu0 %2071
        %v2073 = vsub.f32 %v2070, %v2072
        %v2074 = vmul.f32 %v2073, 1.442695
        %v2075 = vpow.pop %v2074
        %2076 = vadd.xlane.f32.xlu0 %v2075
        %v2077 = vpop.xlane.xlu0 %2076
        %v2078 = vrcp.pop %v2077
        %v2079 = vmul.f32 %v2077, %v2078
        %v2080 = vsub.f32 2.0, %v2079
        %v2081 = vmul.f32 %v2078, %v2080
        %v2082 = vmul.f32 %v2075, %v2081
        %s2083 = scalar_lea.vmem %s771, 24 [#allocation11]
        %2084 = vst [vmem:[%s2083] sm:$0xff] %v2082
        %v2085 = vld [vmem:[#allocation3] sm:$0xff]
        %v2086 = vld [vmem:[#allocation3 + $0x8] sm:$0xff]
        %v2087 = vld [vmem:[#allocation3 + $0x10] sm:$0xff]
        %v2088 = vld [vmem:[#allocation3 + $0x18] sm:$0xff]
        %v2089 = vld [vmem:[#allocation3 + $0x20] sm:$0xff]
        %v2090 = vld [vmem:[#allocation3 + $0x28] sm:$0xff]
        %v2091 = vld [vmem:[#allocation3 + $0x30] sm:$0xff]
        %v2092 = vld [vmem:[#allocation3 + $0x38] sm:$0xff]
        %v2093 = vld [vmem:[#allocation3 + $0x40] sm:$0xff]
        %v2094 = vld [vmem:[#allocation3 + $0x48] sm:$0xff]
        %v2095 = vld [vmem:[#allocation3 + $0x50] sm:$0xff]
        %v2096 = vld [vmem:[#allocation3 + $0x58] sm:$0xff]
        %v2097 = vld [vmem:[#allocation3 + $0x60] sm:$0xff]
        %v2098 = vld [vmem:[#allocation3 + $0x68] sm:$0xff]
        %v2099 = vld [vmem:[#allocation3 + $0x70] sm:$0xff]
        %v2100 = vld [vmem:[#allocation3 + $0x78] sm:$0xff]
        %2117 = vrot.lane.b32.xlu0 %v2085, 104
        %v2118 = vpop.permute.xlu0 %2117
        %2119 = vrot.lane.b32.xlu0 %v2086, 104
        %v2120 = vpop.permute.xlu0 %2119
        %2121 = vrot.lane.b32.xlu0 %v2087, 104
        %v2122 = vpop.permute.xlu0 %2121
        %2123 = vrot.lane.b32.xlu0 %v2088, 104
        %v2124 = vpop.permute.xlu0 %2123
        %2125 = vrot.lane.b32.xlu0 %v2089, 104
        %v2126 = vpop.permute.xlu0 %2125
        %2127 = vrot.lane.b32.xlu0 %v2090, 104
        %v2128 = vpop.permute.xlu0 %2127
        %2129 = vrot.lane.b32.xlu0 %v2091, 104
        %v2130 = vpop.permute.xlu0 %2129
        %2131 = vrot.lane.b32.xlu0 %v2092, 104
        %v2132 = vpop.permute.xlu0 %2131
        %2133 = vrot.lane.b32.xlu0 %v2093, 104
        %v2134 = vpop.permute.xlu0 %2133
        %2135 = vrot.lane.b32.xlu0 %v2094, 104
        %v2136 = vpop.permute.xlu0 %2135
        %2137 = vrot.lane.b32.xlu0 %v2095, 104
        %v2138 = vpop.permute.xlu0 %2137
        %2139 = vrot.lane.b32.xlu0 %v2096, 104
        %v2140 = vpop.permute.xlu0 %2139
        %2141 = vrot.lane.b32.xlu0 %v2097, 104
        %v2142 = vpop.permute.xlu0 %2141
        %2143 = vrot.lane.b32.xlu0 %v2098, 104
        %v2144 = vpop.permute.xlu0 %2143
        %2145 = vrot.lane.b32.xlu0 %v2099, 104
        %v2146 = vpop.permute.xlu0 %2145
        %2147 = vrot.lane.b32.xlu0 %v2100, 104
        %v2148 = vpop.permute.xlu0 %2147
        %2165 = vmatprep.subr.mxu0 0.0
        %2166 = vmatpush1.msra.mxu0 %v2118
        %2167 = vmatprep.subr.mxu0 0.0
        %2168 = vmatpush1.msra.mxu0 %v2120
        %2169 = vmatprep.subr.mxu0 0.0
        %2170 = vmatpush1.msra.mxu0 %v2122
        %2171 = vmatprep.subr.mxu0 0.0
        %2172 = vmatpush1.msra.mxu0 %v2124
        %2173 = vmatprep.subr.mxu0 0.0
        %2174 = vmatpush1.msra.mxu0 %v2126
        %2175 = vmatprep.subr.mxu0 0.0
        %2176 = vmatpush1.msra.mxu0 %v2128
        %2177 = vmatprep.subr.mxu0 0.0
        %2178 = vmatpush1.msra.mxu0 %v2130
        %2179 = vmatprep.subr.mxu0 0.0
        %2180 = vmatpush1.msra.mxu0 %v2132
        %2181 = vmatprep.subr.mxu0 0.0
        %2182 = vmatpush1.msra.mxu0 %v2134
        %2183 = vmatprep.subr.mxu0 0.0
        %2184 = vmatpush1.msra.mxu0 %v2136
        %2185 = vmatprep.subr.mxu0 0.0
        %2186 = vmatpush1.msra.mxu0 %v2138
        %2187 = vmatprep.subr.mxu0 0.0
        %2188 = vmatpush1.msra.mxu0 %v2140
        %2189 = vmatprep.subr.mxu0 0.0
        %2190 = vmatpush1.msra.mxu0 %v2142
        %2191 = vmatprep.subr.mxu0 0.0
        %2192 = vmatpush1.msra.mxu0 %v2144
        %2193 = vmatprep.subr.mxu0 0.0
        %2194 = vmatpush1.msra.mxu0 %v2146
        %2195 = vmatprep.subr.mxu0 0.0
        %2196 = vmatpush1.msra.mxu0 %v2148
        %2197 = vmatprep.subr.mxu0 0.0
        %2198 = vmatpush1.msra.mxu0 0.0
        %2199 = vmatprep.subr.mxu0 0.0
        %2200 = vmatpush1.msra.mxu0 0.0
        %2201 = vmatprep.subr.mxu0 0.0
        %2202 = vmatpush1.msra.mxu0 0.0
        %2203 = vmatprep.subr.mxu0 0.0
        %2204 = vmatpush1.msra.mxu0 0.0
        %2205 = vmatprep.subr.mxu0 0.0
        %2206 = vmatpush1.msra.mxu0 0.0
        %2207 = vmatprep.subr.mxu0 0.0
        %2208 = vmatpush1.msra.mxu0 0.0
        %2209 = vmatprep.subr.mxu0 0.0
        %2210 = vmatpush1.msra.mxu0 0.0
        %2211 = vmatprep.subr.mxu0 0.0
        %2212 = vmatpush1.msra.mxu0 0.0
        %2213 = vmatprep.subr.mxu0 0.0
        %2214 = vmatpush1.msra.mxu0 0.0
        %2215 = vmatprep.subr.mxu0 0.0
        %2216 = vmatpush1.msra.mxu0 0.0
        %2217 = vmatprep.subr.mxu0 0.0
        %2218 = vmatpush1.msra.mxu0 0.0
        %2219 = vmatprep.subr.mxu0 0.0
        %2220 = vmatpush1.msra.mxu0 0.0
        %2221 = vmatprep.subr.mxu0 0.0
        %2222 = vmatpush1.msra.mxu0 0.0
        %2223 = vmatprep.subr.mxu0 0.0
        %2224 = vmatpush1.msra.mxu0 0.0
        %2225 = vmatprep.subr.mxu0 0.0
        %2226 = vmatpush1.msra.mxu0 0.0
        %2227 = vmatprep.subr.mxu0 0.0
        %2228 = vmatpush1.msra.mxu0 0.0
        %2229 = vmatprep.mubr.f32.mxu0 0.0
        %2230 = vmatmul.mubr.f32.gmra.mrb[0].mxu0 %v2082
        %v2231 = vpop.f32.mrb[0].mxu0
        %v2232 = vadd.f32 0.0, %v2231
        %v2233 = vpop.f32.mrb[0].mxu0
        %2234 = vdwg.mxu0
        %2236 = vrot.lane.b32.xlu0 %v2232, 24
        %v2237 = vpop.permute.xlu0 %2236
        %vm2239 = vcmask 261312
        %2240 = vst.msk [vmem:[#allocation4] sm:$0xff] %vm2239, %v2237
        %v2241 = vld [vmem:[#allocation4] sm:$0xff]
        %v2242 = vld [vmem:[%s10] sm:$0xff]
        %v2243 = vld [vmem:[%s10 + $0x8] sm:$0xff]
        %v2244 = vld [vmem:[%s10 + $0x10] sm:$0xff]
        %v2245 = vld [vmem:[%s10 + $0x18] sm:$0xff]
        %v2246 = vld [vmem:[%s11] sm:$0x1]
        %v2248 = vlaneseq
        %v2249 = vshrl.u32 %v2248, 7
        %v2250 = vsub.s32 0, %v2249
        %v2251 = vrot.slane %v2246, %v2250
        %vm2253 = vcmask 261120
        %v2255 = vsel %vm2253, %v2241, 0
        %2257 = vmatprep.subr.mxu0 0.0
        %2258 = vmatpush1.msra.mxu0 %v2242
        %2259 = vmatprep.subr.mxu0 0.0
        %2260 = vmatpush1.msra.mxu0 %v2243
        %2261 = vmatprep.subr.mxu0 0.0
        %2262 = vmatpush1.msra.mxu0 %v2244
        %2263 = vmatprep.subr.mxu0 0.0
        %2264 = vmatpush1.msra.mxu0 %v2245
        %2265 = vmatprep.subr.mxu0 0.0
        %2266 = vmatpush1.msra.mxu0 0.0
        %2267 = vmatprep.subr.mxu0 0.0
        %2268 = vmatpush1.msra.mxu0 0.0
        %2269 = vmatprep.subr.mxu0 0.0
        %2270 = vmatpush1.msra.mxu0 0.0
        %2271 = vmatprep.subr.mxu0 0.0
        %2272 = vmatpush1.msra.mxu0 0.0
        %2273 = vmatprep.subr.mxu0 0.0
        %2274 = vmatpush1.msra.mxu0 0.0
        %2275 = vmatprep.subr.mxu0 0.0
        %2276 = vmatpush1.msra.mxu0 0.0
        %2277 = vmatprep.subr.mxu0 0.0
        %2278 = vmatpush1.msra.mxu0 0.0
        %2279 = vmatprep.subr.mxu0 0.0
        %2280 = vmatpush1.msra.mxu0 0.0
        %2281 = vmatprep.subr.mxu0 0.0
        %2282 = vmatpush1.msra.mxu0 0.0
        %2283 = vmatprep.subr.mxu0 0.0
        %2284 = vmatpush1.msra.mxu0 0.0
        %2285 = vmatprep.subr.mxu0 0.0
        %2286 = vmatpush1.msra.mxu0 0.0
        %2287 = vmatprep.subr.mxu0 0.0
        %2288 = vmatpush1.msra.mxu0 0.0
        %2289 = vmatprep.subr.mxu0 0.0
        %2290 = vmatpush1.msra.mxu0 0.0
        %2291 = vmatprep.subr.mxu0 0.0
        %2292 = vmatpush1.msra.mxu0 0.0
        %2293 = vmatprep.subr.mxu0 0.0
        %2294 = vmatpush1.msra.mxu0 0.0
        %2295 = vmatprep.subr.mxu0 0.0
        %2296 = vmatpush1.msra.mxu0 0.0
        %2297 = vmatprep.subr.mxu0 0.0
        %2298 = vmatpush1.msra.mxu0 0.0
        %2299 = vmatprep.subr.mxu0 0.0
        %2300 = vmatpush1.msra.mxu0 0.0
        %2301 = vmatprep.subr.mxu0 0.0
        %2302 = vmatpush1.msra.mxu0 0.0
        %2303 = vmatprep.subr.mxu0 0.0
        %2304 = vmatpush1.msra.mxu0 0.0
        %2305 = vmatprep.subr.mxu0 0.0
        %2306 = vmatpush1.msra.mxu0 0.0
        %2307 = vmatprep.subr.mxu0 0.0
        %2308 = vmatpush1.msra.mxu0 0.0
        %2309 = vmatprep.subr.mxu0 0.0
        %2310 = vmatpush1.msra.mxu0 0.0
        %2311 = vmatprep.subr.mxu0 0.0
        %2312 = vmatpush1.msra.mxu0 0.0
        %2313 = vmatprep.subr.mxu0 0.0
        %2314 = vmatpush1.msra.mxu0 0.0
        %2315 = vmatprep.subr.mxu0 0.0
        %2316 = vmatpush1.msra.mxu0 0.0
        %2317 = vmatprep.subr.mxu0 0.0
        %2318 = vmatpush1.msra.mxu0 0.0
        %2319 = vmatprep.subr.mxu0 0.0
        %2320 = vmatpush1.msra.mxu0 0.0
        %2321 = vmatprep.mubr.f32.mxu0 0.0
        %2322 = vmatmul.mubr.f32.gmra.mrb[0].mxu0 %v2255
        %v2323 = vpop.f32.mrb[0].mxu0
        %v2324 = vadd.f32 %v2251, %v2323
        %v2325 = vpop.f32.mrb[0].mxu0
        %2326 = vdwg.mxu0
        %vm2327 = vcmp.lt.s32.totalorder %v1320, 32
        %v2328 = vadd.f32 %v2324, %v1223
        %v2329 = vld [vmem:[%s12] sm:$0x1]
        %v2330 = vld [vmem:[%s13] sm:$0x1]
        %2331 = vadd.xlane.f32.xlu0 %v2328
        %v2332 = vpop.xlane.xlu0 %2331
        %v2333 = vmul.f32 %v2332, 0.03125
        %v2334 = vsub.f32 %v2328, %v2333
        %v2335 = vsel %vm2327, 1, 0
        %vm2336 = vcmp.eq.s32.totalorder %v2335, 1
        %v2337 = vsel %vm2336, %v2334, 0.0
        %v2338 = vmul.f32 %v2337, %v2337
        %2339 = vadd.xlane.f32.xlu0 %v2338
        %v2340 = vpop.xlane.xlu0 %2339
        %v2341 = vmul.f32 %v2340, 0.03125
        %v2342 = vadd.f32 %v2341, 1e-05
        %v2343 = vrsqrt.pop %v2342
        %v2344 = vmul.f32 %v2337, %v2343
        %v2346 = vlaneseq
        %v2347 = vshrl.u32 %v2346, 7
        %v2348 = vsub.s32 0, %v2347
        %v2349 = vrot.slane %v2329, %v2348
        %v2351 = vmul.f32 %v2344, %v2349
        %v2353 = vlaneseq
        %v2354 = vshrl.u32 %v2353, 7
        %v2355 = vsub.s32 0, %v2354
        %v2356 = vrot.slane %v2330, %v2355
        %v2358 = vadd.f32 %v2351, %v2356
        %v2359 = vld [vmem:[%s14] sm:$0xff]
        %v2360 = vld [vmem:[%s14 + $0x8] sm:$0xff]
        %v2361 = vld [vmem:[%s14 + $0x10] sm:$0xff]
        %v2362 = vld [vmem:[%s14 + $0x18] sm:$0xff]
        %v2363 = vld [vmem:[%s14 + $0x20] sm:$0xff]
        %v2364 = vld [vmem:[%s14 + $0x28] sm:$0xff]
        %v2365 = vld [vmem:[%s14 + $0x30] sm:$0xff]
        %v2366 = vld [vmem:[%s14 + $0x38] sm:$0xff]
        %v2367 = vld [vmem:[%s14 + $0x40] sm:$0xff]
        %v2368 = vld [vmem:[%s14 + $0x48] sm:$0xff]
        %v2369 = vld [vmem:[%s14 + $0x50] sm:$0xff]
        %v2370 = vld [vmem:[%s14 + $0x58] sm:$0xff]
        %v2371 = vld [vmem:[%s14 + $0x60] sm:$0xff]
        %v2372 = vld [vmem:[%s14 + $0x68] sm:$0xff]
        %v2373 = vld [vmem:[%s14 + $0x70] sm:$0xff]
        %v2374 = vld [vmem:[%s14 + $0x78] sm:$0xff]
        %v2375 = vld [vmem:[%s15] sm:$0x1]
        %v2377 = vlaneseq
        %v2378 = vshrl.u32 %v2377, 7
        %v2379 = vsub.s32 0, %v2378
        %v2380 = vrot.slane %v2375, %v2379
        %2382 = vmatprep.subr.mxu0 0.0
        %2383 = vmatpush1.msra.mxu0 %v2359
        %2384 = vmatprep.subr.mxu0 0.0
        %2385 = vmatpush1.msra.mxu0 %v2360
        %2386 = vmatprep.subr.mxu0 0.0
        %2387 = vmatpush1.msra.mxu0 %v2361
        %2388 = vmatprep.subr.mxu0 0.0
        %2389 = vmatpush1.msra.mxu0 %v2362
        %2390 = vmatprep.subr.mxu0 0.0
        %2391 = vmatpush1.msra.mxu0 %v2363
        %2392 = vmatprep.subr.mxu0 0.0
        %2393 = vmatpush1.msra.mxu0 %v2364
        %2394 = vmatprep.subr.mxu0 0.0
        %2395 = vmatpush1.msra.mxu0 %v2365
        %2396 = vmatprep.subr.mxu0 0.0
        %2397 = vmatpush1.msra.mxu0 %v2366
        %2398 = vmatprep.subr.mxu0 0.0
        %2399 = vmatpush1.msra.mxu0 %v2367
        %2400 = vmatprep.subr.mxu0 0.0
        %2401 = vmatpush1.msra.mxu0 %v2368
        %2402 = vmatprep.subr.mxu0 0.0
        %2403 = vmatpush1.msra.mxu0 %v2369
        %2404 = vmatprep.subr.mxu0 0.0
        %2405 = vmatpush1.msra.mxu0 %v2370
        %2406 = vmatprep.subr.mxu0 0.0
        %2407 = vmatpush1.msra.mxu0 %v2371
        %2408 = vmatprep.subr.mxu0 0.0
        %2409 = vmatpush1.msra.mxu0 %v2372
        %2410 = vmatprep.subr.mxu0 0.0
        %2411 = vmatpush1.msra.mxu0 %v2373
        %2412 = vmatprep.subr.mxu0 0.0
        %2413 = vmatpush1.msra.mxu0 %v2374
        %2414 = vmatprep.subr.mxu0 0.0
        %2415 = vmatpush1.msra.mxu0 0.0
        %2416 = vmatprep.subr.mxu0 0.0
        %2417 = vmatpush1.msra.mxu0 0.0
        %2418 = vmatprep.subr.mxu0 0.0
        %2419 = vmatpush1.msra.mxu0 0.0
        %2420 = vmatprep.subr.mxu0 0.0
        %2421 = vmatpush1.msra.mxu0 0.0
        %2422 = vmatprep.subr.mxu0 0.0
        %2423 = vmatpush1.msra.mxu0 0.0
        %2424 = vmatprep.subr.mxu0 0.0
        %2425 = vmatpush1.msra.mxu0 0.0
        %2426 = vmatprep.subr.mxu0 0.0
        %2427 = vmatpush1.msra.mxu0 0.0
        %2428 = vmatprep.subr.mxu0 0.0
        %2429 = vmatpush1.msra.mxu0 0.0
        %2430 = vmatprep.subr.mxu0 0.0
        %2431 = vmatpush1.msra.mxu0 0.0
        %2432 = vmatprep.subr.mxu0 0.0
        %2433 = vmatpush1.msra.mxu0 0.0
        %2434 = vmatprep.subr.mxu0 0.0
        %2435 = vmatpush1.msra.mxu0 0.0
        %2436 = vmatprep.subr.mxu0 0.0
        %2437 = vmatpush1.msra.mxu0 0.0
        %2438 = vmatprep.subr.mxu0 0.0
        %2439 = vmatpush1.msra.mxu0 0.0
        %2440 = vmatprep.subr.mxu0 0.0
        %2441 = vmatpush1.msra.mxu0 0.0
        %2442 = vmatprep.subr.mxu0 0.0
        %2443 = vmatpush1.msra.mxu0 0.0
        %2444 = vmatprep.subr.mxu0 0.0
        %2445 = vmatpush1.msra.mxu0 0.0
        %2446 = vmatprep.mubr.f32.mxu0 0.0
        %2447 = vmatmul.mubr.f32.gmra.mrb[0].mxu0 %v2358
        %v2448 = vpop.f32.mrb[0].mxu0
        %v2449 = vadd.f32 %v2380, %v2448
        %v2450 = vpop.f32.mrb[0].mxu0
        %2451 = vdwg.mxu0
        %v2452 = vmax.f32 %v2449, 0.0
        %v2453 = vld [vmem:[%s16] sm:$0xff]
        %v2454 = vld [vmem:[%s16 + $0x8] sm:$0xff]
        %v2455 = vld [vmem:[%s16 + $0x10] sm:$0xff]
        %v2456 = vld [vmem:[%s16 + $0x18] sm:$0xff]
        %v2457 = vld [vmem:[%s16 + $0x20] sm:$0xff]
        %v2458 = vld [vmem:[%s16 + $0x28] sm:$0xff]
        %v2459 = vld [vmem:[%s16 + $0x30] sm:$0xff]
        %v2460 = vld [vmem:[%s16 + $0x38] sm:$0xff]
        %v2461 = vld [vmem:[%s17] sm:$0x1]
        %v2463 = vlaneseq
        %v2464 = vshrl.u32 %v2463, 7
        %v2465 = vsub.s32 0, %v2464
        %v2466 = vrot.slane %v2461, %v2465
        %vm2468 = vcmask 523264
        %v2470 = vsel %vm2468, %v2452, 0
        %2472 = vmatprep.subr.mxu0 0.0
        %2473 = vmatpush1.msra.mxu0 %v2453
        %2474 = vmatprep.subr.mxu0 0.0
        %2475 = vmatpush1.msra.mxu0 %v2454
        %2476 = vmatprep.subr.mxu0 0.0
        %2477 = vmatpush1.msra.mxu0 %v2455
        %2478 = vmatprep.subr.mxu0 0.0
        %2479 = vmatpush1.msra.mxu0 %v2456
        %2480 = vmatprep.subr.mxu0 0.0
        %2481 = vmatpush1.msra.mxu0 %v2457
        %2482 = vmatprep.subr.mxu0 0.0
        %2483 = vmatpush1.msra.mxu0 %v2458
        %2484 = vmatprep.subr.mxu0 0.0
        %2485 = vmatpush1.msra.mxu0 %v2459
        %2486 = vmatprep.subr.mxu0 0.0
        %2487 = vmatpush1.msra.mxu0 %v2460
        %2488 = vmatprep.subr.mxu0 0.0
        %2489 = vmatpush1.msra.mxu0 0.0
        %2490 = vmatprep.subr.mxu0 0.0
        %2491 = vmatpush1.msra.mxu0 0.0
        %2492 = vmatprep.subr.mxu0 0.0
        %2493 = vmatpush1.msra.mxu0 0.0
        %2494 = vmatprep.subr.mxu0 0.0
        %2495 = vmatpush1.msra.mxu0 0.0
        %2496 = vmatprep.subr.mxu0 0.0
        %2497 = vmatpush1.msra.mxu0 0.0
        %2498 = vmatprep.subr.mxu0 0.0
        %2499 = vmatpush1.msra.mxu0 0.0
        %2500 = vmatprep.subr.mxu0 0.0
        %2501 = vmatpush1.msra.mxu0 0.0
        %2502 = vmatprep.subr.mxu0 0.0
        %2503 = vmatpush1.msra.mxu0 0.0
        %2504 = vmatprep.subr.mxu0 0.0
        %2505 = vmatpush1.msra.mxu0 0.0
        %2506 = vmatprep.subr.mxu0 0.0
        %2507 = vmatpush1.msra.mxu0 0.0
        %2508 = vmatprep.subr.mxu0 0.0
        %2509 = vmatpush1.msra.mxu0 0.0
        %2510 = vmatprep.subr.mxu0 0.0
        %2511 = vmatpush1.msra.mxu0 0.0
        %2512 = vmatprep.subr.mxu0 0.0
        %2513 = vmatpush1.msra.mxu0 0.0
        %2514 = vmatprep.subr.mxu0 0.0
        %2515 = vmatpush1.msra.mxu0 0.0
        %2516 = vmatprep.subr.mxu0 0.0
        %2517 = vmatpush1.msra.mxu0 0.0
        %2518 = vmatprep.subr.mxu0 0.0
        %2519 = vmatpush1.msra.mxu0 0.0
        %2520 = vmatprep.subr.mxu0 0.0
        %2521 = vmatpush1.msra.mxu0 0.0
        %2522 = vmatprep.subr.mxu0 0.0
        %2523 = vmatpush1.msra.mxu0 0.0
        %2524 = vmatprep.subr.mxu0 0.0
        %2525 = vmatpush1.msra.mxu0 0.0
        %2526 = vmatprep.subr.mxu0 0.0
        %2527 = vmatpush1.msra.mxu0 0.0
        %2528 = vmatprep.subr.mxu0 0.0
        %2529 = vmatpush1.msra.mxu0 0.0
        %2530 = vmatprep.subr.mxu0 0.0
        %2531 = vmatpush1.msra.mxu0 0.0
        %2532 = vmatprep.subr.mxu0 0.0
        %2533 = vmatpush1.msra.mxu0 0.0
        %2534 = vmatprep.subr.mxu0 0.0
        %2535 = vmatpush1.msra.mxu0 0.0
        %2536 = vmatprep.mubr.f32.mxu0 0.0
        %2537 = vmatmul.mubr.f32.gmra.mrb[0].mxu0 %v2470
        %v2538 = vpop.f32.mrb[0].mxu0
        %v2539 = vadd.f32 %v2466, %v2538
        %v2540 = vpop.f32.mrb[0].mxu0
        %2541 = vdwg.mxu0
        %v2542 = vadd.f32 %v2358, %v2539
        %v2543 = vld [vmem:[%s18] sm:$0x1]
        %v2544 = vld [vmem:[%s19] sm:$0x1]
        %2545 = vadd.xlane.f32.xlu0 %v2542
        %v2546 = vpop.xlane.xlu0 %2545
        %v2547 = vmul.f32 %v2546, 0.03125
        %v2548 = vsub.f32 %v2542, %v2547
        %v2549 = vsel %vm2336, %v2548, 0.0
        %v2550 = vmul.f32 %v2549, %v2549
        %2551 = vadd.xlane.f32.xlu0 %v2550
        %v2552 = vpop.xlane.xlu0 %2551
        %v2553 = vmul.f32 %v2552, 0.03125
        %v2554 = vadd.f32 %v2553, 1e-05
        %v2555 = vrsqrt.pop %v2554
        %v2556 = vmul.f32 %v2549, %v2555
        %v2558 = vlaneseq
        %v2559 = vshrl.u32 %v2558, 7
        %v2560 = vsub.s32 0, %v2559
        %v2561 = vrot.slane %v2543, %v2560
        %v2563 = vmul.f32 %v2556, %v2561
        %v2565 = vlaneseq
        %v2566 = vshrl.u32 %v2565, 7
        %v2567 = vsub.s32 0, %v2566
        %v2568 = vrot.slane %v2544, %v2567
        %v2570 = vadd.f32 %v2563, %v2568
        %2571 = vst [vmem:[%s764] sm:$0xff] %v2570
        %s2572 = sand.u32 %s511, 1
        %s2573 = scalar_lea.sflag [#allocation7], %s2572
        %s2574 = sand.u32 %s511, 1
        %s2575 = smul.addr %s2574, 8
        %s2576 = scalar_lea.vmem [#allocation10], %s2575
        %s2577 = sand.u32 %s539, 1
        %s2578 = scalar_lea.sflag [#allocation12], %s2577
        %s2579 = sand.u32 %s539, 1
        %s2580 = smul.addr %s2579, 32
        %s2581 = scalar_lea.vmem [#allocation11], %s2580
        // Predicated region
        $region113: #{tpu_custom_call.1} parent=99 // pred_check
          %p2582 = pneg %p521
        $region114: #{tpu_custom_call.1} parent=99 // pred_check_branch
          %2584 = sbr.rel (%p2582) target = $region116
        $region115: #{tpu_custom_call.1} parent=99 // pred_region
          %s2586 = ssub.s32 128, 128
          %2587 = vsyncadd %s2573, %s2586
          %s2588 = sadd.s32 %s50, %s49
          %s2589 = smul.addr %s2588, 128
          %s2590 = scalar_lea.hbm %s20, %s2589
          %s2592 = sshll.u32 %s2576, 4
          %s2593 = int_to_ptr.vmem [resolvable:$true] %s2592
          %2595 = dma.vmem_to_hbm [thread:$0]  %s2593, 128, %s2590, %s2573
        $region116: #{tpu_custom_call.1} parent=99 // pred_fallthru
          _
        // Predicated region
        $region117: #{tpu_custom_call.1} parent=99 // pred_check
          %p2596 = pneg %p549
        $region118: #{tpu_custom_call.1} parent=99 // pred_check_branch
          %2598 = sbr.rel (%p2596) target = $region120
        $region119: #{tpu_custom_call.1} parent=99 // pred_region
          %s2600 = ssub.s32 512, 512
          %2601 = vsyncadd %s2578, %s2600
          %s2602 = smul.addr %s49, 4
          %s2603 = sadd.s32 %s50, %s2602
          %s2604 = smul.addr %s2603, 128
          %s2605 = scalar_lea.hbm %s21, %s2604
          %s2606 = sshll.u32 %s2581, 4
          %s2607 = int_to_ptr.vmem [resolvable:$true] %s2606
          %2612 = dma.vmem_to_hbm [thread:$0]  %s2607, 512, %s2605, %s2578, 128, 128, 8
        $region120: #{tpu_custom_call.1} parent=99 // pred_fallthru
          _
      $region100: #{tpu_custom_call.1} parent=5 // pred_fallthru
        _
      %p2613 = scmp.le.s32.totalorder 2, %s40
      // Predicated region
      $region121: #{tpu_custom_call.1} parent=5 // pred_check
        %p2614 = pneg %p2613
      $region122: #{tpu_custom_call.1} parent=5 // pred_check_branch
        %2616 = sbr.rel (%p2614) target = $region124
      $region123: #{tpu_custom_call.1} parent=5 // pred_region
        %s2617 = ssub.s32 %s40, 2
        // Predicated region
        $region125: #{tpu_custom_call.1} parent=123 // pred_check
          %p2618 = pneg %p527
        $region126: #{tpu_custom_call.1} parent=123 // pred_check_branch
          %2620 = sbr.rel (%p2618) target = $region128
        $region127: #{tpu_custom_call.1} parent=123 // pred_region
          %s2621 = sand.u32 %s512, 1
          %s2622 = scalar_lea.sflag [#allocation7], %s2621
          %s2623 = sand.u32 %s512, 1
          %s2624 = smul.addr %s2623, 8
          %s2625 = scalar_lea.vmem [#allocation10], %s2624
          %2626 = dma.done %s2622, 128
        $region128: #{tpu_custom_call.1} parent=123 // pred_fallthru
          _
        // Predicated region
        $region129: #{tpu_custom_call.1} parent=123 // pred_check
          %p2627 = pneg %p555
        $region130: #{tpu_custom_call.1} parent=123 // pred_check_branch
          %2629 = sbr.rel (%p2627) target = $region132
        $region131: #{tpu_custom_call.1} parent=123 // pred_region
          %s2630 = sand.u32 %s540, 1
          %s2631 = scalar_lea.sflag [#allocation12], %s2630
          %s2632 = sand.u32 %s540, 1
          %s2633 = smul.addr %s2632, 32
          %s2634 = scalar_lea.vmem [#allocation11], %s2633
          %2635 = dma.done %s2631, 512
        $region132: #{tpu_custom_call.1} parent=123 // pred_fallthru
          _
      $region124: #{tpu_custom_call.1} parent=5 // pred_fallthru
        _
    $region6: #{tpu_custom_call.1} parent=1 // loop_footer
      %s44 = sadd.s32 1, %s40
    $region7: #{tpu_custom_call.1} parent=1 // loop_footer_branch
      %39 = sbr.rel target = $region3
    $region8: #{tpu_custom_call.1} parent=1 // loop_exit
      _
    %2636 = vsyncpa [#allocation6], 1
    %s2637 = scalar_lea.sflag [#allocation6], 1
    %2638 = vsyncpa %s2637, 1
    %2639 = vsyncpa [#allocation9], 1
    %s2640 = scalar_lea.sflag [#allocation9], 1
    %2641 = vsyncpa %s2640, 1
    %2642 = vsyncpa [#allocation7], 1
    %s2643 = scalar_lea.sflag [#allocation7], 1
    %2644 = vsyncpa %s2643, 1
    %2645 = vsyncpa [#allocation12], 1
    %s2646 = scalar_lea.sflag [#allocation12], 1
    %2647 = vsyncpa %s2646, 1

</llo_original>
